<compile_context>
chip_gen: v7x
topology: tpu7x:2x2x1
jax: 0.10.0
libtpu: 0.0.40
codegen_flags: <defaults>
</compile_context>

<pallas_src>
import functools

import jax
import jax.numpy as jnp
from jax.experimental import pallas as pl
from jax.experimental.pallas import tpu as pltpu


# ------------------------------ fused kernel -------------------------------

def _vit_fused_kernel(
    patches_ref, base_ref, w_patch_ref,
    ln1_g_ref, ln1_b_ref,
    w_q_ref, w_k_ref, w_v_ref,
    w_proj_ref, b_proj_ref,
    ln2_g_ref, ln2_b_ref,
    w_fc1_ref, b_fc1_ref,
    w_fc2_ref, b_fc2_ref,
    lnf_g_ref, lnf_b_ref,
    w_head_ref, b_head_ref,
    q_out_ref, k_out_ref, v_out_ref, logits_out_ref,
    *, batch, n_heads, seq, scale, eps):

    bf16 = jnp.bfloat16
    B, H, T = batch, n_heads, seq

    def mm(a, w_ref):
        # bf16 operands (weights pre-cast in the wrapper), f32 accumulation.
        return jnp.dot(a.astype(bf16), w_ref[...],
                       preferred_element_type=jnp.float32)

    def layernorm(x, g_ref, b_ref):
        mean = jnp.mean(x, axis=-1, keepdims=True)
        c = x - mean
        var = jnp.mean(c * c, axis=-1, keepdims=True)    # biased, like torch
        return c * jax.lax.rsqrt(var + eps) * g_ref[...] + b_ref[...]

    # ---- patch embedding + cls token + positional embedding ----------------
    # patches_ref has a zero row at every cls position; base carries
    # cls_token + pos[0] on those rows and pos[1:] + conv bias elsewhere.
    h = mm(patches_ref[...], w_patch_ref) + base_ref[...]          # (B*T, D)

    # ---- attention: LN1 -> head-major Q/K/V -> batched softmax(QK^T/sqrt)V --
    hn = layernorm(h, ln1_g_ref, ln1_b_ref)                        # (B*T, D) f32
    # lhs for the batched matmuls: (B*H, T, D), entry b*H + h = rows of batch b
    hn_heads = jnp.concatenate(
        [jnp.broadcast_to(hn[b * T:(b + 1) * T][None],
                          (H, T, hn.shape[-1])) for b in range(B)],
        axis=0).astype(bf16)                                        # (B*H, T, D)

    q = jnp.einsum('ntd,nde->nte', hn_heads, w_q_ref[...],
                   preferred_element_type=jnp.float32)              # (B*H, T, dh)
    k = jnp.einsum('ntd,nde->nte', hn_heads, w_k_ref[...],
                   preferred_element_type=jnp.float32)
    v = jnp.einsum('ntd,nde->nte', hn_heads, w_v_ref[...],
                   preferred_element_type=jnp.float32)
    q_out_ref[...] = q                                              # head-major
    k_out_ref[...] = k
    v_out_ref[...] = v

    s = jnp.einsum('nqd,nkd->nqk', q.astype(bf16), k.astype(bf16),
                   preferred_element_type=jnp.float32) * scale      # (B*H, T, T)
    m = jnp.max(s, axis=-1, keepdims=True)
    e = jnp.exp(s - m)
    p = e / jnp.sum(e, axis=-1, keepdims=True)                      # exact softmax
    weighted = jnp.einsum('nqk,nkd->nqd', p.astype(bf16), v.astype(bf16),
                          preferred_element_type=jnp.float32)       # (B*H, T, dh)

    # per-head projection contribution, then reduce over heads (VPU adds)
    contrib = jnp.einsum('ntd,ndo->nto', weighted.astype(bf16), w_proj_ref[...],
                         preferred_element_type=jnp.float32)        # (B*H, T, D)
    attn_out = jnp.concatenate(
        [jnp.sum(contrib[b * H:(b + 1) * H], axis=0) for b in range(B)],
        axis=0)                                                     # (B*T, D)

    h = h + attn_out + b_proj_ref[...]                              # residual #1

    # ---- MLP: LN2 -> fc1 -> GELU(exact) -> fc2, + residual -----------------
    hn2 = layernorm(h, ln2_g_ref, ln2_b_ref)
    mid = mm(hn2, w_fc1_ref) + b_fc1_ref[...]
    mid = 0.5 * mid * (1.0 + jax.lax.erf(mid * 0.7071067811865476))
    h = h + mm(mid, w_fc2_ref) + b_fc2_ref[...]                     # residual #2

    # ---- final LN (cls rows only) + classification head (lane-dense) -------
    cls_rows = jnp.concatenate([h[b * T:b * T + 1, :] for b in range(B)],
                               axis=0)                              # (B, D)
    cls_final = layernorm(cls_rows, lnf_g_ref, lnf_b_ref)
    logits_out_ref[...] = mm(cls_final, w_head_ref) + b_head_ref[...]


# ------------------------------ ViT forward --------------------------------

def vit_forward(x, params, *, patch_size, n_heads):
    """x: (B, C, H, W) float32 (NCHW).  Returns (logits, q, k, v)."""
    B, C, Himg, Wimg = x.shape
    p = patch_size
    gh, gw = Himg // p, Wimg // p
    Np = gh * gw
    T = Np + 1
    D = params["pos_embed"].shape[-1]
    Hh = n_heads
    dh = D // Hh
    scale = dh ** (-0.5)
    Kp = C * p * p
    Hd = params["w_fc1"].shape[1]
    n_classes = params["w_head"].shape[1]
    NCP = ((n_classes + 127) // 128) * 128         # lane-dense head output
    N = B * T

    f32, bf16 = jnp.float32, jnp.bfloat16

    # Conv2d(kernel=stride=p) == patchify (reshape/transpose) + matmul.
    # Flattening order matches torch weight (E, C, p, p).reshape(E, -1).
    patches = (x.reshape(B, C, gh, p, gw, p)
                 .transpose(0, 2, 4, 1, 3, 5)
                 .reshape(B, Np, Kp))
    # Zero row at every cls position so one matmul covers all B*T rows.
    patches_aug = jnp.concatenate(
        [jnp.zeros((B, 1, Kp), f32), patches], axis=1).reshape(N, Kp).astype(bf16)

    pos = params["pos_embed"].reshape(T, D)
    cls = params["cls_token"].reshape(1, D)
    base_one = jnp.concatenate(
        [cls + pos[0:1], pos[1:T] + params["b_patch"].reshape(1, D)], axis=0)
    base = jnp.tile(base_one, (B, 1)).astype(f32)                   # (B*T, D)

    # Head-major, batch-tiled attention weights (bf16).
    w_qkv = params["w_qkv"]                                         # (D, 3D)

    def head_major(w2d):                                            # (D,D)->(B*H,D,dh)
        w_h = w2d.reshape(D, Hh, dh).transpose(1, 0, 2)
        return jnp.tile(w_h, (B, 1, 1)).astype(bf16)

    w_q_bh = head_major(w_qkv[:, 0 * D:1 * D])
    w_k_bh = head_major(w_qkv[:, 1 * D:2 * D])
    w_v_bh = head_major(w_qkv[:, 2 * D:3 * D])
    w_proj_bh = jnp.tile(params["w_proj"].reshape(Hh, dh, D),
                         (B, 1, 1)).astype(bf16)                    # (B*H, dh, D)

    # Pad the head to a 128-lane-wide slab (unmasked logits store).
    w_head_p = jnp.zeros((D, NCP), f32).at[:, :n_classes].set(
        params["w_head"]).astype(bf16)
    b_head_p = jnp.zeros((1, NCP), f32).at[:, :n_classes].set(
        params["b_head"].reshape(1, n_classes))

    row = lambda a: a.reshape(1, -1).astype(f32)

    def full_spec(shape):
        nd = len(shape)
        return pl.BlockSpec(shape, lambda i, _nd=nd: (0,) * _nd)

    # Advisory cost estimate for the XLA scheduler.
    flops = int(2 * (N * Kp * D
                     + 3 * B * Hh * T * D * dh
                     + 2 * B * Hh * T * T * dh
                     + B * Hh * T * dh * D
                     + 2 * N * D * Hd
                     + B * D * NCP))
    transcendentals = int(B * Hh * T * T + N * Hd + 5 * N)
    bytes_accessed = int(
        2 * (N * Kp + Kp * D + 4 * B * Hh * D * dh + D * Hd + Hd * D + D * NCP)
        + 4 * (N * D + 8 * D + Hd + NCP)
        + 4 * (3 * B * Hh * T * dh + B * NCP))

    kernel = functools.partial(_vit_fused_kernel, batch=B, n_heads=Hh,
                               seq=T, scale=scale, eps=1e-6)

    q_bh, k_bh, v_bh, logits_p = pl.pallas_call(
        kernel,
        grid=(1,),                                   # batch folded into rows
        in_specs=[
            full_spec((N, Kp)),                      # patches_aug (bf16)
            full_spec((N, D)),                       # base (cls/pos/bias)
            full_spec((Kp, D)),                      # w_patch (bf16)
            full_spec((1, D)), full_spec((1, D)),    # ln1
            full_spec((B * Hh, D, dh)),              # w_q (bf16, head-major)
            full_spec((B * Hh, D, dh)),              # w_k
            full_spec((B * Hh, D, dh)),              # w_v
            full_spec((B * Hh, dh, D)),              # w_proj (bf16, head-major)
            full_spec((1, D)),                       # b_proj
            full_spec((1, D)), full_spec((1, D)),    # ln2
            full_spec((D, Hd)), full_spec((1, Hd)),  # fc1
            full_spec((Hd, D)), full_spec((1, D)),   # fc2
            full_spec((1, D)), full_spec((1, D)),    # lnf
            full_spec((D, NCP)), full_spec((1, NCP)),  # head (padded)
        ],
        out_specs=(
            full_spec((B * Hh, T, dh)),
            full_spec((B * Hh, T, dh)),
            full_spec((B * Hh, T, dh)),
            full_spec((B, NCP)),
        ),
        out_shape=(
            jax.ShapeDtypeStruct((B * Hh, T, dh), jnp.float32),
            jax.ShapeDtypeStruct((B * Hh, T, dh), jnp.float32),
            jax.ShapeDtypeStruct((B * Hh, T, dh), jnp.float32),
            jax.ShapeDtypeStruct((B, NCP), jnp.float32),
        ),
        compiler_params=pltpu.CompilerParams(
            dimension_semantics=("arbitrary",),
            vmem_limit_bytes=32 * 1024 * 1024),      # explicit VMEM budget
        cost_estimate=pl.CostEstimate(flops=flops,
                                      transcendentals=transcendentals,
                                      bytes_accessed=bytes_accessed),
    )(
        patches_aug, base, params["w_patch"].astype(bf16),
        row(params["ln1_g"]), row(params["ln1_b"]),
        w_q_bh, w_k_bh, w_v_bh,
        w_proj_bh, row(params["b_proj"]),
        row(params["ln2_g"]), row(params["ln2_b"]),
        params["w_fc1"].astype(bf16), row(params["b_fc1"]),
        params["w_fc2"].astype(bf16), row(params["b_fc2"]),
        row(params["lnf_g"]), row(params["lnf_b"]),
        w_head_p, b_head_p,
    )

    logits = logits_p[:, :n_classes]
    # (B*H, T, dh) -> (B, H, T, dh) is a free leading-dim split (no relayout).
    q = q_bh.reshape(B, Hh, T, dh)
    k = k_bh.reshape(B, Hh, T, dh)
    v = v_bh.reshape(B, Hh, T, dh)
    return logits, q, k, v


# ----------------------------- parameter init ------------------------------

def init_params(key, *, in_chans, patch_size, embed_dim, n_patches,
                mlp_hidden, n_classes):
    ks = jax.random.split(key, 8)
    D = embed_dim
    Kp = in_chans * patch_size * patch_size

    def w(k, shape, s=0.02):
        return (s * jax.random.normal(k, shape)).astype(jnp.float32)

    return {
        # patch-embed conv flattened to (C*p*p, D)  (== torch weight.T)
        "w_patch": w(ks[0], (Kp, D)),
        "b_patch": jnp.zeros((D,), jnp.float32),
        "cls_token": jnp.zeros((1, 1, D), jnp.float32),   # torch init: zeros
        "pos_embed": w(ks[1], (1, 1 + n_patches, D)),
        "ln1_g": jnp.ones((D,), jnp.float32),
        "ln1_b": jnp.zeros((D,), jnp.float32),
        "w_qkv": w(ks[2], (D, 3 * D)),                    # qkv_bias=False
        "w_proj": w(ks[3], (D, D)),
        "b_proj": jnp.zeros((D,), jnp.float32),
        "ln2_g": jnp.ones((D,), jnp.float32),
        "ln2_b": jnp.zeros((D,), jnp.float32),
        "w_fc1": w(ks[4], (D, mlp_hidden)),
        "b_fc1": jnp.zeros((mlp_hidden,), jnp.float32),
        "w_fc2": w(ks[5], (mlp_hidden, D)),
        "b_fc2": jnp.zeros((D,), jnp.float32),
        "lnf_g": jnp.ones((D,), jnp.float32),
        "lnf_b": jnp.zeros((D,), jnp.float32),
        "w_head": w(ks[6], (D, n_classes)),
        "b_head": jnp.zeros((n_classes,), jnp.float32),
    }


# ---------------------------------- main ------------------------------------

if __name__ == "__main__":
    # Small ViT config consistent with the module's forward (depth=1).
    B, C, IMG = 2, 3, 16
    PATCH = 8
    D = 32
    HEADS = 4
    MLP_RATIO = 4.0
    N_CLASSES = 10
    N_PATCHES = (IMG // PATCH) ** 2

    key = jax.random.PRNGKey(0)
    k_x, k_p = jax.random.split(key)
    x = jax.random.normal(k_x, (B, C, IMG, IMG), dtype=jnp.float32)   # NCHW
    params = init_params(k_p, in_chans=C, patch_size=PATCH, embed_dim=D,
                         n_patches=N_PATCHES, mlp_hidden=int(D * MLP_RATIO),
                         n_classes=N_CLASSES)

    fwd = jax.jit(functools.partial(vit_forward, patch_size=PATCH,
                                    n_heads=HEADS))
    logits, q, k, v = fwd(x, params)
    jax.block_until_ready((logits, q, k, v))

    assert logits.shape == (B, N_CLASSES)
    assert q.shape == (B, HEADS, N_PATCHES + 1, D // HEADS)
    assert k.shape == v.shape == q.shape
    assert bool(jnp.all(jnp.isfinite(logits)))
    assert bool(jnp.all(jnp.isfinite(q)))
    assert bool(jnp.all(jnp.isfinite(k)))
    assert bool(jnp.all(jnp.isfinite(v)))
    print("KERNEL_OK")
</pallas_src>

<mosaic_0001>
module attributes {stable_mosaic.version = 11 : i64} {
  func.func @_vit_fused_kernel(%arg0: i32, %arg1: memref<10x192xbf16, #tpu.memory_space<vmem>>, %arg2: memref<10x32xf32, #tpu.memory_space<vmem>>, %arg3: memref<192x32xbf16, #tpu.memory_space<vmem>>, %arg4: memref<1x32xf32, #tpu.memory_space<vmem>>, %arg5: memref<1x32xf32, #tpu.memory_space<vmem>>, %arg6: memref<8x32x8xbf16, #tpu.memory_space<vmem>>, %arg7: memref<8x32x8xbf16, #tpu.memory_space<vmem>>, %arg8: memref<8x32x8xbf16, #tpu.memory_space<vmem>>, %arg9: memref<8x8x32xbf16, #tpu.memory_space<vmem>>, %arg10: memref<1x32xf32, #tpu.memory_space<vmem>>, %arg11: memref<1x32xf32, #tpu.memory_space<vmem>>, %arg12: memref<1x32xf32, #tpu.memory_space<vmem>>, %arg13: memref<32x128xbf16, #tpu.memory_space<vmem>>, %arg14: memref<1x128xf32, #tpu.memory_space<vmem>>, %arg15: memref<128x32xbf16, #tpu.memory_space<vmem>>, %arg16: memref<1x32xf32, #tpu.memory_space<vmem>>, %arg17: memref<1x32xf32, #tpu.memory_space<vmem>>, %arg18: memref<1x32xf32, #tpu.memory_space<vmem>>, %arg19: memref<32x128xbf16, #tpu.memory_space<vmem>>, %arg20: memref<1x128xf32, #tpu.memory_space<vmem>>, %arg21: memref<8x5x8xf32, #tpu.memory_space<vmem>>, %arg22: memref<8x5x8xf32, #tpu.memory_space<vmem>>, %arg23: memref<8x5x8xf32, #tpu.memory_space<vmem>>, %arg24: memref<2x128xf32, #tpu.memory_space<vmem>>) attributes {dimension_semantics = [#tpu.dimension_semantics<arbitrary>], iteration_bounds = array<i64: 1>, scalar_prefetch = 0 : i64, scratch_operands = 0 : i64, tpu.core_type = #tpu.core_type<tc>, window_params = [{pipeline_mode = #tpu.pipeline_mode<synchronous>, transform_indices = @transform_0, window_bounds = array<i64: 10, 192>}, {pipeline_mode = #tpu.pipeline_mode<synchronous>, transform_indices = @transform_1, window_bounds = array<i64: 10, 32>}, {pipeline_mode = #tpu.pipeline_mode<synchronous>, transform_indices = @transform_2, window_bounds = array<i64: 192, 32>}, {pipeline_mode = #tpu.pipeline_mode<synchronous>, transform_indices = @transform_3, window_bounds = array<i64: 1, 32>}, {pipeline_mode = #tpu.pipeline_mode<synchronous>, transform_indices = @transform_4, window_bounds = array<i64: 1, 32>}, {pipeline_mode = #tpu.pipeline_mode<synchronous>, transform_indices = @transform_5, window_bounds = array<i64: 8, 32, 8>}, {pipeline_mode = #tpu.pipeline_mode<synchronous>, transform_indices = @transform_6, window_bounds = array<i64: 8, 32, 8>}, {pipeline_mode = #tpu.pipeline_mode<synchronous>, transform_indices = @transform_7, window_bounds = array<i64: 8, 32, 8>}, {pipeline_mode = #tpu.pipeline_mode<synchronous>, transform_indices = @transform_8, window_bounds = array<i64: 8, 8, 32>}, {pipeline_mode = #tpu.pipeline_mode<synchronous>, transform_indices = @transform_9, window_bounds = array<i64: 1, 32>}, {pipeline_mode = #tpu.pipeline_mode<synchronous>, transform_indices = @transform_10, window_bounds = array<i64: 1, 32>}, {pipeline_mode = #tpu.pipeline_mode<synchronous>, transform_indices = @transform_11, window_bounds = array<i64: 1, 32>}, {pipeline_mode = #tpu.pipeline_mode<synchronous>, transform_indices = @transform_12, window_bounds = array<i64: 32, 128>}, {pipeline_mode = #tpu.pipeline_mode<synchronous>, transform_indices = @transform_13, window_bounds = array<i64: 1, 128>}, {pipeline_mode = #tpu.pipeline_mode<synchronous>, transform_indices = @transform_14, window_bounds = array<i64: 128, 32>}, {pipeline_mode = #tpu.pipeline_mode<synchronous>, transform_indices = @transform_15, window_bounds = array<i64: 1, 32>}, {pipeline_mode = #tpu.pipeline_mode<synchronous>, transform_indices = @transform_16, window_bounds = array<i64: 1, 32>}, {pipeline_mode = #tpu.pipeline_mode<synchronous>, transform_indices = @transform_17, window_bounds = array<i64: 1, 32>}, {pipeline_mode = #tpu.pipeline_mode<synchronous>, transform_indices = @transform_18, window_bounds = array<i64: 32, 128>}, {pipeline_mode = #tpu.pipeline_mode<synchronous>, transform_indices = @transform_19, window_bounds = array<i64: 1, 128>}, {pipeline_mode = #tpu.pipeline_mode<synchronous>, transform_indices = @transform_20, window_bounds = array<i64: 8, 5, 8>}, {pipeline_mode = #tpu.pipeline_mode<synchronous>, transform_indices = @transform_21, window_bounds = array<i64: 8, 5, 8>}, {pipeline_mode = #tpu.pipeline_mode<synchronous>, transform_indices = @transform_22, window_bounds = array<i64: 8, 5, 8>}, {pipeline_mode = #tpu.pipeline_mode<synchronous>, transform_indices = @transform_23, window_bounds = array<i64: 2, 128>}]} {
    %c0 = arith.constant 0 : index
    %c0_0 = arith.constant 0 : index
    %0 = vector.load %arg1[%c0, %c0_0] : memref<10x192xbf16, #tpu.memory_space<vmem>>, vector<10x192xbf16>
    %c0_1 = arith.constant 0 : index
    %c0_2 = arith.constant 0 : index
    %1 = vector.load %arg3[%c0_1, %c0_2] : memref<192x32xbf16, #tpu.memory_space<vmem>>, vector<192x32xbf16>
    %cst = arith.constant dense<0.000000e+00> : vector<10x32xf32>
    %2 = tpu.matmul %0, %1, %cst {dimension_numbers = #tpu.dot_dimension_numbers<[1], [0], [0], [1], [0, 0, 1, 1], [], []>} : vector<10x192xbf16>, vector<192x32xbf16>, vector<10x32xf32> -> vector<10x32xf32>
    %c0_3 = arith.constant 0 : index
    %c0_4 = arith.constant 0 : index
    %3 = vector.load %arg2[%c0_3, %c0_4] : memref<10x32xf32, #tpu.memory_space<vmem>>, vector<10x32xf32>
    %4 = arith.addf %2, %3 : vector<10x32xf32>
    %cst_5 = arith.constant dense<0.000000e+00> : vector<10xf32>
    %5 = vector.multi_reduction <add>, %4, %cst_5 [1] : vector<10x32xf32> to vector<10xf32>
    %6 = vector.shape_cast %5 : vector<10xf32> to vector<10x1xf32>
    %cst_6 = arith.constant 3.200000e+01 : f32
    %7 = vector.broadcast %cst_6 : f32 to vector<10x1xf32>
    %8 = arith.divf %6, %7 : vector<10x1xf32>
    %9 = vector.broadcast %8 : vector<10x1xf32> to vector<10x32xf32>
    %10 = arith.subf %4, %9 : vector<10x32xf32>
    %11 = arith.mulf %10, %10 : vector<10x32xf32>
    %cst_7 = arith.constant dense<0.000000e+00> : vector<10xf32>
    %12 = vector.multi_reduction <add>, %11, %cst_7 [1] : vector<10x32xf32> to vector<10xf32>
    %13 = vector.shape_cast %12 : vector<10xf32> to vector<10x1xf32>
    %cst_8 = arith.constant 3.200000e+01 : f32
    %14 = vector.broadcast %cst_8 : f32 to vector<10x1xf32>
    %15 = arith.divf %13, %14 : vector<10x1xf32>
    %cst_9 = arith.constant 9.99999997E-7 : f32
    %16 = vector.broadcast %cst_9 : f32 to vector<10x1xf32>
    %17 = arith.addf %15, %16 : vector<10x1xf32>
    %18 = math.rsqrt %17 : vector<10x1xf32>
    %19 = vector.broadcast %18 : vector<10x1xf32> to vector<10x32xf32>
    %20 = arith.mulf %10, %19 : vector<10x32xf32>
    %c0_10 = arith.constant 0 : index
    %c0_11 = arith.constant 0 : index
    %21 = vector.load %arg4[%c0_10, %c0_11] : memref<1x32xf32, #tpu.memory_space<vmem>>, vector<1x32xf32>
    %22 = vector.broadcast %21 : vector<1x32xf32> to vector<10x32xf32>
    %23 = arith.mulf %20, %22 : vector<10x32xf32>
    %c0_12 = arith.constant 0 : index
    %c0_13 = arith.constant 0 : index
    %24 = vector.load %arg5[%c0_12, %c0_13] : memref<1x32xf32, #tpu.memory_space<vmem>>, vector<1x32xf32>
    %25 = vector.broadcast %24 : vector<1x32xf32> to vector<10x32xf32>
    %26 = arith.addf %23, %25 : vector<10x32xf32>
    %27 = vector.extract_strided_slice %26 {offsets = [0, 0], sizes = [5, 32], strides = [1, 1]} : vector<10x32xf32> to vector<5x32xf32>
    %28 = vector.shape_cast %27 : vector<5x32xf32> to vector<1x5x32xf32>
    %29 = vector.shape_cast %28 : vector<1x5x32xf32> to vector<1x5x32xf32>
    %30 = vector.broadcast %29 : vector<1x5x32xf32> to vector<4x5x32xf32>
    %31 = vector.extract_strided_slice %26 {offsets = [5, 0], sizes = [5, 32], strides = [1, 1]} : vector<10x32xf32> to vector<5x32xf32>
    %32 = vector.shape_cast %31 : vector<5x32xf32> to vector<1x5x32xf32>
    %33 = vector.shape_cast %32 : vector<1x5x32xf32> to vector<1x5x32xf32>
    %34 = vector.broadcast %33 : vector<1x5x32xf32> to vector<4x5x32xf32>
    %35 = tpu.concatenate %30, %34 in 0 : vector<4x5x32xf32>, vector<4x5x32xf32> -> vector<8x5x32xf32>
    %36 = arith.truncf %35 : vector<8x5x32xf32> to vector<8x5x32xbf16>
    %c0_14 = arith.constant 0 : index
    %c0_15 = arith.constant 0 : index
    %c0_16 = arith.constant 0 : index
    %37 = vector.load %arg6[%c0_14, %c0_15, %c0_16] : memref<8x32x8xbf16, #tpu.memory_space<vmem>>, vector<8x32x8xbf16>
    "tpu.trace_start"() <{level = 10 : i32, message = "ntd,nde->nte"}> : () -> ()
    %cst_17 = arith.constant dense<0.000000e+00> : vector<8x5x8xf32>
    %38 = tpu.matmul %36, %37, %cst_17 {dimension_numbers = #tpu.dot_dimension_numbers<[2], [1], [1], [2], [0, 0, 0, 1, 1, 2], [0], [0]>} : vector<8x5x32xbf16>, vector<8x32x8xbf16>, vector<8x5x8xf32> -> vector<8x5x8xf32>
    "tpu.trace_stop"() : () -> ()
    %c0_18 = arith.constant 0 : index
    %c0_19 = arith.constant 0 : index
    %c0_20 = arith.constant 0 : index
    %39 = vector.load %arg7[%c0_18, %c0_19, %c0_20] : memref<8x32x8xbf16, #tpu.memory_space<vmem>>, vector<8x32x8xbf16>
    "tpu.trace_start"() <{level = 10 : i32, message = "ntd,nde->nte"}> : () -> ()
    %cst_21 = arith.constant dense<0.000000e+00> : vector<8x5x8xf32>
    %40 = tpu.matmul %36, %39, %cst_21 {dimension_numbers = #tpu.dot_dimension_numbers<[2], [1], [1], [2], [0, 0, 0, 1, 1, 2], [0], [0]>} : vector<8x5x32xbf16>, vector<8x32x8xbf16>, vector<8x5x8xf32> -> vector<8x5x8xf32>
    "tpu.trace_stop"() : () -> ()
    %c0_22 = arith.constant 0 : index
    %c0_23 = arith.constant 0 : index
    %c0_24 = arith.constant 0 : index
    %41 = vector.load %arg8[%c0_22, %c0_23, %c0_24] : memref<8x32x8xbf16, #tpu.memory_space<vmem>>, vector<8x32x8xbf16>
    "tpu.trace_start"() <{level = 10 : i32, message = "ntd,nde->nte"}> : () -> ()
    %cst_25 = arith.constant dense<0.000000e+00> : vector<8x5x8xf32>
    %42 = tpu.matmul %36, %41, %cst_25 {dimension_numbers = #tpu.dot_dimension_numbers<[2], [1], [1], [2], [0, 0, 0, 1, 1, 2], [0], [0]>} : vector<8x5x32xbf16>, vector<8x32x8xbf16>, vector<8x5x8xf32> -> vector<8x5x8xf32>
    "tpu.trace_stop"() : () -> ()
    %c0_26 = arith.constant 0 : index
    %c0_27 = arith.constant 0 : index
    %c0_28 = arith.constant 0 : index
    %43 = vector.load %arg21[%c0_26, %c0_27, %c0_28] : memref<8x5x8xf32, #tpu.memory_space<vmem>>, vector<8x5x8xf32>
    tpu.vector_store %arg21[%c0_26, %c0_27, %c0_28], %38 {strides = array<i32>} : memref<8x5x8xf32, #tpu.memory_space<vmem>>, vector<8x5x8xf32>,
    %c0_29 = arith.constant 0 : index
    %c0_30 = arith.constant 0 : index
    %c0_31 = arith.constant 0 : index
    %44 = vector.load %arg22[%c0_29, %c0_30, %c0_31] : memref<8x5x8xf32, #tpu.memory_space<vmem>>, vector<8x5x8xf32>
    tpu.vector_store %arg22[%c0_29, %c0_30, %c0_31], %40 {strides = array<i32>} : memref<8x5x8xf32, #tpu.memory_space<vmem>>, vector<8x5x8xf32>,
    %c0_32 = arith.constant 0 : index
    %c0_33 = arith.constant 0 : index
    %c0_34 = arith.constant 0 : index
    %45 = vector.load %arg23[%c0_32, %c0_33, %c0_34] : memref<8x5x8xf32, #tpu.memory_space<vmem>>, vector<8x5x8xf32>
    tpu.vector_store %arg23[%c0_32, %c0_33, %c0_34], %42 {strides = array<i32>} : memref<8x5x8xf32, #tpu.memory_space<vmem>>, vector<8x5x8xf32>,
    %46 = arith.truncf %38 : vector<8x5x8xf32> to vector<8x5x8xbf16>
    %47 = arith.truncf %40 : vector<8x5x8xf32> to vector<8x5x8xbf16>
    "tpu.trace_start"() <{level = 10 : i32, message = "nqd,nkd->nqk"}> : () -> ()
    %cst_35 = arith.constant dense<0.000000e+00> : vector<8x5x5xf32>
    %48 = tpu.matmul %46, %47, %cst_35 {dimension_numbers = #tpu.dot_dimension_numbers<[2], [2], [1], [1], [0, 0, 0, 1, 1, 1], [0], [0]>} : vector<8x5x8xbf16>, vector<8x5x8xbf16>, vector<8x5x5xf32> -> vector<8x5x5xf32>
    "tpu.trace_stop"() : () -> ()
    %cst_36 = arith.constant 0.353553385 : f32
    %49 = vector.broadcast %cst_36 : f32 to vector<8x5x5xf32>
    %50 = arith.mulf %48, %49 : vector<8x5x5xf32>
    %cst_37 = arith.constant dense<0xFF800000> : vector<8x5xf32>
    %51 = vector.multi_reduction <maximumf>, %50, %cst_37 [2] : vector<8x5x5xf32> to vector<8x5xf32>
    %52 = vector.shape_cast %51 : vector<8x5xf32> to vector<8x5x1xf32>
    %53 = vector.broadcast %52 : vector<8x5x1xf32> to vector<8x5x5xf32>
    %54 = arith.subf %50, %53 : vector<8x5x5xf32>
    %55 = math.exp %54 : vector<8x5x5xf32>
    %cst_38 = arith.constant dense<0.000000e+00> : vector<8x5xf32>
    %56 = vector.multi_reduction <add>, %55, %cst_38 [2] : vector<8x5x5xf32> to vector<8x5xf32>
    %57 = vector.shape_cast %56 : vector<8x5xf32> to vector<8x5x1xf32>
    %58 = vector.broadcast %57 : vector<8x5x1xf32> to vector<8x5x5xf32>
    %59 = arith.divf %55, %58 : vector<8x5x5xf32>
    %60 = arith.truncf %59 : vector<8x5x5xf32> to vector<8x5x5xbf16>
    %61 = arith.truncf %42 : vector<8x5x8xf32> to vector<8x5x8xbf16>
    "tpu.trace_start"() <{level = 10 : i32, message = "nqk,nkd->nqd"}> : () -> ()
    %cst_39 = arith.constant dense<0.000000e+00> : vector<8x5x8xf32>
    %62 = tpu.matmul %60, %61, %cst_39 {dimension_numbers = #tpu.dot_dimension_numbers<[2], [1], [1], [2], [0, 0, 0, 1, 1, 2], [0], [0]>} : vector<8x5x5xbf16>, vector<8x5x8xbf16>, vector<8x5x8xf32> -> vector<8x5x8xf32>
    "tpu.trace_stop"() : () -> ()
    %63 = arith.truncf %62 : vector<8x5x8xf32> to vector<8x5x8xbf16>
    %c0_40 = arith.constant 0 : index
    %c0_41 = arith.constant 0 : index
    %c0_42 = arith.constant 0 : index
    %64 = vector.load %arg9[%c0_40, %c0_41, %c0_42] : memref<8x8x32xbf16, #tpu.memory_space<vmem>>, vector<8x8x32xbf16>
    "tpu.trace_start"() <{level = 10 : i32, message = "ntd,ndo->nto"}> : () -> ()
    %cst_43 = arith.constant dense<0.000000e+00> : vector<8x5x32xf32>
    %65 = tpu.matmul %63, %64, %cst_43 {dimension_numbers = #tpu.dot_dimension_numbers<[2], [1], [1], [2], [0, 0, 0, 1, 1, 2], [0], [0]>} : vector<8x5x8xbf16>, vector<8x8x32xbf16>, vector<8x5x32xf32> -> vector<8x5x32xf32>
    "tpu.trace_stop"() : () -> ()
    %66 = vector.extract_strided_slice %65 {offsets = [0, 0, 0], sizes = [4, 5, 32], strides = [1, 1, 1]} : vector<8x5x32xf32> to vector<4x5x32xf32>
    %cst_44 = arith.constant dense<0.000000e+00> : vector<5x32xf32>
    %67 = vector.multi_reduction <add>, %66, %cst_44 [0] : vector<4x5x32xf32> to vector<5x32xf32>
    %68 = vector.extract_strided_slice %65 {offsets = [4, 0, 0], sizes = [4, 5, 32], strides = [1, 1, 1]} : vector<8x5x32xf32> to vector<4x5x32xf32>
    %cst_45 = arith.constant dense<0.000000e+00> : vector<5x32xf32>
    %69 = vector.multi_reduction <add>, %68, %cst_45 [0] : vector<4x5x32xf32> to vector<5x32xf32>
    %70 = tpu.concatenate %67, %69 in 0 : vector<5x32xf32>, vector<5x32xf32> -> vector<10x32xf32>
    %71 = arith.addf %4, %70 : vector<10x32xf32>
    %c0_46 = arith.constant 0 : index
    %c0_47 = arith.constant 0 : index
    %72 = vector.load %arg10[%c0_46, %c0_47] : memref<1x32xf32, #tpu.memory_space<vmem>>, vector<1x32xf32>
    %73 = vector.broadcast %72 : vector<1x32xf32> to vector<10x32xf32>
    %74 = arith.addf %71, %73 : vector<10x32xf32>
    %cst_48 = arith.constant dense<0.000000e+00> : vector<10xf32>
    %75 = vector.multi_reduction <add>, %74, %cst_48 [1] : vector<10x32xf32> to vector<10xf32>
    %76 = vector.shape_cast %75 : vector<10xf32> to vector<10x1xf32>
    %cst_49 = arith.constant 3.200000e+01 : f32
    %77 = vector.broadcast %cst_49 : f32 to vector<10x1xf32>
    %78 = arith.divf %76, %77 : vector<10x1xf32>
    %79 = vector.broadcast %78 : vector<10x1xf32> to vector<10x32xf32>
    %80 = arith.subf %74, %79 : vector<10x32xf32>
    %81 = arith.mulf %80, %80 : vector<10x32xf32>
    %cst_50 = arith.constant dense<0.000000e+00> : vector<10xf32>
    %82 = vector.multi_reduction <add>, %81, %cst_50 [1] : vector<10x32xf32> to vector<10xf32>
    %83 = vector.shape_cast %82 : vector<10xf32> to vector<10x1xf32>
    %cst_51 = arith.constant 3.200000e+01 : f32
    %84 = vector.broadcast %cst_51 : f32 to vector<10x1xf32>
    %85 = arith.divf %83, %84 : vector<10x1xf32>
    %cst_52 = arith.constant 9.99999997E-7 : f32
    %86 = vector.broadcast %cst_52 : f32 to vector<10x1xf32>
    %87 = arith.addf %85, %86 : vector<10x1xf32>
    %88 = math.rsqrt %87 : vector<10x1xf32>
    %89 = vector.broadcast %88 : vector<10x1xf32> to vector<10x32xf32>
    %90 = arith.mulf %80, %89 : vector<10x32xf32>
    %c0_53 = arith.constant 0 : index
    %c0_54 = arith.constant 0 : index
    %91 = vector.load %arg11[%c0_53, %c0_54] : memref<1x32xf32, #tpu.memory_space<vmem>>, vector<1x32xf32>
    %92 = vector.broadcast %91 : vector<1x32xf32> to vector<10x32xf32>
    %93 = arith.mulf %90, %92 : vector<10x32xf32>
    %c0_55 = arith.constant 0 : index
    %c0_56 = arith.constant 0 : index
    %94 = vector.load %arg12[%c0_55, %c0_56] : memref<1x32xf32, #tpu.memory_space<vmem>>, vector<1x32xf32>
    %95 = vector.broadcast %94 : vector<1x32xf32> to vector<10x32xf32>
    %96 = arith.addf %93, %95 : vector<10x32xf32>
    %97 = arith.truncf %96 : vector<10x32xf32> to vector<10x32xbf16>
    %c0_57 = arith.constant 0 : index
    %c0_58 = arith.constant 0 : index
    %98 = vector.load %arg13[%c0_57, %c0_58] : memref<32x128xbf16, #tpu.memory_space<vmem>>, vector<32x128xbf16>
    %cst_59 = arith.constant dense<0.000000e+00> : vector<10x128xf32>
    %99 = tpu.matmul %97, %98, %cst_59 {dimension_numbers = #tpu.dot_dimension_numbers<[1], [0], [0], [1], [0, 0, 1, 1], [], []>} : vector<10x32xbf16>, vector<32x128xbf16>, vector<10x128xf32> -> vector<10x128xf32>
    %c0_60 = arith.constant 0 : index
    %c0_61 = arith.constant 0 : index
    %100 = vector.load %arg14[%c0_60, %c0_61] : memref<1x128xf32, #tpu.memory_space<vmem>>, vector<1x128xf32>
    %101 = vector.broadcast %100 : vector<1x128xf32> to vector<10x128xf32>
    %102 = arith.addf %99, %101 : vector<10x128xf32>
    %cst_62 = arith.constant 5.000000e-01 : f32
    %103 = vector.broadcast %cst_62 : f32 to vector<10x128xf32>
    %104 = arith.mulf %103, %102 : vector<10x128xf32>
    %cst_63 = arith.constant 0.707106769 : f32
    %105 = vector.broadcast %cst_63 : f32 to vector<10x128xf32>
    %106 = arith.mulf %102, %105 : vector<10x128xf32>
    %107 = math.erf %106 : vector<10x128xf32>
    %cst_64 = arith.constant 1.000000e+00 : f32
    %108 = vector.broadcast %cst_64 : f32 to vector<10x128xf32>
    %109 = arith.addf %108, %107 : vector<10x128xf32>
    %110 = arith.mulf %104, %109 : vector<10x128xf32>
    %111 = arith.truncf %110 : vector<10x128xf32> to vector<10x128xbf16>
    %c0_65 = arith.constant 0 : index
    %c0_66 = arith.constant 0 : index
    %112 = vector.load %arg15[%c0_65, %c0_66] : memref<128x32xbf16, #tpu.memory_space<vmem>>, vector<128x32xbf16>
    %cst_67 = arith.constant dense<0.000000e+00> : vector<10x32xf32>
    %113 = tpu.matmul %111, %112, %cst_67 {dimension_numbers = #tpu.dot_dimension_numbers<[1], [0], [0], [1], [0, 0, 1, 1], [], []>} : vector<10x128xbf16>, vector<128x32xbf16>, vector<10x32xf32> -> vector<10x32xf32>
    %114 = arith.addf %74, %113 : vector<10x32xf32>
    %c0_68 = arith.constant 0 : index
    %c0_69 = arith.constant 0 : index
    %115 = vector.load %arg16[%c0_68, %c0_69] : memref<1x32xf32, #tpu.memory_space<vmem>>, vector<1x32xf32>
    %116 = vector.broadcast %115 : vector<1x32xf32> to vector<10x32xf32>
    %117 = arith.addf %114, %116 : vector<10x32xf32>
    %118 = vector.extract_strided_slice %117 {offsets = [0, 0], sizes = [1, 32], strides = [1, 1]} : vector<10x32xf32> to vector<1x32xf32>
    %119 = vector.extract_strided_slice %117 {offsets = [5, 0], sizes = [1, 32], strides = [1, 1]} : vector<10x32xf32> to vector<1x32xf32>
    %120 = tpu.concatenate %118, %119 in 0 : vector<1x32xf32>, vector<1x32xf32> -> vector<2x32xf32>
    %cst_70 = arith.constant dense<0.000000e+00> : vector<2xf32>
    %121 = vector.multi_reduction <add>, %120, %cst_70 [1] : vector<2x32xf32> to vector<2xf32>
    %122 = vector.shape_cast %121 : vector<2xf32> to vector<2x1xf32>
    %cst_71 = arith.constant 3.200000e+01 : f32
    %123 = vector.broadcast %cst_71 : f32 to vector<2x1xf32>
    %124 = arith.divf %122, %123 : vector<2x1xf32>
    %125 = vector.broadcast %124 : vector<2x1xf32> to vector<2x32xf32>
    %126 = arith.subf %120, %125 : vector<2x32xf32>
    %127 = arith.mulf %126, %126 : vector<2x32xf32>
    %cst_72 = arith.constant dense<0.000000e+00> : vector<2xf32>
    %128 = vector.multi_reduction <add>, %127, %cst_72 [1] : vector<2x32xf32> to vector<2xf32>
    %129 = vector.shape_cast %128 : vector<2xf32> to vector<2x1xf32>
    %cst_73 = arith.constant 3.200000e+01 : f32
    %130 = vector.broadcast %cst_73 : f32 to vector<2x1xf32>
    %131 = arith.divf %129, %130 : vector<2x1xf32>
    %cst_74 = arith.constant 9.99999997E-7 : f32
    %132 = vector.broadcast %cst_74 : f32 to vector<2x1xf32>
    %133 = arith.addf %131, %132 : vector<2x1xf32>
    %134 = math.rsqrt %133 : vector<2x1xf32>
    %135 = vector.broadcast %134 : vector<2x1xf32> to vector<2x32xf32>
    %136 = arith.mulf %126, %135 : vector<2x32xf32>
    %c0_75 = arith.constant 0 : index
    %c0_76 = arith.constant 0 : index
    %137 = vector.load %arg17[%c0_75, %c0_76] : memref<1x32xf32, #tpu.memory_space<vmem>>, vector<1x32xf32>
    %138 = vector.broadcast %137 : vector<1x32xf32> to vector<2x32xf32>
    %139 = arith.mulf %136, %138 : vector<2x32xf32>
    %c0_77 = arith.constant 0 : index
    %c0_78 = arith.constant 0 : index
    %140 = vector.load %arg18[%c0_77, %c0_78] : memref<1x32xf32, #tpu.memory_space<vmem>>, vector<1x32xf32>
    %141 = vector.broadcast %140 : vector<1x32xf32> to vector<2x32xf32>
    %142 = arith.addf %139, %141 : vector<2x32xf32>
    %143 = arith.truncf %142 : vector<2x32xf32> to vector<2x32xbf16>
    %c0_79 = arith.constant 0 : index
    %c0_80 = arith.constant 0 : index
    %144 = vector.load %arg19[%c0_79, %c0_80] : memref<32x128xbf16, #tpu.memory_space<vmem>>, vector<32x128xbf16>
    %cst_81 = arith.constant dense<0.000000e+00> : vector<2x128xf32>
    %145 = tpu.matmul %143, %144, %cst_81 {dimension_numbers = #tpu.dot_dimension_numbers<[1], [0], [0], [1], [0, 0, 1, 1], [], []>} : vector<2x32xbf16>, vector<32x128xbf16>, vector<2x128xf32> -> vector<2x128xf32>
    %c0_82 = arith.constant 0 : index
    %c0_83 = arith.constant 0 : index
    %146 = vector.load %arg20[%c0_82, %c0_83] : memref<1x128xf32, #tpu.memory_space<vmem>>, vector<1x128xf32>
    %147 = vector.broadcast %146 : vector<1x128xf32> to vector<2x128xf32>
    %148 = arith.addf %145, %147 : vector<2x128xf32>
    %c0_84 = arith.constant 0 : index
    %c0_85 = arith.constant 0 : index
    %149 = vector.load %arg24[%c0_84, %c0_85] : memref<2x128xf32, #tpu.memory_space<vmem>>, vector<2x128xf32>
    tpu.vector_store %arg24[%c0_84, %c0_85], %148 {strides = array<i32>} : memref<2x128xf32, #tpu.memory_space<vmem>>, vector<2x128xf32>,
    return
  }
  func.func @transform_0(%arg0: i32) -> (i32, i32) {
    %c0_i32 = arith.constant 0 : i32
    %c0_i32_0 = arith.constant 0 : i32
    %c0_i32_1 = arith.constant 0 : i32
    return %c0_i32, %c0_i32_0 : i32, i32
  }
  func.func @transform_1(%arg0: i32) -> (i32, i32) {
    %c0_i32 = arith.constant 0 : i32
    %c0_i32_0 = arith.constant 0 : i32
    %c0_i32_1 = arith.constant 0 : i32
    return %c0_i32, %c0_i32_0 : i32, i32
  }
  func.func @transform_2(%arg0: i32) -> (i32, i32) {
    %c0_i32 = arith.constant 0 : i32
    %c0_i32_0 = arith.constant 0 : i32
    %c0_i32_1 = arith.constant 0 : i32
    return %c0_i32, %c0_i32_0 : i32, i32
  }
  func.func @transform_3(%arg0: i32) -> (i32, i32) {
    %c0_i32 = arith.constant 0 : i32
    %c0_i32_0 = arith.constant 0 : i32
    %c0_i32_1 = arith.constant 0 : i32
    return %c0_i32, %c0_i32_0 : i32, i32
  }
  func.func @transform_4(%arg0: i32) -> (i32, i32) {
    %c0_i32 = arith.constant 0 : i32
    %c0_i32_0 = arith.constant 0 : i32
    %c0_i32_1 = arith.constant 0 : i32
    return %c0_i32, %c0_i32_0 : i32, i32
  }
  func.func @transform_5(%arg0: i32) -> (i32, i32, i32) {
    %c0_i32 = arith.constant 0 : i32
    %c0_i32_0 = arith.constant 0 : i32
    %c0_i32_1 = arith.constant 0 : i32
    %c0_i32_2 = arith.constant 0 : i32
    return %c0_i32, %c0_i32_0, %c0_i32_1 : i32, i32, i32
  }
  func.func @transform_6(%arg0: i32) -> (i32, i32, i32) {
    %c0_i32 = arith.constant 0 : i32
    %c0_i32_0 = arith.constant 0 : i32
    %c0_i32_1 = arith.constant 0 : i32
    %c0_i32_2 = arith.constant 0 : i32
    return %c0_i32, %c0_i32_0, %c0_i32_1 : i32, i32, i32
  }
  func.func @transform_7(%arg0: i32) -> (i32, i32, i32) {
    %c0_i32 = arith.constant 0 : i32
    %c0_i32_0 = arith.constant 0 : i32
    %c0_i32_1 = arith.constant 0 : i32
    %c0_i32_2 = arith.constant 0 : i32
    return %c0_i32, %c0_i32_0, %c0_i32_1 : i32, i32, i32
  }
  func.func @transform_8(%arg0: i32) -> (i32, i32, i32) {
    %c0_i32 = arith.constant 0 : i32
    %c0_i32_0 = arith.constant 0 : i32
    %c0_i32_1 = arith.constant 0 : i32
    %c0_i32_2 = arith.constant 0 : i32
    return %c0_i32, %c0_i32_0, %c0_i32_1 : i32, i32, i32
  }
  func.func @transform_9(%arg0: i32) -> (i32, i32) {
    %c0_i32 = arith.constant 0 : i32
    %c0_i32_0 = arith.constant 0 : i32
    %c0_i32_1 = arith.constant 0 : i32
    return %c0_i32, %c0_i32_0 : i32, i32
  }
  func.func @transform_10(%arg0: i32) -> (i32, i32) {
    %c0_i32 = arith.constant 0 : i32
    %c0_i32_0 = arith.constant 0 : i32
    %c0_i32_1 = arith.constant 0 : i32
    return %c0_i32, %c0_i32_0 : i32, i32
  }
  func.func @transform_11(%arg0: i32) -> (i32, i32) {
    %c0_i32 = arith.constant 0 : i32
    %c0_i32_0 = arith.constant 0 : i32
    %c0_i32_1 = arith.constant 0 : i32
    return %c0_i32, %c0_i32_0 : i32, i32
  }
  func.func @transform_12(%arg0: i32) -> (i32, i32) {
    %c0_i32 = arith.constant 0 : i32
    %c0_i32_0 = arith.constant 0 : i32
    %c0_i32_1 = arith.constant 0 : i32
    return %c0_i32, %c0_i32_0 : i32, i32
  }
  func.func @transform_13(%arg0: i32) -> (i32, i32) {
    %c0_i32 = arith.constant 0 : i32
    %c0_i32_0 = arith.constant 0 : i32
    %c0_i32_1 = arith.constant 0 : i32
    return %c0_i32, %c0_i32_0 : i32, i32
  }
  func.func @transform_14(%arg0: i32) -> (i32, i32) {
    %c0_i32 = arith.constant 0 : i32
    %c0_i32_0 = arith.constant 0 : i32
    %c0_i32_1 = arith.constant 0 : i32
    return %c0_i32, %c0_i32_0 : i32, i32
  }
  func.func @transform_15(%arg0: i32) -> (i32, i32) {
    %c0_i32 = arith.constant 0 : i32
    %c0_i32_0 = arith.constant 0 : i32
    %c0_i32_1 = arith.constant 0 : i32
    return %c0_i32, %c0_i32_0 : i32, i32
  }
  func.func @transform_16(%arg0: i32) -> (i32, i32) {
    %c0_i32 = arith.constant 0 : i32
    %c0_i32_0 = arith.constant 0 : i32
    %c0_i32_1 = arith.constant 0 : i32
    return %c0_i32, %c0_i32_0 : i32, i32
  }
  func.func @transform_17(%arg0: i32) -> (i32, i32) {
    %c0_i32 = arith.constant 0 : i32
    %c0_i32_0 = arith.constant 0 : i32
    %c0_i32_1 = arith.constant 0 : i32
    return %c0_i32, %c0_i32_0 : i32, i32
  }
  func.func @transform_18(%arg0: i32) -> (i32, i32) {
    %c0_i32 = arith.constant 0 : i32
    %c0_i32_0 = arith.constant 0 : i32
    %c0_i32_1 = arith.constant 0 : i32
    return %c0_i32, %c0_i32_0 : i32, i32
  }
  func.func @transform_19(%arg0: i32) -> (i32, i32) {
    %c0_i32 = arith.constant 0 : i32
    %c0_i32_0 = arith.constant 0 : i32
    %c0_i32_1 = arith.constant 0 : i32
    return %c0_i32, %c0_i32_0 : i32, i32
  }
  func.func @transform_20(%arg0: i32) -> (i32, i32, i32) {
    %c0_i32 = arith.constant 0 : i32
    %c0_i32_0 = arith.constant 0 : i32
    %c0_i32_1 = arith.constant 0 : i32
    %c0_i32_2 = arith.constant 0 : i32
    return %c0_i32, %c0_i32_0, %c0_i32_1 : i32, i32, i32
  }
  func.func @transform_21(%arg0: i32) -> (i32, i32, i32) {
    %c0_i32 = arith.constant 0 : i32
    %c0_i32_0 = arith.constant 0 : i32
    %c0_i32_1 = arith.constant 0 : i32
    %c0_i32_2 = arith.constant 0 : i32
    return %c0_i32, %c0_i32_0, %c0_i32_1 : i32, i32, i32
  }
  func.func @transform_22(%arg0: i32) -> (i32, i32, i32) {
    %c0_i32 = arith.constant 0 : i32
    %c0_i32_0 = arith.constant 0 : i32
    %c0_i32_1 = arith.constant 0 : i32
    %c0_i32_2 = arith.constant 0 : i32
    return %c0_i32, %c0_i32_0, %c0_i32_1 : i32, i32, i32
  }
  func.func @transform_23(%arg0: i32) -> (i32, i32) {
    %c0_i32 = arith.constant 0 : i32
    %c0_i32_0 = arith.constant 0 : i32
    %c0_i32_1 = arith.constant 0 : i32
    return %c0_i32, %c0_i32_0 : i32, i32
  }
}

</mosaic_0001>

<llo_original>
// kernel: tile.28
$region0: #{tile.28}
  %s0 = inlined_call_operand.vmem [shape: f32[2,5,32], index: 0, kind: input, shape index: {}]
  %s1 = inlined_call_operand.vmem [shape: f32[10,32], index: 1, kind: output, shape index: {}]
  %v2 = vld [vmem:[%s0] sm:$0x1f]
  %vm3 = vcmask 261120
  %4 = vst.msk [vmem:[%s1] sm:$0x1f] %vm3, %v2
  %s5 = scalar_lea.vmem %s0, 8
  %v6 = vld [vmem:[%s5] sm:$0x1f]
  %vm7 = vcmask 261120
  %s8 = scalar_lea.vmem %s1, 5
  %9 = vst.msk [vmem:[%s8] sm:$0x1f] %vm7, %v6

// kernel: vit_forward.1
$region0: #{vit_forward.1}
  #allocation0 [shape = 'u32[]', space=smem, size = 0x4, offset = 0x4, fixed_abs, tag = 'smem constant byte address 0x4 - core index']
  #allocation1 [shape = 'u32[144,128]{1,0:T(1,128)}', space=vmem, size = 0x12000, scoped, tag = 'internal scratch']
  %s0 = inlined_call_operand.vmem [shape: bf16[10,192], index: 0, kind: input, shape index: {}]
  %s1 = inlined_call_operand.vmem [shape: f32[10,32], index: 1, kind: input, shape index: {}]
  %s2 = inlined_call_operand.vmem [shape: bf16[192,32], index: 2, kind: input, shape index: {}]
  %s3 = inlined_call_operand.vmem [shape: f32[1,32], index: 3, kind: input, shape index: {}]
  %s4 = inlined_call_operand.vmem [shape: f32[1,32], index: 4, kind: input, shape index: {}]
  %s5 = inlined_call_operand.vmem [shape: bf16[8,32,8], index: 5, kind: input, shape index: {}]
  %s6 = inlined_call_operand.vmem [shape: bf16[8,32,8], index: 6, kind: input, shape index: {}]
  %s7 = inlined_call_operand.vmem [shape: bf16[8,32,8], index: 7, kind: input, shape index: {}]
  %s8 = inlined_call_operand.vmem [shape: bf16[8,8,32], index: 8, kind: input, shape index: {}]
  %s9 = inlined_call_operand.vmem [shape: f32[1,32], index: 9, kind: input, shape index: {}]
  %s10 = inlined_call_operand.vmem [shape: f32[1,32], index: 10, kind: input, shape index: {}]
  %s11 = inlined_call_operand.vmem [shape: f32[1,32], index: 11, kind: input, shape index: {}]
  %s12 = inlined_call_operand.vmem [shape: bf16[32,128], index: 12, kind: input, shape index: {}]
  %s13 = inlined_call_operand.vmem [shape: f32[1,128], index: 13, kind: input, shape index: {}]
  %s14 = inlined_call_operand.vmem [shape: bf16[128,32], index: 14, kind: input, shape index: {}]
  %s15 = inlined_call_operand.vmem [shape: f32[1,32], index: 15, kind: input, shape index: {}]
  %s16 = inlined_call_operand.vmem [shape: f32[1,32], index: 16, kind: input, shape index: {}]
  %s17 = inlined_call_operand.vmem [shape: f32[1,32], index: 17, kind: input, shape index: {}]
  %s18 = inlined_call_operand.vmem [shape: bf16[32,128], index: 18, kind: input, shape index: {}]
  %s19 = inlined_call_operand.vmem [shape: f32[1,128], index: 19, kind: input, shape index: {}]
  %s20 = inlined_call_operand.vmem [shape: f32[8,5,8], index: 20, kind: output, shape index: {0}]
  %s21 = inlined_call_operand.vmem [shape: f32[8,5,8], index: 21, kind: output, shape index: {1}]
  %s22 = inlined_call_operand.vmem [shape: f32[8,5,8], index: 22, kind: output, shape index: {2}]
  %s23 = inlined_call_operand.hbm [shape: f32[2,128], index: 23, kind: output, shape index: {3}]
  %24 = xla_tuple %s20, %s21, %s22, %s23
  %s25 = sld [smem:[#allocation0]]
  $region114: #{vit_forward.1} parent=0
    _
  %s27 = ssub.s32 1, %s25
  %s28 = scalar_select 0, %s27, %s25
  $region1: #{vit_forward.1} parent=0
    #allocation2 [shape = 'u8[1024]{0}', space=vmem, size = 0x400, scoped, tag = 'output window, operand 3, single buffered']
    #allocation3 [shape = 's32[1]{0}', space=sflag, size = 0x4, scoped, tag = 'scoped memory for vit_forward.1']
    %29 = vsyncpa [#allocation3], 0
    // Predicated region
    $region2: #{vit_forward.1} parent=1 // pred_check
      _
    $region3: #{vit_forward.1} parent=1 // pred_check_branch
      %31 = sbr.rel (0) target = $region5
    $region4: #{vit_forward.1} parent=1 // pred_region
      _
    $region5: #{vit_forward.1} parent=1 // pred_fallthru
      _
    // Predicated region
    $region6: #{vit_forward.1} parent=1 // pred_check
      _
    $region7: #{vit_forward.1} parent=1 // pred_check_branch
      %33 = sbr.rel (0) target = $region9
    $region8: #{vit_forward.1} parent=1 // pred_region
      _
    $region9: #{vit_forward.1} parent=1 // pred_fallthru
      _
    // Predicated region
    $region10: #{vit_forward.1} parent=1 // pred_check
      _
    $region11: #{vit_forward.1} parent=1 // pred_check_branch
      %35 = sbr.rel (0) target = $region13
    $region12: #{vit_forward.1} parent=1 // pred_region
      _
    $region13: #{vit_forward.1} parent=1 // pred_fallthru
      _
    // Predicated region
    $region14: #{vit_forward.1} parent=1 // pred_check
      _
    $region15: #{vit_forward.1} parent=1 // pred_check_branch
      %37 = sbr.rel (0) target = $region17
    $region16: #{vit_forward.1} parent=1 // pred_region
      _
    $region17: #{vit_forward.1} parent=1 // pred_fallthru
      _
    // Predicated region
    $region18: #{vit_forward.1} parent=1 // pred_check
      _
    $region19: #{vit_forward.1} parent=1 // pred_check_branch
      %39 = sbr.rel (0) target = $region21
    $region20: #{vit_forward.1} parent=1 // pred_region
      _
    $region21: #{vit_forward.1} parent=1 // pred_fallthru
      _
    // Predicated region
    $region22: #{vit_forward.1} parent=1 // pred_check
      _
    $region23: #{vit_forward.1} parent=1 // pred_check_branch
      %41 = sbr.rel (0) target = $region25
    $region24: #{vit_forward.1} parent=1 // pred_region
      _
    $region25: #{vit_forward.1} parent=1 // pred_fallthru
      _
    // Predicated region
    $region26: #{vit_forward.1} parent=1 // pred_check
      _
    $region27: #{vit_forward.1} parent=1 // pred_check_branch
      %43 = sbr.rel (0) target = $region29
    $region28: #{vit_forward.1} parent=1 // pred_region
      _
    $region29: #{vit_forward.1} parent=1 // pred_fallthru
      _
    // Predicated region
    $region30: #{vit_forward.1} parent=1 // pred_check
      _
    $region31: #{vit_forward.1} parent=1 // pred_check_branch
      %45 = sbr.rel (0) target = $region33
    $region32: #{vit_forward.1} parent=1 // pred_region
      _
    $region33: #{vit_forward.1} parent=1 // pred_fallthru
      _
    // Predicated region
    $region34: #{vit_forward.1} parent=1 // pred_check
      _
    $region35: #{vit_forward.1} parent=1 // pred_check_branch
      %47 = sbr.rel (0) target = $region37
    $region36: #{vit_forward.1} parent=1 // pred_region
      _
    $region37: #{vit_forward.1} parent=1 // pred_fallthru
      _
    // Predicated region
    $region38: #{vit_forward.1} parent=1 // pred_check
      _
    $region39: #{vit_forward.1} parent=1 // pred_check_branch
      %49 = sbr.rel (0) target = $region41
    $region40: #{vit_forward.1} parent=1 // pred_region
      _
    $region41: #{vit_forward.1} parent=1 // pred_fallthru
      _
    // Predicated region
    $region42: #{vit_forward.1} parent=1 // pred_check
      _
    $region43: #{vit_forward.1} parent=1 // pred_check_branch
      %51 = sbr.rel (0) target = $region45
    $region44: #{vit_forward.1} parent=1 // pred_region
      _
    $region45: #{vit_forward.1} parent=1 // pred_fallthru
      _
    // Predicated region
    $region46: #{vit_forward.1} parent=1 // pred_check
      _
    $region47: #{vit_forward.1} parent=1 // pred_check_branch
      %53 = sbr.rel (0) target = $region49
    $region48: #{vit_forward.1} parent=1 // pred_region
      _
    $region49: #{vit_forward.1} parent=1 // pred_fallthru
      _
    // Predicated region
    $region50: #{vit_forward.1} parent=1 // pred_check
      _
    $region51: #{vit_forward.1} parent=1 // pred_check_branch
      %55 = sbr.rel (0) target = $region53
    $region52: #{vit_forward.1} parent=1 // pred_region
      _
    $region53: #{vit_forward.1} parent=1 // pred_fallthru
      _
    // Predicated region
    $region54: #{vit_forward.1} parent=1 // pred_check
      _
    $region55: #{vit_forward.1} parent=1 // pred_check_branch
      %57 = sbr.rel (0) target = $region57
    $region56: #{vit_forward.1} parent=1 // pred_region
      _
    $region57: #{vit_forward.1} parent=1 // pred_fallthru
      _
    // Predicated region
    $region58: #{vit_forward.1} parent=1 // pred_check
      _
    $region59: #{vit_forward.1} parent=1 // pred_check_branch
      %59 = sbr.rel (0) target = $region61
    $region60: #{vit_forward.1} parent=1 // pred_region
      _
    $region61: #{vit_forward.1} parent=1 // pred_fallthru
      _
    // Predicated region
    $region62: #{vit_forward.1} parent=1 // pred_check
      _
    $region63: #{vit_forward.1} parent=1 // pred_check_branch
      %61 = sbr.rel (0) target = $region65
    $region64: #{vit_forward.1} parent=1 // pred_region
      _
    $region65: #{vit_forward.1} parent=1 // pred_fallthru
      _
    // Predicated region
    $region66: #{vit_forward.1} parent=1 // pred_check
      _
    $region67: #{vit_forward.1} parent=1 // pred_check_branch
      %63 = sbr.rel (0) target = $region69
    $region68: #{vit_forward.1} parent=1 // pred_region
      _
    $region69: #{vit_forward.1} parent=1 // pred_fallthru
      _
    // Predicated region
    $region70: #{vit_forward.1} parent=1 // pred_check
      _
    $region71: #{vit_forward.1} parent=1 // pred_check_branch
      %65 = sbr.rel (0) target = $region73
    $region72: #{vit_forward.1} parent=1 // pred_region
      _
    $region73: #{vit_forward.1} parent=1 // pred_fallthru
      _
    // Predicated region
    $region74: #{vit_forward.1} parent=1 // pred_check
      _
    $region75: #{vit_forward.1} parent=1 // pred_check_branch
      %67 = sbr.rel (0) target = $region77
    $region76: #{vit_forward.1} parent=1 // pred_region
      _
    $region77: #{vit_forward.1} parent=1 // pred_fallthru
      _
    // Predicated region
    $region78: #{vit_forward.1} parent=1 // pred_check
      _
    $region79: #{vit_forward.1} parent=1 // pred_check_branch
      %69 = sbr.rel (0) target = $region81
    $region80: #{vit_forward.1} parent=1 // pred_region
      _
    $region81: #{vit_forward.1} parent=1 // pred_fallthru
      _
    %v71 = vld [vmem:[%s0] sm:$0xff]
    %v72 = vld [vmem:[%s0 + $0x8] sm:$0x11]
    %v73 = vld [vmem:[%s2] sm:$0xf]
    %v74 = vld [vmem:[%s2 + $0x4] sm:$0xf]
    %v75 = vld [vmem:[%s2 + $0x8] sm:$0xf]
    %v76 = vld [vmem:[%s2 + $0xc] sm:$0xf]
    %v77 = vld [vmem:[%s2 + $0x10] sm:$0xf]
    %v78 = vld [vmem:[%s2 + $0x14] sm:$0xf]
    %v79 = vld [vmem:[%s2 + $0x18] sm:$0xf]
    %v80 = vld [vmem:[%s2 + $0x1c] sm:$0xf]
    %v81 = vld [vmem:[%s2 + $0x20] sm:$0xf]
    %v82 = vld [vmem:[%s2 + $0x24] sm:$0xf]
    %v83 = vld [vmem:[%s2 + $0x28] sm:$0xf]
    %v84 = vld [vmem:[%s2 + $0x2c] sm:$0xf]
    %v85 = vld [vmem:[%s2 + $0x30] sm:$0xf]
    %v86 = vld [vmem:[%s2 + $0x34] sm:$0xf]
    %v87 = vld [vmem:[%s2 + $0x38] sm:$0xf]
    %v88 = vld [vmem:[%s2 + $0x3c] sm:$0xf]
    %v89 = vld [vmem:[%s2 + $0x40] sm:$0xf]
    %v90 = vld [vmem:[%s2 + $0x44] sm:$0xf]
    %v91 = vld [vmem:[%s2 + $0x48] sm:$0xf]
    %v92 = vld [vmem:[%s2 + $0x4c] sm:$0xf]
    %v93 = vld [vmem:[%s2 + $0x50] sm:$0xf]
    %v94 = vld [vmem:[%s2 + $0x54] sm:$0xf]
    %v95 = vld [vmem:[%s2 + $0x58] sm:$0xf]
    %v96 = vld [vmem:[%s2 + $0x5c] sm:$0xf]
    %v97 = vld [vmem:[%s1] sm:$0xff]
    %v98 = vld [vmem:[%s1 + $0x8] sm:$0x3]
    %v101 = vunpack.c.l.b16 %v71
    %v102 = vunpack.c.h.b16 %v71
    %v103 = vunpack.c.l.b16 %v72
    %v104 = vunpack.c.h.b16 %v72
    %v105 = vpack.c.b16 %v103, %v101
    %v106 = vpack.c.b16 %v104, %v102
    %v132 = vunpack.c.l.b16 %v73
    %v133 = vunpack.c.l.b16 %v74
    %v134 = vunpack.c.l.b16 %v75
    %v135 = vunpack.c.l.b16 %v76
    %v136 = vunpack.c.l.b16 %v77
    %v137 = vunpack.c.l.b16 %v78
    %v138 = vunpack.c.l.b16 %v79
    %v139 = vunpack.c.l.b16 %v80
    %v140 = vunpack.c.l.b16 %v81
    %v141 = vunpack.c.l.b16 %v82
    %v142 = vunpack.c.l.b16 %v83
    %v143 = vunpack.c.l.b16 %v84
    %v144 = vunpack.c.l.b16 %v85
    %v145 = vunpack.c.l.b16 %v86
    %v146 = vunpack.c.l.b16 %v87
    %v147 = vunpack.c.l.b16 %v88
    %v148 = vunpack.c.l.b16 %v89
    %v149 = vunpack.c.l.b16 %v90
    %v150 = vunpack.c.l.b16 %v91
    %v151 = vunpack.c.l.b16 %v92
    %v152 = vunpack.c.l.b16 %v93
    %v153 = vunpack.c.l.b16 %v94
    %v154 = vunpack.c.l.b16 %v95
    %v155 = vunpack.c.l.b16 %v96
    %v156 = vpack.c.b16 %v133, %v132
    %v157 = vpack.c.b16 %v135, %v134
    %v158 = vpack.c.b16 %v137, %v136
    %v159 = vpack.c.b16 %v139, %v138
    %v160 = vpack.c.b16 %v141, %v140
    %v161 = vpack.c.b16 %v143, %v142
    %v162 = vpack.c.b16 %v145, %v144
    %v163 = vpack.c.b16 %v147, %v146
    %v164 = vpack.c.b16 %v149, %v148
    %v165 = vpack.c.b16 %v151, %v150
    %v166 = vpack.c.b16 %v153, %v152
    %v167 = vpack.c.b16 %v155, %v154
    %vm180 = vcmask 523264
    %v182 = vsel %vm180, %v106, 0
    %184 = vmatprep.subr.bf16.mxu0 0
    %185 = vmatpush1.bf16.msra.mxu0 %v156
    %186 = vmatprep.subr.bf16.mxu0 0
    %187 = vmatpush1.bf16.msra.mxu0 %v157
    %188 = vmatprep.subr.bf16.mxu0 0
    %189 = vmatpush1.bf16.msra.mxu0 %v158
    %190 = vmatprep.subr.bf16.mxu0 0
    %191 = vmatpush1.bf16.msra.mxu0 %v159
    %192 = vmatprep.subr.bf16.mxu0 0
    %193 = vmatpush1.bf16.msra.mxu0 %v160
    %194 = vmatprep.subr.bf16.mxu0 0
    %195 = vmatpush1.bf16.msra.mxu0 %v161
    %196 = vmatprep.subr.bf16.mxu0 0
    %197 = vmatpush1.bf16.msra.mxu0 %v162
    %198 = vmatprep.subr.bf16.mxu0 0
    %199 = vmatpush1.bf16.msra.mxu0 %v163
    %200 = vmatprep.subr.bf16.mxu0 0
    %201 = vmatpush1.bf16.msra.mxu0 %v164
    %202 = vmatprep.subr.bf16.mxu0 0
    %203 = vmatpush1.bf16.msra.mxu0 %v165
    %204 = vmatprep.subr.bf16.mxu0 0
    %205 = vmatpush1.bf16.msra.mxu0 %v166
    %206 = vmatprep.subr.bf16.mxu0 0
    %207 = vmatpush1.bf16.msra.mxu0 %v167
    %208 = vmatprep.subr.bf16.mxu0 0
    %209 = vmatpush1.bf16.msra.mxu0 0
    %210 = vmatprep.subr.bf16.mxu0 0
    %211 = vmatpush1.bf16.msra.mxu0 0
    %212 = vmatprep.subr.bf16.mxu0 0
    %213 = vmatpush1.bf16.msra.mxu0 0
    %214 = vmatprep.subr.bf16.mxu0 0
    %215 = vmatpush1.bf16.msra.mxu0 0
    %216 = vmatprep.mubr.bf16.mxu0 %v182
    %217 = vmatmul.mubr.bf16.gmra.mrb[0].mxu0 %v105
    %v218 = vpop.f32.mrb[0].mxu0
    %v219 = vadd.f32 %v97, %v218
    %v220 = vpop.f32.mrb[0].mxu0
    %v221 = vpop.f32.mrb[0].mxu0
    %v222 = vadd.f32 %v98, %v221
    %v223 = vpop.f32.mrb[0].mxu0
    %224 = vdwg.mxu0
    %vm225 = vcmask 261120
    %v226 = vsel %vm225, %v219, 0.0
    %227 = vadd.xlane.f32.xlu0 %v226
    %v228 = vpop.xlane.xlu0 %227
    %vm229 = vcmask 254976
    %v230 = vsel %vm229, %v222, 0.0
    %231 = vadd.xlane.f32.xlu0 %v230
    %v232 = vpop.xlane.xlu0 %231
    %v233 = vrcp.pop 32.0
    %v234 = vmul.f32 %v228, %v233
    %v235 = vmul.f32 %v232, %v233
    %v236 = vsub.f32 %v219, %v234
    %v237 = vsub.f32 %v222, %v235
    %v238 = vmul.f32 %v236, %v236
    %v239 = vmul.f32 %v237, %v237
    %v240 = vsel %vm225, %v238, 0.0
    %241 = vadd.xlane.f32.xlu0 %v240
    %v242 = vpop.xlane.xlu0 %241
    %v243 = vsel %vm229, %v239, 0.0
    %244 = vadd.xlane.f32.xlu0 %v243
    %v245 = vpop.xlane.xlu0 %244
    %v246 = vmul.f32 %v242, %v233
    %v247 = vmul.f32 %v245, %v233
    %v248 = vadd.f32 %v246, 1e-06
    %v249 = vadd.f32 %v247, 1e-06
    %v250 = vrsqrt.pop %v248
    %v251 = vrsqrt.pop %v249
    %v252 = vmul.f32 %v236, %v250
    %v253 = vmul.f32 %v237, %v251
    %v254 = vld [vmem:[%s3] sm:$0x1]
    %v256 = vlaneseq
    %v257 = vshrl.u32 %v256, 7
    %v258 = vsub.s32 0, %v257
    %v259 = vrot.slane %v254, %v258
    %v261 = vmul.f32 %v252, %v259
    %v262 = vmul.f32 %v253, %v259
    %v263 = vld [vmem:[%s4] sm:$0x1]
    %v265 = vlaneseq
    %v266 = vshrl.u32 %v265, 7
    %v267 = vsub.s32 0, %v266
    %v268 = vrot.slane %v263, %v267
    %v270 = vadd.f32 %v261, %v268
    %v271 = vadd.f32 %v262, %v268
    %vm274 = vcmask 1042432
    %v275 = vrot.slane %v270, 5
    %v276 = vrot.slane %v271, 5
    %v277 = vsel %vm274, %v275, %v276
    %v279 = vpack.c.bf16 %v270, %v270
    %v280 = vpack.c.bf16 %v277, %v277
    %v281 = vld [vmem:[%s5] sm:$0xf]
    %v282 = vld [vmem:[%s5 + $0x4] sm:$0xf]
    %v283 = vld [vmem:[%s5 + $0x8] sm:$0xf]
    %v284 = vld [vmem:[%s5 + $0xc] sm:$0xf]
    %v285 = vld [vmem:[%s5 + $0x10] sm:$0xf]
    %v286 = vld [vmem:[%s5 + $0x14] sm:$0xf]
    %v287 = vld [vmem:[%s5 + $0x18] sm:$0xf]
    %v288 = vld [vmem:[%s5 + $0x1c] sm:$0xf]
    %v289 = vld [vmem:[%s5 + $0x20] sm:$0xf]
    %v290 = vld [vmem:[%s5 + $0x24] sm:$0xf]
    %v291 = vld [vmem:[%s5 + $0x28] sm:$0xf]
    %v292 = vld [vmem:[%s5 + $0x2c] sm:$0xf]
    %v293 = vld [vmem:[%s5 + $0x30] sm:$0xf]
    %v294 = vld [vmem:[%s5 + $0x34] sm:$0xf]
    %v295 = vld [vmem:[%s5 + $0x38] sm:$0xf]
    %v296 = vld [vmem:[%s5 + $0x3c] sm:$0xf]
    %v297 = vld [vmem:[%s5 + $0x40] sm:$0xf]
    %v298 = vld [vmem:[%s5 + $0x44] sm:$0xf]
    %v299 = vld [vmem:[%s5 + $0x48] sm:$0xf]
    %v300 = vld [vmem:[%s5 + $0x4c] sm:$0xf]
    %v301 = vld [vmem:[%s5 + $0x50] sm:$0xf]
    %v302 = vld [vmem:[%s5 + $0x54] sm:$0xf]
    %v303 = vld [vmem:[%s5 + $0x58] sm:$0xf]
    %v304 = vld [vmem:[%s5 + $0x5c] sm:$0xf]
    %v305 = vld [vmem:[%s5 + $0x60] sm:$0xf]
    %v306 = vld [vmem:[%s5 + $0x64] sm:$0xf]
    %v307 = vld [vmem:[%s5 + $0x68] sm:$0xf]
    %v308 = vld [vmem:[%s5 + $0x6c] sm:$0xf]
    %v309 = vld [vmem:[%s5 + $0x70] sm:$0xf]
    %v310 = vld [vmem:[%s5 + $0x74] sm:$0xf]
    %v311 = vld [vmem:[%s5 + $0x78] sm:$0xf]
    %v312 = vld [vmem:[%s5 + $0x7c] sm:$0xf]
    %v317 = vunpack.c.l.b16 %v281
    %v318 = vunpack.c.l.b16 %v282
    %v319 = vunpack.c.l.b16 %v283
    %v320 = vunpack.c.l.b16 %v284
    %v321 = vpack.c.b16 %v318, %v317
    %v322 = vpack.c.b16 %v320, %v319
    %v326 = vsel %vm225, %v279, 0
    %328 = vmatprep.subr.bf16.mxu0 0
    %329 = vmatpush1.bf16.msra.mxu0 %v321
    %330 = vmatprep.subr.bf16.mxu0 0
    %331 = vmatpush1.bf16.msra.mxu0 %v322
    %332 = vmatprep.subr.bf16.mxu0 0
    %333 = vmatpush1.bf16.msra.mxu0 0
    %334 = vmatprep.subr.bf16.mxu0 0
    %335 = vmatpush1.bf16.msra.mxu0 0
    %336 = vmatprep.subr.bf16.mxu0 0
    %337 = vmatpush1.bf16.msra.mxu0 0
    %338 = vmatprep.subr.bf16.mxu0 0
    %339 = vmatpush1.bf16.msra.mxu0 0
    %340 = vmatprep.subr.bf16.mxu0 0
    %341 = vmatpush1.bf16.msra.mxu0 0
    %342 = vmatprep.subr.bf16.mxu0 0
    %343 = vmatpush1.bf16.msra.mxu0 0
    %344 = vmatprep.subr.bf16.mxu0 0
    %345 = vmatpush1.bf16.msra.mxu0 0
    %346 = vmatprep.subr.bf16.mxu0 0
    %347 = vmatpush1.bf16.msra.mxu0 0
    %348 = vmatprep.subr.bf16.mxu0 0
    %349 = vmatpush1.bf16.msra.mxu0 0
    %350 = vmatprep.subr.bf16.mxu0 0
    %351 = vmatpush1.bf16.msra.mxu0 0
    %352 = vmatprep.subr.bf16.mxu0 0
    %353 = vmatpush1.bf16.msra.mxu0 0
    %354 = vmatprep.subr.bf16.mxu0 0
    %355 = vmatpush1.bf16.msra.mxu0 0
    %356 = vmatprep.subr.bf16.mxu0 0
    %357 = vmatpush1.bf16.msra.mxu0 0
    %358 = vmatprep.subr.bf16.mxu0 0
    %359 = vmatpush1.bf16.msra.mxu0 0
    %360 = vmatprep.mubr.bf16.mxu0 0
    %361 = vmatmul.mubr.bf16.gmra.mrb[0].mxu0 %v326
    %v362 = vpop.f32.mrb[0].mxu0
    %v363 = vadd.f32 0.0, %v362
    %v364 = vpop.f32.mrb[0].mxu0
    %v365 = vpop.f32.mrb[0].mxu0
    %v366 = vpop.f32.mrb[0].mxu0
    %367 = vdwg.mxu0
    %v372 = vunpack.c.l.b16 %v285
    %v373 = vunpack.c.l.b16 %v286
    %v374 = vunpack.c.l.b16 %v287
    %v375 = vunpack.c.l.b16 %v288
    %v376 = vpack.c.b16 %v373, %v372
    %v377 = vpack.c.b16 %v375, %v374
    %380 = vmatprep.subr.bf16.mxu0 0
    %381 = vmatpush1.bf16.msra.mxu0 %v376
    %382 = vmatprep.subr.bf16.mxu0 0
    %383 = vmatpush1.bf16.msra.mxu0 %v377
    %384 = vmatprep.subr.bf16.mxu0 0
    %385 = vmatpush1.bf16.msra.mxu0 0
    %386 = vmatprep.subr.bf16.mxu0 0
    %387 = vmatpush1.bf16.msra.mxu0 0
    %388 = vmatprep.subr.bf16.mxu0 0
    %389 = vmatpush1.bf16.msra.mxu0 0
    %390 = vmatprep.subr.bf16.mxu0 0
    %391 = vmatpush1.bf16.msra.mxu0 0
    %392 = vmatprep.subr.bf16.mxu0 0
    %393 = vmatpush1.bf16.msra.mxu0 0
    %394 = vmatprep.subr.bf16.mxu0 0
    %395 = vmatpush1.bf16.msra.mxu0 0
    %396 = vmatprep.subr.bf16.mxu0 0
    %397 = vmatpush1.bf16.msra.mxu0 0
    %398 = vmatprep.subr.bf16.mxu0 0
    %399 = vmatpush1.bf16.msra.mxu0 0
    %400 = vmatprep.subr.bf16.mxu0 0
    %401 = vmatpush1.bf16.msra.mxu0 0
    %402 = vmatprep.subr.bf16.mxu0 0
    %403 = vmatpush1.bf16.msra.mxu0 0
    %404 = vmatprep.subr.bf16.mxu0 0
    %405 = vmatpush1.bf16.msra.mxu0 0
    %406 = vmatprep.subr.bf16.mxu0 0
    %407 = vmatpush1.bf16.msra.mxu0 0
    %408 = vmatprep.subr.bf16.mxu0 0
    %409 = vmatpush1.bf16.msra.mxu0 0
    %410 = vmatprep.subr.bf16.mxu0 0
    %411 = vmatpush1.bf16.msra.mxu0 0
    %412 = vmatprep.mubr.bf16.mxu0 0
    %413 = vmatmul.mubr.bf16.gmra.mrb[0].mxu0 %v326
    %v414 = vpop.f32.mrb[0].mxu0
    %v415 = vadd.f32 0.0, %v414
    %v416 = vpop.f32.mrb[0].mxu0
    %v417 = vpop.f32.mrb[0].mxu0
    %v418 = vpop.f32.mrb[0].mxu0
    %419 = vdwg.mxu0
    %v424 = vunpack.c.l.b16 %v289
    %v425 = vunpack.c.l.b16 %v290
    %v426 = vunpack.c.l.b16 %v291
    %v427 = vunpack.c.l.b16 %v292
    %v428 = vpack.c.b16 %v425, %v424
    %v429 = vpack.c.b16 %v427, %v426
    %432 = vmatprep.subr.bf16.mxu0 0
    %433 = vmatpush1.bf16.msra.mxu0 %v428
    %434 = vmatprep.subr.bf16.mxu0 0
    %435 = vmatpush1.bf16.msra.mxu0 %v429
    %436 = vmatprep.subr.bf16.mxu0 0
    %437 = vmatpush1.bf16.msra.mxu0 0
    %438 = vmatprep.subr.bf16.mxu0 0
    %439 = vmatpush1.bf16.msra.mxu0 0
    %440 = vmatprep.subr.bf16.mxu0 0
    %441 = vmatpush1.bf16.msra.mxu0 0
    %442 = vmatprep.subr.bf16.mxu0 0
    %443 = vmatpush1.bf16.msra.mxu0 0
    %444 = vmatprep.subr.bf16.mxu0 0
    %445 = vmatpush1.bf16.msra.mxu0 0
    %446 = vmatprep.subr.bf16.mxu0 0
    %447 = vmatpush1.bf16.msra.mxu0 0
    %448 = vmatprep.subr.bf16.mxu0 0
    %449 = vmatpush1.bf16.msra.mxu0 0
    %450 = vmatprep.subr.bf16.mxu0 0
    %451 = vmatpush1.bf16.msra.mxu0 0
    %452 = vmatprep.subr.bf16.mxu0 0
    %453 = vmatpush1.bf16.msra.mxu0 0
    %454 = vmatprep.subr.bf16.mxu0 0
    %455 = vmatpush1.bf16.msra.mxu0 0
    %456 = vmatprep.subr.bf16.mxu0 0
    %457 = vmatpush1.bf16.msra.mxu0 0
    %458 = vmatprep.subr.bf16.mxu0 0
    %459 = vmatpush1.bf16.msra.mxu0 0
    %460 = vmatprep.subr.bf16.mxu0 0
    %461 = vmatpush1.bf16.msra.mxu0 0
    %462 = vmatprep.subr.bf16.mxu0 0
    %463 = vmatpush1.bf16.msra.mxu0 0
    %464 = vmatprep.mubr.bf16.mxu0 0
    %465 = vmatmul.mubr.bf16.gmra.mrb[0].mxu0 %v326
    %v466 = vpop.f32.mrb[0].mxu0
    %v467 = vadd.f32 0.0, %v466
    %v468 = vpop.f32.mrb[0].mxu0
    %v469 = vpop.f32.mrb[0].mxu0
    %v470 = vpop.f32.mrb[0].mxu0
    %471 = vdwg.mxu0
    %v476 = vunpack.c.l.b16 %v293
    %v477 = vunpack.c.l.b16 %v294
    %v478 = vunpack.c.l.b16 %v295
    %v479 = vunpack.c.l.b16 %v296
    %v480 = vpack.c.b16 %v477, %v476
    %v481 = vpack.c.b16 %v479, %v478
    %484 = vmatprep.subr.bf16.mxu0 0
    %485 = vmatpush1.bf16.msra.mxu0 %v480
    %486 = vmatprep.subr.bf16.mxu0 0
    %487 = vmatpush1.bf16.msra.mxu0 %v481
    %488 = vmatprep.subr.bf16.mxu0 0
    %489 = vmatpush1.bf16.msra.mxu0 0
    %490 = vmatprep.subr.bf16.mxu0 0
    %491 = vmatpush1.bf16.msra.mxu0 0
    %492 = vmatprep.subr.bf16.mxu0 0
    %493 = vmatpush1.bf16.msra.mxu0 0
    %494 = vmatprep.subr.bf16.mxu0 0
    %495 = vmatpush1.bf16.msra.mxu0 0
    %496 = vmatprep.subr.bf16.mxu0 0
    %497 = vmatpush1.bf16.msra.mxu0 0
    %498 = vmatprep.subr.bf16.mxu0 0
    %499 = vmatpush1.bf16.msra.mxu0 0
    %500 = vmatprep.subr.bf16.mxu0 0
    %501 = vmatpush1.bf16.msra.mxu0 0
    %502 = vmatprep.subr.bf16.mxu0 0
    %503 = vmatpush1.bf16.msra.mxu0 0
    %504 = vmatprep.subr.bf16.mxu0 0
    %505 = vmatpush1.bf16.msra.mxu0 0
    %506 = vmatprep.subr.bf16.mxu0 0
    %507 = vmatpush1.bf16.msra.mxu0 0
    %508 = vmatprep.subr.bf16.mxu0 0
    %509 = vmatpush1.bf16.msra.mxu0 0
    %510 = vmatprep.subr.bf16.mxu0 0
    %511 = vmatpush1.bf16.msra.mxu0 0
    %512 = vmatprep.subr.bf16.mxu0 0
    %513 = vmatpush1.bf16.msra.mxu0 0
    %514 = vmatprep.subr.bf16.mxu0 0
    %515 = vmatpush1.bf16.msra.mxu0 0
    %516 = vmatprep.mubr.bf16.mxu0 0
    %517 = vmatmul.mubr.bf16.gmra.mrb[0].mxu0 %v326
    %v518 = vpop.f32.mrb[0].mxu0
    %v519 = vadd.f32 0.0, %v518
    %v520 = vpop.f32.mrb[0].mxu0
    %v521 = vpop.f32.mrb[0].mxu0
    %v522 = vpop.f32.mrb[0].mxu0
    %523 = vdwg.mxu0
    %v528 = vunpack.c.l.b16 %v297
    %v529 = vunpack.c.l.b16 %v298
    %v530 = vunpack.c.l.b16 %v299
    %v531 = vunpack.c.l.b16 %v300
    %v532 = vpack.c.b16 %v529, %v528
    %v533 = vpack.c.b16 %v531, %v530
    %v537 = vsel %vm225, %v280, 0
    %539 = vmatprep.subr.bf16.mxu0 0
    %540 = vmatpush1.bf16.msra.mxu0 %v532
    %541 = vmatprep.subr.bf16.mxu0 0
    %542 = vmatpush1.bf16.msra.mxu0 %v533
    %543 = vmatprep.subr.bf16.mxu0 0
    %544 = vmatpush1.bf16.msra.mxu0 0
    %545 = vmatprep.subr.bf16.mxu0 0
    %546 = vmatpush1.bf16.msra.mxu0 0
    %547 = vmatprep.subr.bf16.mxu0 0
    %548 = vmatpush1.bf16.msra.mxu0 0
    %549 = vmatprep.subr.bf16.mxu0 0
    %550 = vmatpush1.bf16.msra.mxu0 0
    %551 = vmatprep.subr.bf16.mxu0 0
    %552 = vmatpush1.bf16.msra.mxu0 0
    %553 = vmatprep.subr.bf16.mxu0 0
    %554 = vmatpush1.bf16.msra.mxu0 0
    %555 = vmatprep.subr.bf16.mxu0 0
    %556 = vmatpush1.bf16.msra.mxu0 0
    %557 = vmatprep.subr.bf16.mxu0 0
    %558 = vmatpush1.bf16.msra.mxu0 0
    %559 = vmatprep.subr.bf16.mxu0 0
    %560 = vmatpush1.bf16.msra.mxu0 0
    %561 = vmatprep.subr.bf16.mxu0 0
    %562 = vmatpush1.bf16.msra.mxu0 0
    %563 = vmatprep.subr.bf16.mxu0 0
    %564 = vmatpush1.bf16.msra.mxu0 0
    %565 = vmatprep.subr.bf16.mxu0 0
    %566 = vmatpush1.bf16.msra.mxu0 0
    %567 = vmatprep.subr.bf16.mxu0 0
    %568 = vmatpush1.bf16.msra.mxu0 0
    %569 = vmatprep.subr.bf16.mxu0 0
    %570 = vmatpush1.bf16.msra.mxu0 0
    %571 = vmatprep.mubr.bf16.mxu0 0
    %572 = vmatmul.mubr.bf16.gmra.mrb[0].mxu0 %v537
    %v573 = vpop.f32.mrb[0].mxu0
    %v574 = vadd.f32 0.0, %v573
    %v575 = vpop.f32.mrb[0].mxu0
    %v576 = vpop.f32.mrb[0].mxu0
    %v577 = vpop.f32.mrb[0].mxu0
    %578 = vdwg.mxu0
    %v583 = vunpack.c.l.b16 %v301
    %v584 = vunpack.c.l.b16 %v302
    %v585 = vunpack.c.l.b16 %v303
    %v586 = vunpack.c.l.b16 %v304
    %v587 = vpack.c.b16 %v584, %v583
    %v588 = vpack.c.b16 %v586, %v585
    %591 = vmatprep.subr.bf16.mxu0 0
    %592 = vmatpush1.bf16.msra.mxu0 %v587
    %593 = vmatprep.subr.bf16.mxu0 0
    %594 = vmatpush1.bf16.msra.mxu0 %v588
    %595 = vmatprep.subr.bf16.mxu0 0
    %596 = vmatpush1.bf16.msra.mxu0 0
    %597 = vmatprep.subr.bf16.mxu0 0
    %598 = vmatpush1.bf16.msra.mxu0 0
    %599 = vmatprep.subr.bf16.mxu0 0
    %600 = vmatpush1.bf16.msra.mxu0 0
    %601 = vmatprep.subr.bf16.mxu0 0
    %602 = vmatpush1.bf16.msra.mxu0 0
    %603 = vmatprep.subr.bf16.mxu0 0
    %604 = vmatpush1.bf16.msra.mxu0 0
    %605 = vmatprep.subr.bf16.mxu0 0
    %606 = vmatpush1.bf16.msra.mxu0 0
    %607 = vmatprep.subr.bf16.mxu0 0
    %608 = vmatpush1.bf16.msra.mxu0 0
    %609 = vmatprep.subr.bf16.mxu0 0
    %610 = vmatpush1.bf16.msra.mxu0 0
    %611 = vmatprep.subr.bf16.mxu0 0
    %612 = vmatpush1.bf16.msra.mxu0 0
    %613 = vmatprep.subr.bf16.mxu0 0
    %614 = vmatpush1.bf16.msra.mxu0 0
    %615 = vmatprep.subr.bf16.mxu0 0
    %616 = vmatpush1.bf16.msra.mxu0 0
    %617 = vmatprep.subr.bf16.mxu0 0
    %618 = vmatpush1.bf16.msra.mxu0 0
    %619 = vmatprep.subr.bf16.mxu0 0
    %620 = vmatpush1.bf16.msra.mxu0 0
    %621 = vmatprep.subr.bf16.mxu0 0
    %622 = vmatpush1.bf16.msra.mxu0 0
    %623 = vmatprep.mubr.bf16.mxu0 0
    %624 = vmatmul.mubr.bf16.gmra.mrb[0].mxu0 %v537
    %v625 = vpop.f32.mrb[0].mxu0
    %v626 = vadd.f32 0.0, %v625
    %v627 = vpop.f32.mrb[0].mxu0
    %v628 = vpop.f32.mrb[0].mxu0
    %v629 = vpop.f32.mrb[0].mxu0
    %630 = vdwg.mxu0
    %v635 = vunpack.c.l.b16 %v305
    %v636 = vunpack.c.l.b16 %v306
    %v637 = vunpack.c.l.b16 %v307
    %v638 = vunpack.c.l.b16 %v308
    %v639 = vpack.c.b16 %v636, %v635
    %v640 = vpack.c.b16 %v638, %v637
    %643 = vmatprep.subr.bf16.mxu0 0
    %644 = vmatpush1.bf16.msra.mxu0 %v639
    %645 = vmatprep.subr.bf16.mxu0 0
    %646 = vmatpush1.bf16.msra.mxu0 %v640
    %647 = vmatprep.subr.bf16.mxu0 0
    %648 = vmatpush1.bf16.msra.mxu0 0
    %649 = vmatprep.subr.bf16.mxu0 0
    %650 = vmatpush1.bf16.msra.mxu0 0
    %651 = vmatprep.subr.bf16.mxu0 0
    %652 = vmatpush1.bf16.msra.mxu0 0
    %653 = vmatprep.subr.bf16.mxu0 0
    %654 = vmatpush1.bf16.msra.mxu0 0
    %655 = vmatprep.subr.bf16.mxu0 0
    %656 = vmatpush1.bf16.msra.mxu0 0
    %657 = vmatprep.subr.bf16.mxu0 0
    %658 = vmatpush1.bf16.msra.mxu0 0
    %659 = vmatprep.subr.bf16.mxu0 0
    %660 = vmatpush1.bf16.msra.mxu0 0
    %661 = vmatprep.subr.bf16.mxu0 0
    %662 = vmatpush1.bf16.msra.mxu0 0
    %663 = vmatprep.subr.bf16.mxu0 0
    %664 = vmatpush1.bf16.msra.mxu0 0
    %665 = vmatprep.subr.bf16.mxu0 0
    %666 = vmatpush1.bf16.msra.mxu0 0
    %667 = vmatprep.subr.bf16.mxu0 0
    %668 = vmatpush1.bf16.msra.mxu0 0
    %669 = vmatprep.subr.bf16.mxu0 0
    %670 = vmatpush1.bf16.msra.mxu0 0
    %671 = vmatprep.subr.bf16.mxu0 0
    %672 = vmatpush1.bf16.msra.mxu0 0
    %673 = vmatprep.subr.bf16.mxu0 0
    %674 = vmatpush1.bf16.msra.mxu0 0
    %675 = vmatprep.mubr.bf16.mxu0 0
    %676 = vmatmul.mubr.bf16.gmra.mrb[0].mxu0 %v537
    %v677 = vpop.f32.mrb[0].mxu0
    %v678 = vadd.f32 0.0, %v677
    %v679 = vpop.f32.mrb[0].mxu0
    %v680 = vpop.f32.mrb[0].mxu0
    %v681 = vpop.f32.mrb[0].mxu0
    %682 = vdwg.mxu0
    %v687 = vunpack.c.l.b16 %v309
    %v688 = vunpack.c.l.b16 %v310
    %v689 = vunpack.c.l.b16 %v311
    %v690 = vunpack.c.l.b16 %v312
    %v691 = vpack.c.b16 %v688, %v687
    %v692 = vpack.c.b16 %v690, %v689
    %695 = vmatprep.subr.bf16.mxu0 0
    %696 = vmatpush1.bf16.msra.mxu0 %v691
    %697 = vmatprep.subr.bf16.mxu0 0
    %698 = vmatpush1.bf16.msra.mxu0 %v692
    %699 = vmatprep.subr.bf16.mxu0 0
    %700 = vmatpush1.bf16.msra.mxu0 0
    %701 = vmatprep.subr.bf16.mxu0 0
    %702 = vmatpush1.bf16.msra.mxu0 0
    %703 = vmatprep.subr.bf16.mxu0 0
    %704 = vmatpush1.bf16.msra.mxu0 0
    %705 = vmatprep.subr.bf16.mxu0 0
    %706 = vmatpush1.bf16.msra.mxu0 0
    %707 = vmatprep.subr.bf16.mxu0 0
    %708 = vmatpush1.bf16.msra.mxu0 0
    %709 = vmatprep.subr.bf16.mxu0 0
    %710 = vmatpush1.bf16.msra.mxu0 0
    %711 = vmatprep.subr.bf16.mxu0 0
    %712 = vmatpush1.bf16.msra.mxu0 0
    %713 = vmatprep.subr.bf16.mxu0 0
    %714 = vmatpush1.bf16.msra.mxu0 0
    %715 = vmatprep.subr.bf16.mxu0 0
    %716 = vmatpush1.bf16.msra.mxu0 0
    %717 = vmatprep.subr.bf16.mxu0 0
    %718 = vmatpush1.bf16.msra.mxu0 0
    %719 = vmatprep.subr.bf16.mxu0 0
    %720 = vmatpush1.bf16.msra.mxu0 0
    %721 = vmatprep.subr.bf16.mxu0 0
    %722 = vmatpush1.bf16.msra.mxu0 0
    %723 = vmatprep.subr.bf16.mxu0 0
    %724 = vmatpush1.bf16.msra.mxu0 0
    %725 = vmatprep.subr.bf16.mxu0 0
    %726 = vmatpush1.bf16.msra.mxu0 0
    %727 = vmatprep.mubr.bf16.mxu0 0
    %728 = vmatmul.mubr.bf16.gmra.mrb[0].mxu0 %v537
    %v729 = vpop.f32.mrb[0].mxu0
    %v730 = vadd.f32 0.0, %v729
    %v731 = vpop.f32.mrb[0].mxu0
    %v732 = vpop.f32.mrb[0].mxu0
    %v733 = vpop.f32.mrb[0].mxu0
    %734 = vdwg.mxu0
    %v735 = vld [vmem:[%s6] sm:$0xf]
    %v736 = vld [vmem:[%s6 + $0x4] sm:$0xf]
    %v737 = vld [vmem:[%s6 + $0x8] sm:$0xf]
    %v738 = vld [vmem:[%s6 + $0xc] sm:$0xf]
    %v739 = vld [vmem:[%s6 + $0x10] sm:$0xf]
    %v740 = vld [vmem:[%s6 + $0x14] sm:$0xf]
    %v741 = vld [vmem:[%s6 + $0x18] sm:$0xf]
    %v742 = vld [vmem:[%s6 + $0x1c] sm:$0xf]
    %v743 = vld [vmem:[%s6 + $0x20] sm:$0xf]
    %v744 = vld [vmem:[%s6 + $0x24] sm:$0xf]
    %v745 = vld [vmem:[%s6 + $0x28] sm:$0xf]
    %v746 = vld [vmem:[%s6 + $0x2c] sm:$0xf]
    %v747 = vld [vmem:[%s6 + $0x30] sm:$0xf]
    %v748 = vld [vmem:[%s6 + $0x34] sm:$0xf]
    %v749 = vld [vmem:[%s6 + $0x38] sm:$0xf]
    %v750 = vld [vmem:[%s6 + $0x3c] sm:$0xf]
    %v751 = vld [vmem:[%s6 + $0x40] sm:$0xf]
    %v752 = vld [vmem:[%s6 + $0x44] sm:$0xf]
    %v753 = vld [vmem:[%s6 + $0x48] sm:$0xf]
    %v754 = vld [vmem:[%s6 + $0x4c] sm:$0xf]
    %v755 = vld [vmem:[%s6 + $0x50] sm:$0xf]
    %v756 = vld [vmem:[%s6 + $0x54] sm:$0xf]
    %v757 = vld [vmem:[%s6 + $0x58] sm:$0xf]
    %v758 = vld [vmem:[%s6 + $0x5c] sm:$0xf]
    %v759 = vld [vmem:[%s6 + $0x60] sm:$0xf]
    %v760 = vld [vmem:[%s6 + $0x64] sm:$0xf]
    %v761 = vld [vmem:[%s6 + $0x68] sm:$0xf]
    %v762 = vld [vmem:[%s6 + $0x6c] sm:$0xf]
    %v763 = vld [vmem:[%s6 + $0x70] sm:$0xf]
    %v764 = vld [vmem:[%s6 + $0x74] sm:$0xf]
    %v765 = vld [vmem:[%s6 + $0x78] sm:$0xf]
    %v766 = vld [vmem:[%s6 + $0x7c] sm:$0xf]
    %v771 = vunpack.c.l.b16 %v735
    %v772 = vunpack.c.l.b16 %v736
    %v773 = vunpack.c.l.b16 %v737
    %v774 = vunpack.c.l.b16 %v738
    %v775 = vpack.c.b16 %v772, %v771
    %v776 = vpack.c.b16 %v774, %v773
    %779 = vmatprep.subr.bf16.mxu0 0
    %780 = vmatpush1.bf16.msra.mxu0 %v775
    %781 = vmatprep.subr.bf16.mxu0 0
    %782 = vmatpush1.bf16.msra.mxu0 %v776
    %783 = vmatprep.subr.bf16.mxu0 0
    %784 = vmatpush1.bf16.msra.mxu0 0
    %785 = vmatprep.subr.bf16.mxu0 0
    %786 = vmatpush1.bf16.msra.mxu0 0
    %787 = vmatprep.subr.bf16.mxu0 0
    %788 = vmatpush1.bf16.msra.mxu0 0
    %789 = vmatprep.subr.bf16.mxu0 0
    %790 = vmatpush1.bf16.msra.mxu0 0
    %791 = vmatprep.subr.bf16.mxu0 0
    %792 = vmatpush1.bf16.msra.mxu0 0
    %793 = vmatprep.subr.bf16.mxu0 0
    %794 = vmatpush1.bf16.msra.mxu0 0
    %795 = vmatprep.subr.bf16.mxu0 0
    %796 = vmatpush1.bf16.msra.mxu0 0
    %797 = vmatprep.subr.bf16.mxu0 0
    %798 = vmatpush1.bf16.msra.mxu0 0
    %799 = vmatprep.subr.bf16.mxu0 0
    %800 = vmatpush1.bf16.msra.mxu0 0
    %801 = vmatprep.subr.bf16.mxu0 0
    %802 = vmatpush1.bf16.msra.mxu0 0
    %803 = vmatprep.subr.bf16.mxu0 0
    %804 = vmatpush1.bf16.msra.mxu0 0
    %805 = vmatprep.subr.bf16.mxu0 0
    %806 = vmatpush1.bf16.msra.mxu0 0
    %807 = vmatprep.subr.bf16.mxu0 0
    %808 = vmatpush1.bf16.msra.mxu0 0
    %809 = vmatprep.subr.bf16.mxu0 0
    %810 = vmatpush1.bf16.msra.mxu0 0
    %811 = vmatprep.mubr.bf16.mxu0 0
    %812 = vmatmul.mubr.bf16.gmra.mrb[0].mxu0 %v326
    %v813 = vpop.f32.mrb[0].mxu0
    %v814 = vadd.f32 0.0, %v813
    %v815 = vpop.f32.mrb[0].mxu0
    %v816 = vpop.f32.mrb[0].mxu0
    %v817 = vpop.f32.mrb[0].mxu0
    %818 = vdwg.mxu0
    %v823 = vunpack.c.l.b16 %v739
    %v824 = vunpack.c.l.b16 %v740
    %v825 = vunpack.c.l.b16 %v741
    %v826 = vunpack.c.l.b16 %v742
    %v827 = vpack.c.b16 %v824, %v823
    %v828 = vpack.c.b16 %v826, %v825
    %831 = vmatprep.subr.bf16.mxu0 0
    %832 = vmatpush1.bf16.msra.mxu0 %v827
    %833 = vmatprep.subr.bf16.mxu0 0
    %834 = vmatpush1.bf16.msra.mxu0 %v828
    %835 = vmatprep.subr.bf16.mxu0 0
    %836 = vmatpush1.bf16.msra.mxu0 0
    %837 = vmatprep.subr.bf16.mxu0 0
    %838 = vmatpush1.bf16.msra.mxu0 0
    %839 = vmatprep.subr.bf16.mxu0 0
    %840 = vmatpush1.bf16.msra.mxu0 0
    %841 = vmatprep.subr.bf16.mxu0 0
    %842 = vmatpush1.bf16.msra.mxu0 0
    %843 = vmatprep.subr.bf16.mxu0 0
    %844 = vmatpush1.bf16.msra.mxu0 0
    %845 = vmatprep.subr.bf16.mxu0 0
    %846 = vmatpush1.bf16.msra.mxu0 0
    %847 = vmatprep.subr.bf16.mxu0 0
    %848 = vmatpush1.bf16.msra.mxu0 0
    %849 = vmatprep.subr.bf16.mxu0 0
    %850 = vmatpush1.bf16.msra.mxu0 0
    %851 = vmatprep.subr.bf16.mxu0 0
    %852 = vmatpush1.bf16.msra.mxu0 0
    %853 = vmatprep.subr.bf16.mxu0 0
    %854 = vmatpush1.bf16.msra.mxu0 0
    %855 = vmatprep.subr.bf16.mxu0 0
    %856 = vmatpush1.bf16.msra.mxu0 0
    %857 = vmatprep.subr.bf16.mxu0 0
    %858 = vmatpush1.bf16.msra.mxu0 0
    %859 = vmatprep.subr.bf16.mxu0 0
    %860 = vmatpush1.bf16.msra.mxu0 0
    %861 = vmatprep.subr.bf16.mxu0 0
    %862 = vmatpush1.bf16.msra.mxu0 0
    %863 = vmatprep.mubr.bf16.mxu0 0
    %864 = vmatmul.mubr.bf16.gmra.mrb[0].mxu0 %v326
    %v865 = vpop.f32.mrb[0].mxu0
    %v866 = vadd.f32 0.0, %v865
    %v867 = vpop.f32.mrb[0].mxu0
    %v868 = vpop.f32.mrb[0].mxu0
    %v869 = vpop.f32.mrb[0].mxu0
    %870 = vdwg.mxu0
    %v875 = vunpack.c.l.b16 %v743
    %v876 = vunpack.c.l.b16 %v744
    %v877 = vunpack.c.l.b16 %v745
    %v878 = vunpack.c.l.b16 %v746
    %v879 = vpack.c.b16 %v876, %v875
    %v880 = vpack.c.b16 %v878, %v877
    %883 = vmatprep.subr.bf16.mxu0 0
    %884 = vmatpush1.bf16.msra.mxu0 %v879
    %885 = vmatprep.subr.bf16.mxu0 0
    %886 = vmatpush1.bf16.msra.mxu0 %v880
    %887 = vmatprep.subr.bf16.mxu0 0
    %888 = vmatpush1.bf16.msra.mxu0 0
    %889 = vmatprep.subr.bf16.mxu0 0
    %890 = vmatpush1.bf16.msra.mxu0 0
    %891 = vmatprep.subr.bf16.mxu0 0
    %892 = vmatpush1.bf16.msra.mxu0 0
    %893 = vmatprep.subr.bf16.mxu0 0
    %894 = vmatpush1.bf16.msra.mxu0 0
    %895 = vmatprep.subr.bf16.mxu0 0
    %896 = vmatpush1.bf16.msra.mxu0 0
    %897 = vmatprep.subr.bf16.mxu0 0
    %898 = vmatpush1.bf16.msra.mxu0 0
    %899 = vmatprep.subr.bf16.mxu0 0
    %900 = vmatpush1.bf16.msra.mxu0 0
    %901 = vmatprep.subr.bf16.mxu0 0
    %902 = vmatpush1.bf16.msra.mxu0 0
    %903 = vmatprep.subr.bf16.mxu0 0
    %904 = vmatpush1.bf16.msra.mxu0 0
    %905 = vmatprep.subr.bf16.mxu0 0
    %906 = vmatpush1.bf16.msra.mxu0 0
    %907 = vmatprep.subr.bf16.mxu0 0
    %908 = vmatpush1.bf16.msra.mxu0 0
    %909 = vmatprep.subr.bf16.mxu0 0
    %910 = vmatpush1.bf16.msra.mxu0 0
    %911 = vmatprep.subr.bf16.mxu0 0
    %912 = vmatpush1.bf16.msra.mxu0 0
    %913 = vmatprep.subr.bf16.mxu0 0
    %914 = vmatpush1.bf16.msra.mxu0 0
    %915 = vmatprep.mubr.bf16.mxu0 0
    %916 = vmatmul.mubr.bf16.gmra.mrb[0].mxu0 %v326
    %v917 = vpop.f32.mrb[0].mxu0
    %v918 = vadd.f32 0.0, %v917
    %v919 = vpop.f32.mrb[0].mxu0
    %v920 = vpop.f32.mrb[0].mxu0
    %v921 = vpop.f32.mrb[0].mxu0
    %922 = vdwg.mxu0
    %v927 = vunpack.c.l.b16 %v747
    %v928 = vunpack.c.l.b16 %v748
    %v929 = vunpack.c.l.b16 %v749
    %v930 = vunpack.c.l.b16 %v750
    %v931 = vpack.c.b16 %v928, %v927
    %v932 = vpack.c.b16 %v930, %v929
    %935 = vmatprep.subr.bf16.mxu0 0
    %936 = vmatpush1.bf16.msra.mxu0 %v931
    %937 = vmatprep.subr.bf16.mxu0 0
    %938 = vmatpush1.bf16.msra.mxu0 %v932
    %939 = vmatprep.subr.bf16.mxu0 0
    %940 = vmatpush1.bf16.msra.mxu0 0
    %941 = vmatprep.subr.bf16.mxu0 0
    %942 = vmatpush1.bf16.msra.mxu0 0
    %943 = vmatprep.subr.bf16.mxu0 0
    %944 = vmatpush1.bf16.msra.mxu0 0
    %945 = vmatprep.subr.bf16.mxu0 0
    %946 = vmatpush1.bf16.msra.mxu0 0
    %947 = vmatprep.subr.bf16.mxu0 0
    %948 = vmatpush1.bf16.msra.mxu0 0
    %949 = vmatprep.subr.bf16.mxu0 0
    %950 = vmatpush1.bf16.msra.mxu0 0
    %951 = vmatprep.subr.bf16.mxu0 0
    %952 = vmatpush1.bf16.msra.mxu0 0
    %953 = vmatprep.subr.bf16.mxu0 0
    %954 = vmatpush1.bf16.msra.mxu0 0
    %955 = vmatprep.subr.bf16.mxu0 0
    %956 = vmatpush1.bf16.msra.mxu0 0
    %957 = vmatprep.subr.bf16.mxu0 0
    %958 = vmatpush1.bf16.msra.mxu0 0
    %959 = vmatprep.subr.bf16.mxu0 0
    %960 = vmatpush1.bf16.msra.mxu0 0
    %961 = vmatprep.subr.bf16.mxu0 0
    %962 = vmatpush1.bf16.msra.mxu0 0
    %963 = vmatprep.subr.bf16.mxu0 0
    %964 = vmatpush1.bf16.msra.mxu0 0
    %965 = vmatprep.subr.bf16.mxu0 0
    %966 = vmatpush1.bf16.msra.mxu0 0
    %967 = vmatprep.mubr.bf16.mxu0 0
    %968 = vmatmul.mubr.bf16.gmra.mrb[0].mxu0 %v326
    %v969 = vpop.f32.mrb[0].mxu0
    %v970 = vadd.f32 0.0, %v969
    %v971 = vpop.f32.mrb[0].mxu0
    %v972 = vpop.f32.mrb[0].mxu0
    %v973 = vpop.f32.mrb[0].mxu0
    %974 = vdwg.mxu0
    %v979 = vunpack.c.l.b16 %v751
    %v980 = vunpack.c.l.b16 %v752
    %v981 = vunpack.c.l.b16 %v753
    %v982 = vunpack.c.l.b16 %v754
    %v983 = vpack.c.b16 %v980, %v979
    %v984 = vpack.c.b16 %v982, %v981
    %987 = vmatprep.subr.bf16.mxu0 0
    %988 = vmatpush1.bf16.msra.mxu0 %v983
    %989 = vmatprep.subr.bf16.mxu0 0
    %990 = vmatpush1.bf16.msra.mxu0 %v984
    %991 = vmatprep.subr.bf16.mxu0 0
    %992 = vmatpush1.bf16.msra.mxu0 0
    %993 = vmatprep.subr.bf16.mxu0 0
    %994 = vmatpush1.bf16.msra.mxu0 0
    %995 = vmatprep.subr.bf16.mxu0 0
    %996 = vmatpush1.bf16.msra.mxu0 0
    %997 = vmatprep.subr.bf16.mxu0 0
    %998 = vmatpush1.bf16.msra.mxu0 0
    %999 = vmatprep.subr.bf16.mxu0 0
    %1000 = vmatpush1.bf16.msra.mxu0 0
    %1001 = vmatprep.subr.bf16.mxu0 0
    %1002 = vmatpush1.bf16.msra.mxu0 0
    %1003 = vmatprep.subr.bf16.mxu0 0
    %1004 = vmatpush1.bf16.msra.mxu0 0
    %1005 = vmatprep.subr.bf16.mxu0 0
    %1006 = vmatpush1.bf16.msra.mxu0 0
    %1007 = vmatprep.subr.bf16.mxu0 0
    %1008 = vmatpush1.bf16.msra.mxu0 0
    %1009 = vmatprep.subr.bf16.mxu0 0
    %1010 = vmatpush1.bf16.msra.mxu0 0
    %1011 = vmatprep.subr.bf16.mxu0 0
    %1012 = vmatpush1.bf16.msra.mxu0 0
    %1013 = vmatprep.subr.bf16.mxu0 0
    %1014 = vmatpush1.bf16.msra.mxu0 0
    %1015 = vmatprep.subr.bf16.mxu0 0
    %1016 = vmatpush1.bf16.msra.mxu0 0
    %1017 = vmatprep.subr.bf16.mxu0 0
    %1018 = vmatpush1.bf16.msra.mxu0 0
    %1019 = vmatprep.mubr.bf16.mxu0 0
    %1020 = vmatmul.mubr.bf16.gmra.mrb[0].mxu0 %v537
    %v1021 = vpop.f32.mrb[0].mxu0
    %v1022 = vadd.f32 0.0, %v1021
    %v1023 = vpop.f32.mrb[0].mxu0
    %v1024 = vpop.f32.mrb[0].mxu0
    %v1025 = vpop.f32.mrb[0].mxu0
    %1026 = vdwg.mxu0
    %v1031 = vunpack.c.l.b16 %v755
    %v1032 = vunpack.c.l.b16 %v756
    %v1033 = vunpack.c.l.b16 %v757
    %v1034 = vunpack.c.l.b16 %v758
    %v1035 = vpack.c.b16 %v1032, %v1031
    %v1036 = vpack.c.b16 %v1034, %v1033
    %1039 = vmatprep.subr.bf16.mxu0 0
    %1040 = vmatpush1.bf16.msra.mxu0 %v1035
    %1041 = vmatprep.subr.bf16.mxu0 0
    %1042 = vmatpush1.bf16.msra.mxu0 %v1036
    %1043 = vmatprep.subr.bf16.mxu0 0
    %1044 = vmatpush1.bf16.msra.mxu0 0
    %1045 = vmatprep.subr.bf16.mxu0 0
    %1046 = vmatpush1.bf16.msra.mxu0 0
    %1047 = vmatprep.subr.bf16.mxu0 0
    %1048 = vmatpush1.bf16.msra.mxu0 0
    %1049 = vmatprep.subr.bf16.mxu0 0
    %1050 = vmatpush1.bf16.msra.mxu0 0
    %1051 = vmatprep.subr.bf16.mxu0 0
    %1052 = vmatpush1.bf16.msra.mxu0 0
    %1053 = vmatprep.subr.bf16.mxu0 0
    %1054 = vmatpush1.bf16.msra.mxu0 0
    %1055 = vmatprep.subr.bf16.mxu0 0
    %1056 = vmatpush1.bf16.msra.mxu0 0
    %1057 = vmatprep.subr.bf16.mxu0 0
    %1058 = vmatpush1.bf16.msra.mxu0 0
    %1059 = vmatprep.subr.bf16.mxu0 0
    %1060 = vmatpush1.bf16.msra.mxu0 0
    %1061 = vmatprep.subr.bf16.mxu0 0
    %1062 = vmatpush1.bf16.msra.mxu0 0
    %1063 = vmatprep.subr.bf16.mxu0 0
    %1064 = vmatpush1.bf16.msra.mxu0 0
    %1065 = vmatprep.subr.bf16.mxu0 0
    %1066 = vmatpush1.bf16.msra.mxu0 0
    %1067 = vmatprep.subr.bf16.mxu0 0
    %1068 = vmatpush1.bf16.msra.mxu0 0
    %1069 = vmatprep.subr.bf16.mxu0 0
    %1070 = vmatpush1.bf16.msra.mxu0 0
    %1071 = vmatprep.mubr.bf16.mxu0 0
    %1072 = vmatmul.mubr.bf16.gmra.mrb[0].mxu0 %v537
    %v1073 = vpop.f32.mrb[0].mxu0
    %v1074 = vadd.f32 0.0, %v1073
    %v1075 = vpop.f32.mrb[0].mxu0
    %v1076 = vpop.f32.mrb[0].mxu0
    %v1077 = vpop.f32.mrb[0].mxu0
    %1078 = vdwg.mxu0
    %v1083 = vunpack.c.l.b16 %v759
    %v1084 = vunpack.c.l.b16 %v760
    %v1085 = vunpack.c.l.b16 %v761
    %v1086 = vunpack.c.l.b16 %v762
    %v1087 = vpack.c.b16 %v1084, %v1083
    %v1088 = vpack.c.b16 %v1086, %v1085
    %1091 = vmatprep.subr.bf16.mxu0 0
    %1092 = vmatpush1.bf16.msra.mxu0 %v1087
    %1093 = vmatprep.subr.bf16.mxu0 0
    %1094 = vmatpush1.bf16.msra.mxu0 %v1088
    %1095 = vmatprep.subr.bf16.mxu0 0
    %1096 = vmatpush1.bf16.msra.mxu0 0
    %1097 = vmatprep.subr.bf16.mxu0 0
    %1098 = vmatpush1.bf16.msra.mxu0 0
    %1099 = vmatprep.subr.bf16.mxu0 0
    %1100 = vmatpush1.bf16.msra.mxu0 0
    %1101 = vmatprep.subr.bf16.mxu0 0
    %1102 = vmatpush1.bf16.msra.mxu0 0
    %1103 = vmatprep.subr.bf16.mxu0 0
    %1104 = vmatpush1.bf16.msra.mxu0 0
    %1105 = vmatprep.subr.bf16.mxu0 0
    %1106 = vmatpush1.bf16.msra.mxu0 0
    %1107 = vmatprep.subr.bf16.mxu0 0
    %1108 = vmatpush1.bf16.msra.mxu0 0
    %1109 = vmatprep.subr.bf16.mxu0 0
    %1110 = vmatpush1.bf16.msra.mxu0 0
    %1111 = vmatprep.subr.bf16.mxu0 0
    %1112 = vmatpush1.bf16.msra.mxu0 0
    %1113 = vmatprep.subr.bf16.mxu0 0
    %1114 = vmatpush1.bf16.msra.mxu0 0
    %1115 = vmatprep.subr.bf16.mxu0 0
    %1116 = vmatpush1.bf16.msra.mxu0 0
    %1117 = vmatprep.subr.bf16.mxu0 0
    %1118 = vmatpush1.bf16.msra.mxu0 0
    %1119 = vmatprep.subr.bf16.mxu0 0
    %1120 = vmatpush1.bf16.msra.mxu0 0
    %1121 = vmatprep.subr.bf16.mxu0 0
    %1122 = vmatpush1.bf16.msra.mxu0 0
    %1123 = vmatprep.mubr.bf16.mxu0 0
    %1124 = vmatmul.mubr.bf16.gmra.mrb[0].mxu0 %v537
    %v1125 = vpop.f32.mrb[0].mxu0
    %v1126 = vadd.f32 0.0, %v1125
    %v1127 = vpop.f32.mrb[0].mxu0
    %v1128 = vpop.f32.mrb[0].mxu0
    %v1129 = vpop.f32.mrb[0].mxu0
    %1130 = vdwg.mxu0
    %v1135 = vunpack.c.l.b16 %v763
    %v1136 = vunpack.c.l.b16 %v764
    %v1137 = vunpack.c.l.b16 %v765
    %v1138 = vunpack.c.l.b16 %v766
    %v1139 = vpack.c.b16 %v1136, %v1135
    %v1140 = vpack.c.b16 %v1138, %v1137
    %1143 = vmatprep.subr.bf16.mxu0 0
    %1144 = vmatpush1.bf16.msra.mxu0 %v1139
    %1145 = vmatprep.subr.bf16.mxu0 0
    %1146 = vmatpush1.bf16.msra.mxu0 %v1140
    %1147 = vmatprep.subr.bf16.mxu0 0
    %1148 = vmatpush1.bf16.msra.mxu0 0
    %1149 = vmatprep.subr.bf16.mxu0 0
    %1150 = vmatpush1.bf16.msra.mxu0 0
    %1151 = vmatprep.subr.bf16.mxu0 0
    %1152 = vmatpush1.bf16.msra.mxu0 0
    %1153 = vmatprep.subr.bf16.mxu0 0
    %1154 = vmatpush1.bf16.msra.mxu0 0
    %1155 = vmatprep.subr.bf16.mxu0 0
    %1156 = vmatpush1.bf16.msra.mxu0 0
    %1157 = vmatprep.subr.bf16.mxu0 0
    %1158 = vmatpush1.bf16.msra.mxu0 0
    %1159 = vmatprep.subr.bf16.mxu0 0
    %1160 = vmatpush1.bf16.msra.mxu0 0
    %1161 = vmatprep.subr.bf16.mxu0 0
    %1162 = vmatpush1.bf16.msra.mxu0 0
    %1163 = vmatprep.subr.bf16.mxu0 0
    %1164 = vmatpush1.bf16.msra.mxu0 0
    %1165 = vmatprep.subr.bf16.mxu0 0
    %1166 = vmatpush1.bf16.msra.mxu0 0
    %1167 = vmatprep.subr.bf16.mxu0 0
    %1168 = vmatpush1.bf16.msra.mxu0 0
    %1169 = vmatprep.subr.bf16.mxu0 0
    %1170 = vmatpush1.bf16.msra.mxu0 0
    %1171 = vmatprep.subr.bf16.mxu0 0
    %1172 = vmatpush1.bf16.msra.mxu0 0
    %1173 = vmatprep.subr.bf16.mxu0 0
    %1174 = vmatpush1.bf16.msra.mxu0 0
    %1175 = vmatprep.mubr.bf16.mxu0 0
    %1176 = vmatmul.mubr.bf16.gmra.mrb[0].mxu0 %v537
    %v1177 = vpop.f32.mrb[0].mxu0
    %v1178 = vadd.f32 0.0, %v1177
    %v1179 = vpop.f32.mrb[0].mxu0
    %v1180 = vpop.f32.mrb[0].mxu0
    %v1181 = vpop.f32.mrb[0].mxu0
    %1182 = vdwg.mxu0
    %v1183 = vld [vmem:[%s7] sm:$0xf]
    %v1184 = vld [vmem:[%s7 + $0x4] sm:$0xf]
    %v1185 = vld [vmem:[%s7 + $0x8] sm:$0xf]
    %v1186 = vld [vmem:[%s7 + $0xc] sm:$0xf]
    %v1187 = vld [vmem:[%s7 + $0x10] sm:$0xf]
    %v1188 = vld [vmem:[%s7 + $0x14] sm:$0xf]
    %v1189 = vld [vmem:[%s7 + $0x18] sm:$0xf]
    %v1190 = vld [vmem:[%s7 + $0x1c] sm:$0xf]
    %v1191 = vld [vmem:[%s7 + $0x20] sm:$0xf]
    %v1192 = vld [vmem:[%s7 + $0x24] sm:$0xf]
    %v1193 = vld [vmem:[%s7 + $0x28] sm:$0xf]
    %v1194 = vld [vmem:[%s7 + $0x2c] sm:$0xf]
    %v1195 = vld [vmem:[%s7 + $0x30] sm:$0xf]
    %v1196 = vld [vmem:[%s7 + $0x34] sm:$0xf]
    %v1197 = vld [vmem:[%s7 + $0x38] sm:$0xf]
    %v1198 = vld [vmem:[%s7 + $0x3c] sm:$0xf]
    %v1199 = vld [vmem:[%s7 + $0x40] sm:$0xf]
    %v1200 = vld [vmem:[%s7 + $0x44] sm:$0xf]
    %v1201 = vld [vmem:[%s7 + $0x48] sm:$0xf]
    %v1202 = vld [vmem:[%s7 + $0x4c] sm:$0xf]
    %v1203 = vld [vmem:[%s7 + $0x50] sm:$0xf]
    %v1204 = vld [vmem:[%s7 + $0x54] sm:$0xf]
    %v1205 = vld [vmem:[%s7 + $0x58] sm:$0xf]
    %v1206 = vld [vmem:[%s7 + $0x5c] sm:$0xf]
    %v1207 = vld [vmem:[%s7 + $0x60] sm:$0xf]
    %v1208 = vld [vmem:[%s7 + $0x64] sm:$0xf]
    %v1209 = vld [vmem:[%s7 + $0x68] sm:$0xf]
    %v1210 = vld [vmem:[%s7 + $0x6c] sm:$0xf]
    %v1211 = vld [vmem:[%s7 + $0x70] sm:$0xf]
    %v1212 = vld [vmem:[%s7 + $0x74] sm:$0xf]
    %v1213 = vld [vmem:[%s7 + $0x78] sm:$0xf]
    %v1214 = vld [vmem:[%s7 + $0x7c] sm:$0xf]
    %v1219 = vunpack.c.l.b16 %v1183
    %v1220 = vunpack.c.l.b16 %v1184
    %v1221 = vunpack.c.l.b16 %v1185
    %v1222 = vunpack.c.l.b16 %v1186
    %v1223 = vpack.c.b16 %v1220, %v1219
    %v1224 = vpack.c.b16 %v1222, %v1221
    %1227 = vmatprep.subr.bf16.mxu0 0
    %1228 = vmatpush1.bf16.msra.mxu0 %v1223
    %1229 = vmatprep.subr.bf16.mxu0 0
    %1230 = vmatpush1.bf16.msra.mxu0 %v1224
    %1231 = vmatprep.subr.bf16.mxu0 0
    %1232 = vmatpush1.bf16.msra.mxu0 0
    %1233 = vmatprep.subr.bf16.mxu0 0
    %1234 = vmatpush1.bf16.msra.mxu0 0
    %1235 = vmatprep.subr.bf16.mxu0 0
    %1236 = vmatpush1.bf16.msra.mxu0 0
    %1237 = vmatprep.subr.bf16.mxu0 0
    %1238 = vmatpush1.bf16.msra.mxu0 0
    %1239 = vmatprep.subr.bf16.mxu0 0
    %1240 = vmatpush1.bf16.msra.mxu0 0
    %1241 = vmatprep.subr.bf16.mxu0 0
    %1242 = vmatpush1.bf16.msra.mxu0 0
    %1243 = vmatprep.subr.bf16.mxu0 0
    %1244 = vmatpush1.bf16.msra.mxu0 0
    %1245 = vmatprep.subr.bf16.mxu0 0
    %1246 = vmatpush1.bf16.msra.mxu0 0
    %1247 = vmatprep.subr.bf16.mxu0 0
    %1248 = vmatpush1.bf16.msra.mxu0 0
    %1249 = vmatprep.subr.bf16.mxu0 0
    %1250 = vmatpush1.bf16.msra.mxu0 0
    %1251 = vmatprep.subr.bf16.mxu0 0
    %1252 = vmatpush1.bf16.msra.mxu0 0
    %1253 = vmatprep.subr.bf16.mxu0 0
    %1254 = vmatpush1.bf16.msra.mxu0 0
    %1255 = vmatprep.subr.bf16.mxu0 0
    %1256 = vmatpush1.bf16.msra.mxu0 0
    %1257 = vmatprep.subr.bf16.mxu0 0
    %1258 = vmatpush1.bf16.msra.mxu0 0
    %1259 = vmatprep.mubr.bf16.mxu0 0
    %1260 = vmatmul.mubr.bf16.gmra.mrb[0].mxu0 %v326
    %v1261 = vpop.f32.mrb[0].mxu0
    %v1262 = vadd.f32 0.0, %v1261
    %v1263 = vpop.f32.mrb[0].mxu0
    %v1264 = vpop.f32.mrb[0].mxu0
    %v1265 = vpop.f32.mrb[0].mxu0
    %1266 = vdwg.mxu0
    %v1271 = vunpack.c.l.b16 %v1187
    %v1272 = vunpack.c.l.b16 %v1188
    %v1273 = vunpack.c.l.b16 %v1189
    %v1274 = vunpack.c.l.b16 %v1190
    %v1275 = vpack.c.b16 %v1272, %v1271
    %v1276 = vpack.c.b16 %v1274, %v1273
    %1279 = vmatprep.subr.bf16.mxu0 0
    %1280 = vmatpush1.bf16.msra.mxu0 %v1275
    %1281 = vmatprep.subr.bf16.mxu0 0
    %1282 = vmatpush1.bf16.msra.mxu0 %v1276
    %1283 = vmatprep.subr.bf16.mxu0 0
    %1284 = vmatpush1.bf16.msra.mxu0 0
    %1285 = vmatprep.subr.bf16.mxu0 0
    %1286 = vmatpush1.bf16.msra.mxu0 0
    %1287 = vmatprep.subr.bf16.mxu0 0
    %1288 = vmatpush1.bf16.msra.mxu0 0
    %1289 = vmatprep.subr.bf16.mxu0 0
    %1290 = vmatpush1.bf16.msra.mxu0 0
    %1291 = vmatprep.subr.bf16.mxu0 0
    %1292 = vmatpush1.bf16.msra.mxu0 0
    %1293 = vmatprep.subr.bf16.mxu0 0
    %1294 = vmatpush1.bf16.msra.mxu0 0
    %1295 = vmatprep.subr.bf16.mxu0 0
    %1296 = vmatpush1.bf16.msra.mxu0 0
    %1297 = vmatprep.subr.bf16.mxu0 0
    %1298 = vmatpush1.bf16.msra.mxu0 0
    %1299 = vmatprep.subr.bf16.mxu0 0
    %1300 = vmatpush1.bf16.msra.mxu0 0
    %1301 = vmatprep.subr.bf16.mxu0 0
    %1302 = vmatpush1.bf16.msra.mxu0 0
    %1303 = vmatprep.subr.bf16.mxu0 0
    %1304 = vmatpush1.bf16.msra.mxu0 0
    %1305 = vmatprep.subr.bf16.mxu0 0
    %1306 = vmatpush1.bf16.msra.mxu0 0
    %1307 = vmatprep.subr.bf16.mxu0 0
    %1308 = vmatpush1.bf16.msra.mxu0 0
    %1309 = vmatprep.subr.bf16.mxu0 0
    %1310 = vmatpush1.bf16.msra.mxu0 0
    %1311 = vmatprep.mubr.bf16.mxu0 0
    %1312 = vmatmul.mubr.bf16.gmra.mrb[0].mxu0 %v326
    %v1313 = vpop.f32.mrb[0].mxu0
    %v1314 = vadd.f32 0.0, %v1313
    %v1315 = vpop.f32.mrb[0].mxu0
    %v1316 = vpop.f32.mrb[0].mxu0
    %v1317 = vpop.f32.mrb[0].mxu0
    %1318 = vdwg.mxu0
    %v1323 = vunpack.c.l.b16 %v1191
    %v1324 = vunpack.c.l.b16 %v1192
    %v1325 = vunpack.c.l.b16 %v1193
    %v1326 = vunpack.c.l.b16 %v1194
    %v1327 = vpack.c.b16 %v1324, %v1323
    %v1328 = vpack.c.b16 %v1326, %v1325
    %1331 = vmatprep.subr.bf16.mxu0 0
    %1332 = vmatpush1.bf16.msra.mxu0 %v1327
    %1333 = vmatprep.subr.bf16.mxu0 0
    %1334 = vmatpush1.bf16.msra.mxu0 %v1328
    %1335 = vmatprep.subr.bf16.mxu0 0
    %1336 = vmatpush1.bf16.msra.mxu0 0
    %1337 = vmatprep.subr.bf16.mxu0 0
    %1338 = vmatpush1.bf16.msra.mxu0 0
    %1339 = vmatprep.subr.bf16.mxu0 0
    %1340 = vmatpush1.bf16.msra.mxu0 0
    %1341 = vmatprep.subr.bf16.mxu0 0
    %1342 = vmatpush1.bf16.msra.mxu0 0
    %1343 = vmatprep.subr.bf16.mxu0 0
    %1344 = vmatpush1.bf16.msra.mxu0 0
    %1345 = vmatprep.subr.bf16.mxu0 0
    %1346 = vmatpush1.bf16.msra.mxu0 0
    %1347 = vmatprep.subr.bf16.mxu0 0
    %1348 = vmatpush1.bf16.msra.mxu0 0
    %1349 = vmatprep.subr.bf16.mxu0 0
    %1350 = vmatpush1.bf16.msra.mxu0 0
    %1351 = vmatprep.subr.bf16.mxu0 0
    %1352 = vmatpush1.bf16.msra.mxu0 0
    %1353 = vmatprep.subr.bf16.mxu0 0
    %1354 = vmatpush1.bf16.msra.mxu0 0
    %1355 = vmatprep.subr.bf16.mxu0 0
    %1356 = vmatpush1.bf16.msra.mxu0 0
    %1357 = vmatprep.subr.bf16.mxu0 0
    %1358 = vmatpush1.bf16.msra.mxu0 0
    %1359 = vmatprep.subr.bf16.mxu0 0
    %1360 = vmatpush1.bf16.msra.mxu0 0
    %1361 = vmatprep.subr.bf16.mxu0 0
    %1362 = vmatpush1.bf16.msra.mxu0 0
    %1363 = vmatprep.mubr.bf16.mxu0 0
    %1364 = vmatmul.mubr.bf16.gmra.mrb[0].mxu0 %v326
    %v1365 = vpop.f32.mrb[0].mxu0
    %v1366 = vadd.f32 0.0, %v1365
    %v1367 = vpop.f32.mrb[0].mxu0
    %v1368 = vpop.f32.mrb[0].mxu0
    %v1369 = vpop.f32.mrb[0].mxu0
    %1370 = vdwg.mxu0
    %v1375 = vunpack.c.l.b16 %v1195
    %v1376 = vunpack.c.l.b16 %v1196
    %v1377 = vunpack.c.l.b16 %v1197
    %v1378 = vunpack.c.l.b16 %v1198
    %v1379 = vpack.c.b16 %v1376, %v1375
    %v1380 = vpack.c.b16 %v1378, %v1377
    %1383 = vmatprep.subr.bf16.mxu0 0
    %1384 = vmatpush1.bf16.msra.mxu0 %v1379
    %1385 = vmatprep.subr.bf16.mxu0 0
    %1386 = vmatpush1.bf16.msra.mxu0 %v1380
    %1387 = vmatprep.subr.bf16.mxu0 0
    %1388 = vmatpush1.bf16.msra.mxu0 0
    %1389 = vmatprep.subr.bf16.mxu0 0
    %1390 = vmatpush1.bf16.msra.mxu0 0
    %1391 = vmatprep.subr.bf16.mxu0 0
    %1392 = vmatpush1.bf16.msra.mxu0 0
    %1393 = vmatprep.subr.bf16.mxu0 0
    %1394 = vmatpush1.bf16.msra.mxu0 0
    %1395 = vmatprep.subr.bf16.mxu0 0
    %1396 = vmatpush1.bf16.msra.mxu0 0
    %1397 = vmatprep.subr.bf16.mxu0 0
    %1398 = vmatpush1.bf16.msra.mxu0 0
    %1399 = vmatprep.subr.bf16.mxu0 0
    %1400 = vmatpush1.bf16.msra.mxu0 0
    %1401 = vmatprep.subr.bf16.mxu0 0
    %1402 = vmatpush1.bf16.msra.mxu0 0
    %1403 = vmatprep.subr.bf16.mxu0 0
    %1404 = vmatpush1.bf16.msra.mxu0 0
    %1405 = vmatprep.subr.bf16.mxu0 0
    %1406 = vmatpush1.bf16.msra.mxu0 0
    %1407 = vmatprep.subr.bf16.mxu0 0
    %1408 = vmatpush1.bf16.msra.mxu0 0
    %1409 = vmatprep.subr.bf16.mxu0 0
    %1410 = vmatpush1.bf16.msra.mxu0 0
    %1411 = vmatprep.subr.bf16.mxu0 0
    %1412 = vmatpush1.bf16.msra.mxu0 0
    %1413 = vmatprep.subr.bf16.mxu0 0
    %1414 = vmatpush1.bf16.msra.mxu0 0
    %1415 = vmatprep.mubr.bf16.mxu0 0
    %1416 = vmatmul.mubr.bf16.gmra.mrb[0].mxu0 %v326
    %v1417 = vpop.f32.mrb[0].mxu0
    %v1418 = vadd.f32 0.0, %v1417
    %v1419 = vpop.f32.mrb[0].mxu0
    %v1420 = vpop.f32.mrb[0].mxu0
    %v1421 = vpop.f32.mrb[0].mxu0
    %1422 = vdwg.mxu0
    %v1427 = vunpack.c.l.b16 %v1199
    %v1428 = vunpack.c.l.b16 %v1200
    %v1429 = vunpack.c.l.b16 %v1201
    %v1430 = vunpack.c.l.b16 %v1202
    %v1431 = vpack.c.b16 %v1428, %v1427
    %v1432 = vpack.c.b16 %v1430, %v1429
    %1435 = vmatprep.subr.bf16.mxu0 0
    %1436 = vmatpush1.bf16.msra.mxu0 %v1431
    %1437 = vmatprep.subr.bf16.mxu0 0
    %1438 = vmatpush1.bf16.msra.mxu0 %v1432
    %1439 = vmatprep.subr.bf16.mxu0 0
    %1440 = vmatpush1.bf16.msra.mxu0 0
    %1441 = vmatprep.subr.bf16.mxu0 0
    %1442 = vmatpush1.bf16.msra.mxu0 0
    %1443 = vmatprep.subr.bf16.mxu0 0
    %1444 = vmatpush1.bf16.msra.mxu0 0
    %1445 = vmatprep.subr.bf16.mxu0 0
    %1446 = vmatpush1.bf16.msra.mxu0 0
    %1447 = vmatprep.subr.bf16.mxu0 0
    %1448 = vmatpush1.bf16.msra.mxu0 0
    %1449 = vmatprep.subr.bf16.mxu0 0
    %1450 = vmatpush1.bf16.msra.mxu0 0
    %1451 = vmatprep.subr.bf16.mxu0 0
    %1452 = vmatpush1.bf16.msra.mxu0 0
    %1453 = vmatprep.subr.bf16.mxu0 0
    %1454 = vmatpush1.bf16.msra.mxu0 0
    %1455 = vmatprep.subr.bf16.mxu0 0
    %1456 = vmatpush1.bf16.msra.mxu0 0
    %1457 = vmatprep.subr.bf16.mxu0 0
    %1458 = vmatpush1.bf16.msra.mxu0 0
    %1459 = vmatprep.subr.bf16.mxu0 0
    %1460 = vmatpush1.bf16.msra.mxu0 0
    %1461 = vmatprep.subr.bf16.mxu0 0
    %1462 = vmatpush1.bf16.msra.mxu0 0
    %1463 = vmatprep.subr.bf16.mxu0 0
    %1464 = vmatpush1.bf16.msra.mxu0 0
    %1465 = vmatprep.subr.bf16.mxu0 0
    %1466 = vmatpush1.bf16.msra.mxu0 0
    %1467 = vmatprep.mubr.bf16.mxu0 0
    %1468 = vmatmul.mubr.bf16.gmra.mrb[0].mxu0 %v537
    %v1469 = vpop.f32.mrb[0].mxu0
    %v1470 = vadd.f32 0.0, %v1469
    %v1471 = vpop.f32.mrb[0].mxu0
    %v1472 = vpop.f32.mrb[0].mxu0
    %v1473 = vpop.f32.mrb[0].mxu0
    %1474 = vdwg.mxu0
    %v1479 = vunpack.c.l.b16 %v1203
    %v1480 = vunpack.c.l.b16 %v1204
    %v1481 = vunpack.c.l.b16 %v1205
    %v1482 = vunpack.c.l.b16 %v1206
    %v1483 = vpack.c.b16 %v1480, %v1479
    %v1484 = vpack.c.b16 %v1482, %v1481
    %1487 = vmatprep.subr.bf16.mxu0 0
    %1488 = vmatpush1.bf16.msra.mxu0 %v1483
    %1489 = vmatprep.subr.bf16.mxu0 0
    %1490 = vmatpush1.bf16.msra.mxu0 %v1484
    %1491 = vmatprep.subr.bf16.mxu0 0
    %1492 = vmatpush1.bf16.msra.mxu0 0
    %1493 = vmatprep.subr.bf16.mxu0 0
    %1494 = vmatpush1.bf16.msra.mxu0 0
    %1495 = vmatprep.subr.bf16.mxu0 0
    %1496 = vmatpush1.bf16.msra.mxu0 0
    %1497 = vmatprep.subr.bf16.mxu0 0
    %1498 = vmatpush1.bf16.msra.mxu0 0
    %1499 = vmatprep.subr.bf16.mxu0 0
    %1500 = vmatpush1.bf16.msra.mxu0 0
    %1501 = vmatprep.subr.bf16.mxu0 0
    %1502 = vmatpush1.bf16.msra.mxu0 0
    %1503 = vmatprep.subr.bf16.mxu0 0
    %1504 = vmatpush1.bf16.msra.mxu0 0
    %1505 = vmatprep.subr.bf16.mxu0 0
    %1506 = vmatpush1.bf16.msra.mxu0 0
    %1507 = vmatprep.subr.bf16.mxu0 0
    %1508 = vmatpush1.bf16.msra.mxu0 0
    %1509 = vmatprep.subr.bf16.mxu0 0
    %1510 = vmatpush1.bf16.msra.mxu0 0
    %1511 = vmatprep.subr.bf16.mxu0 0
    %1512 = vmatpush1.bf16.msra.mxu0 0
    %1513 = vmatprep.subr.bf16.mxu0 0
    %1514 = vmatpush1.bf16.msra.mxu0 0
    %1515 = vmatprep.subr.bf16.mxu0 0
    %1516 = vmatpush1.bf16.msra.mxu0 0
    %1517 = vmatprep.subr.bf16.mxu0 0
    %1518 = vmatpush1.bf16.msra.mxu0 0
    %1519 = vmatprep.mubr.bf16.mxu0 0
    %1520 = vmatmul.mubr.bf16.gmra.mrb[0].mxu0 %v537
    %v1521 = vpop.f32.mrb[0].mxu0
    %v1522 = vadd.f32 0.0, %v1521
    %v1523 = vpop.f32.mrb[0].mxu0
    %v1524 = vpop.f32.mrb[0].mxu0
    %v1525 = vpop.f32.mrb[0].mxu0
    %1526 = vdwg.mxu0
    %v1531 = vunpack.c.l.b16 %v1207
    %v1532 = vunpack.c.l.b16 %v1208
    %v1533 = vunpack.c.l.b16 %v1209
    %v1534 = vunpack.c.l.b16 %v1210
    %v1535 = vpack.c.b16 %v1532, %v1531
    %v1536 = vpack.c.b16 %v1534, %v1533
    %1539 = vmatprep.subr.bf16.mxu0 0
    %1540 = vmatpush1.bf16.msra.mxu0 %v1535
    %1541 = vmatprep.subr.bf16.mxu0 0
    %1542 = vmatpush1.bf16.msra.mxu0 %v1536
    %1543 = vmatprep.subr.bf16.mxu0 0
    %1544 = vmatpush1.bf16.msra.mxu0 0
    %1545 = vmatprep.subr.bf16.mxu0 0
    %1546 = vmatpush1.bf16.msra.mxu0 0
    %1547 = vmatprep.subr.bf16.mxu0 0
    %1548 = vmatpush1.bf16.msra.mxu0 0
    %1549 = vmatprep.subr.bf16.mxu0 0
    %1550 = vmatpush1.bf16.msra.mxu0 0
    %1551 = vmatprep.subr.bf16.mxu0 0
    %1552 = vmatpush1.bf16.msra.mxu0 0
    %1553 = vmatprep.subr.bf16.mxu0 0
    %1554 = vmatpush1.bf16.msra.mxu0 0
    %1555 = vmatprep.subr.bf16.mxu0 0
    %1556 = vmatpush1.bf16.msra.mxu0 0
    %1557 = vmatprep.subr.bf16.mxu0 0
    %1558 = vmatpush1.bf16.msra.mxu0 0
    %1559 = vmatprep.subr.bf16.mxu0 0
    %1560 = vmatpush1.bf16.msra.mxu0 0
    %1561 = vmatprep.subr.bf16.mxu0 0
    %1562 = vmatpush1.bf16.msra.mxu0 0
    %1563 = vmatprep.subr.bf16.mxu0 0
    %1564 = vmatpush1.bf16.msra.mxu0 0
    %1565 = vmatprep.subr.bf16.mxu0 0
    %1566 = vmatpush1.bf16.msra.mxu0 0
    %1567 = vmatprep.subr.bf16.mxu0 0
    %1568 = vmatpush1.bf16.msra.mxu0 0
    %1569 = vmatprep.subr.bf16.mxu0 0
    %1570 = vmatpush1.bf16.msra.mxu0 0
    %1571 = vmatprep.mubr.bf16.mxu0 0
    %1572 = vmatmul.mubr.bf16.gmra.mrb[0].mxu0 %v537
    %v1573 = vpop.f32.mrb[0].mxu0
    %v1574 = vadd.f32 0.0, %v1573
    %v1575 = vpop.f32.mrb[0].mxu0
    %v1576 = vpop.f32.mrb[0].mxu0
    %v1577 = vpop.f32.mrb[0].mxu0
    %1578 = vdwg.mxu0
    %v1583 = vunpack.c.l.b16 %v1211
    %v1584 = vunpack.c.l.b16 %v1212
    %v1585 = vunpack.c.l.b16 %v1213
    %v1586 = vunpack.c.l.b16 %v1214
    %v1587 = vpack.c.b16 %v1584, %v1583
    %v1588 = vpack.c.b16 %v1586, %v1585
    %1591 = vmatprep.subr.bf16.mxu0 0
    %1592 = vmatpush1.bf16.msra.mxu0 %v1587
    %1593 = vmatprep.subr.bf16.mxu0 0
    %1594 = vmatpush1.bf16.msra.mxu0 %v1588
    %1595 = vmatprep.subr.bf16.mxu0 0
    %1596 = vmatpush1.bf16.msra.mxu0 0
    %1597 = vmatprep.subr.bf16.mxu0 0
    %1598 = vmatpush1.bf16.msra.mxu0 0
    %1599 = vmatprep.subr.bf16.mxu0 0
    %1600 = vmatpush1.bf16.msra.mxu0 0
    %1601 = vmatprep.subr.bf16.mxu0 0
    %1602 = vmatpush1.bf16.msra.mxu0 0
    %1603 = vmatprep.subr.bf16.mxu0 0
    %1604 = vmatpush1.bf16.msra.mxu0 0
    %1605 = vmatprep.subr.bf16.mxu0 0
    %1606 = vmatpush1.bf16.msra.mxu0 0
    %1607 = vmatprep.subr.bf16.mxu0 0
    %1608 = vmatpush1.bf16.msra.mxu0 0
    %1609 = vmatprep.subr.bf16.mxu0 0
    %1610 = vmatpush1.bf16.msra.mxu0 0
    %1611 = vmatprep.subr.bf16.mxu0 0
    %1612 = vmatpush1.bf16.msra.mxu0 0
    %1613 = vmatprep.subr.bf16.mxu0 0
    %1614 = vmatpush1.bf16.msra.mxu0 0
    %1615 = vmatprep.subr.bf16.mxu0 0
    %1616 = vmatpush1.bf16.msra.mxu0 0
    %1617 = vmatprep.subr.bf16.mxu0 0
    %1618 = vmatpush1.bf16.msra.mxu0 0
    %1619 = vmatprep.subr.bf16.mxu0 0
    %1620 = vmatpush1.bf16.msra.mxu0 0
    %1621 = vmatprep.subr.bf16.mxu0 0
    %1622 = vmatpush1.bf16.msra.mxu0 0
    %1623 = vmatprep.mubr.bf16.mxu0 0
    %1624 = vmatmul.mubr.bf16.gmra.mrb[0].mxu0 %v537
    %v1625 = vpop.f32.mrb[0].mxu0
    %v1626 = vadd.f32 0.0, %v1625
    %v1627 = vpop.f32.mrb[0].mxu0
    %v1628 = vpop.f32.mrb[0].mxu0
    %v1629 = vpop.f32.mrb[0].mxu0
    %1630 = vdwg.mxu0
    %vm1631 = vcmask 61440
    %1632 = vst.msk [vmem:[%s20] sm:$0x1f] %vm1631, %v363
    %1633 = vst.msk [vmem:[%s20 + $0x8] sm:$0x1f] %vm1631, %v415
    %1634 = vst.msk [vmem:[%s20 + $0x10] sm:$0x1f] %vm1631, %v467
    %1635 = vst.msk [vmem:[%s20 + $0x18] sm:$0x1f] %vm1631, %v519
    %1636 = vst.msk [vmem:[%s20 + $0x20] sm:$0x1f] %vm1631, %v574
    %1637 = vst.msk [vmem:[%s20 + $0x28] sm:$0x1f] %vm1631, %v626
    %1638 = vst.msk [vmem:[%s20 + $0x30] sm:$0x1f] %vm1631, %v678
    %1639 = vst.msk [vmem:[%s20 + $0x38] sm:$0x1f] %vm1631, %v730
    %1640 = vst.msk [vmem:[%s21] sm:$0x1f] %vm1631, %v814
    %1641 = vst.msk [vmem:[%s21 + $0x8] sm:$0x1f] %vm1631, %v866
    %1642 = vst.msk [vmem:[%s21 + $0x10] sm:$0x1f] %vm1631, %v918
    %1643 = vst.msk [vmem:[%s21 + $0x18] sm:$0x1f] %vm1631, %v970
    %1644 = vst.msk [vmem:[%s21 + $0x20] sm:$0x1f] %vm1631, %v1022
    %1645 = vst.msk [vmem:[%s21 + $0x28] sm:$0x1f] %vm1631, %v1074
    %1646 = vst.msk [vmem:[%s21 + $0x30] sm:$0x1f] %vm1631, %v1126
    %1647 = vst.msk [vmem:[%s21 + $0x38] sm:$0x1f] %vm1631, %v1178
    %1648 = vst.msk [vmem:[%s22] sm:$0x1f] %vm1631, %v1262
    %1649 = vst.msk [vmem:[%s22 + $0x8] sm:$0x1f] %vm1631, %v1314
    %1650 = vst.msk [vmem:[%s22 + $0x10] sm:$0x1f] %vm1631, %v1366
    %1651 = vst.msk [vmem:[%s22 + $0x18] sm:$0x1f] %vm1631, %v1418
    %1652 = vst.msk [vmem:[%s22 + $0x20] sm:$0x1f] %vm1631, %v1470
    %1653 = vst.msk [vmem:[%s22 + $0x28] sm:$0x1f] %vm1631, %v1522
    %1654 = vst.msk [vmem:[%s22 + $0x30] sm:$0x1f] %vm1631, %v1574
    %1655 = vst.msk [vmem:[%s22 + $0x38] sm:$0x1f] %vm1631, %v1626
    %v1656 = vpack.c.bf16 %v363, %v363
    %v1657 = vpack.c.bf16 %v415, %v415
    %v1658 = vpack.c.bf16 %v467, %v467
    %v1659 = vpack.c.bf16 %v519, %v519
    %v1660 = vpack.c.bf16 %v574, %v574
    %v1661 = vpack.c.bf16 %v626, %v626
    %v1662 = vpack.c.bf16 %v678, %v678
    %v1663 = vpack.c.bf16 %v730, %v730
    %v1664 = vpack.c.bf16 %v814, %v814
    %v1665 = vpack.c.bf16 %v866, %v866
    %v1666 = vpack.c.bf16 %v918, %v918
    %v1667 = vpack.c.bf16 %v970, %v970
    %v1668 = vpack.c.bf16 %v1022, %v1022
    %v1669 = vpack.c.bf16 %v1074, %v1074
    %v1670 = vpack.c.bf16 %v1126, %v1126
    %v1671 = vpack.c.bf16 %v1178, %v1178
    %vm1672 = vcmask 64512
    %v1674 = vsel %vm1672, %v1656, 0
    %v1677 = vsel %vm1672, %v1664, 0
    %1679 = vmatprep.subr.bf16.mxu0 0
    %1680 = vmatpush1.bf16.xpose.msra.mxu0 %v1677
    %1681 = vmatprep.subr.bf16.mxu0 0
    %1682 = vmatpush1.bf16.xpose.msra.mxu0 0
    %1683 = vmatprep.subr.bf16.mxu0 0
    %1684 = vmatpush1.bf16.xpose.msra.mxu0 0
    %1685 = vmatprep.subr.bf16.mxu0 0
    %1686 = vmatpush1.bf16.xpose.msra.mxu0 0
    %1687 = vmatprep.subr.bf16.mxu0 0
    %1688 = vmatpush1.bf16.xpose.msra.mxu0 0
    %1689 = vmatprep.subr.bf16.mxu0 0
    %1690 = vmatpush1.bf16.xpose.msra.mxu0 0
    %1691 = vmatprep.subr.bf16.mxu0 0
    %1692 = vmatpush1.bf16.xpose.msra.mxu0 0
    %1693 = vmatprep.subr.bf16.mxu0 0
    %1694 = vmatpush1.bf16.xpose.msra.mxu0 0
    %1695 = vmatprep.subr.bf16.mxu0 0
    %1696 = vmatpush1.bf16.xpose.msra.mxu0 0
    %1697 = vmatprep.subr.bf16.mxu0 0
    %1698 = vmatpush1.bf16.xpose.msra.mxu0 0
    %1699 = vmatprep.subr.bf16.mxu0 0
    %1700 = vmatpush1.bf16.xpose.msra.mxu0 0
    %1701 = vmatprep.subr.bf16.mxu0 0
    %1702 = vmatpush1.bf16.xpose.msra.mxu0 0
    %1703 = vmatprep.subr.bf16.mxu0 0
    %1704 = vmatpush1.bf16.xpose.msra.mxu0 0
    %1705 = vmatprep.subr.bf16.mxu0 0
    %1706 = vmatpush1.bf16.xpose.msra.mxu0 0
    %1707 = vmatprep.subr.bf16.mxu0 0
    %1708 = vmatpush1.bf16.xpose.msra.mxu0 0
    %1709 = vmatprep.subr.bf16.mxu0 0
    %1710 = vmatpush1.bf16.xpose.msra.mxu0 0
    %1711 = vmatprep.mubr.bf16.mxu0 0
    %1712 = vmatmul.mubr.bf16.gmra.mrb[0].mxu0 %v1674
    %v1713 = vpop.f32.mrb[0].mxu0
    %v1714 = vadd.f32 0.0, %v1713
    %v1715 = vpop.f32.mrb[0].mxu0
    %v1716 = vpop.f32.mrb[0].mxu0
    %v1717 = vpop.f32.mrb[0].mxu0
    %1718 = vdwg.mxu0
    %v1720 = vsel %vm1672, %v1657, 0
    %v1723 = vsel %vm1672, %v1665, 0
    %1725 = vmatprep.subr.bf16.mxu0 0
    %1726 = vmatpush1.bf16.xpose.msra.mxu0 %v1723
    %1727 = vmatprep.subr.bf16.mxu0 0
    %1728 = vmatpush1.bf16.xpose.msra.mxu0 0
    %1729 = vmatprep.subr.bf16.mxu0 0
    %1730 = vmatpush1.bf16.xpose.msra.mxu0 0
    %1731 = vmatprep.subr.bf16.mxu0 0
    %1732 = vmatpush1.bf16.xpose.msra.mxu0 0
    %1733 = vmatprep.subr.bf16.mxu0 0
    %1734 = vmatpush1.bf16.xpose.msra.mxu0 0
    %1735 = vmatprep.subr.bf16.mxu0 0
    %1736 = vmatpush1.bf16.xpose.msra.mxu0 0
    %1737 = vmatprep.subr.bf16.mxu0 0
    %1738 = vmatpush1.bf16.xpose.msra.mxu0 0
    %1739 = vmatprep.subr.bf16.mxu0 0
    %1740 = vmatpush1.bf16.xpose.msra.mxu0 0
    %1741 = vmatprep.subr.bf16.mxu0 0
    %1742 = vmatpush1.bf16.xpose.msra.mxu0 0
    %1743 = vmatprep.subr.bf16.mxu0 0
    %1744 = vmatpush1.bf16.xpose.msra.mxu0 0
    %1745 = vmatprep.subr.bf16.mxu0 0
    %1746 = vmatpush1.bf16.xpose.msra.mxu0 0
    %1747 = vmatprep.subr.bf16.mxu0 0
    %1748 = vmatpush1.bf16.xpose.msra.mxu0 0
    %1749 = vmatprep.subr.bf16.mxu0 0
    %1750 = vmatpush1.bf16.xpose.msra.mxu0 0
    %1751 = vmatprep.subr.bf16.mxu0 0
    %1752 = vmatpush1.bf16.xpose.msra.mxu0 0
    %1753 = vmatprep.subr.bf16.mxu0 0
    %1754 = vmatpush1.bf16.xpose.msra.mxu0 0
    %1755 = vmatprep.subr.bf16.mxu0 0
    %1756 = vmatpush1.bf16.xpose.msra.mxu0 0
    %1757 = vmatprep.mubr.bf16.mxu0 0
    %1758 = vmatmul.mubr.bf16.gmra.mrb[0].mxu0 %v1720
    %v1759 = vpop.f32.mrb[0].mxu0
    %v1760 = vadd.f32 0.0, %v1759
    %v1761 = vpop.f32.mrb[0].mxu0
    %v1762 = vpop.f32.mrb[0].mxu0
    %v1763 = vpop.f32.mrb[0].mxu0
    %1764 = vdwg.mxu0
    %v1766 = vsel %vm1672, %v1658, 0
    %v1769 = vsel %vm1672, %v1666, 0
    %1771 = vmatprep.subr.bf16.mxu0 0
    %1772 = vmatpush1.bf16.xpose.msra.mxu0 %v1769
    %1773 = vmatprep.subr.bf16.mxu0 0
    %1774 = vmatpush1.bf16.xpose.msra.mxu0 0
    %1775 = vmatprep.subr.bf16.mxu0 0
    %1776 = vmatpush1.bf16.xpose.msra.mxu0 0
    %1777 = vmatprep.subr.bf16.mxu0 0
    %1778 = vmatpush1.bf16.xpose.msra.mxu0 0
    %1779 = vmatprep.subr.bf16.mxu0 0
    %1780 = vmatpush1.bf16.xpose.msra.mxu0 0
    %1781 = vmatprep.subr.bf16.mxu0 0
    %1782 = vmatpush1.bf16.xpose.msra.mxu0 0
    %1783 = vmatprep.subr.bf16.mxu0 0
    %1784 = vmatpush1.bf16.xpose.msra.mxu0 0
    %1785 = vmatprep.subr.bf16.mxu0 0
    %1786 = vmatpush1.bf16.xpose.msra.mxu0 0
    %1787 = vmatprep.subr.bf16.mxu0 0
    %1788 = vmatpush1.bf16.xpose.msra.mxu0 0
    %1789 = vmatprep.subr.bf16.mxu0 0
    %1790 = vmatpush1.bf16.xpose.msra.mxu0 0
    %1791 = vmatprep.subr.bf16.mxu0 0
    %1792 = vmatpush1.bf16.xpose.msra.mxu0 0
    %1793 = vmatprep.subr.bf16.mxu0 0
    %1794 = vmatpush1.bf16.xpose.msra.mxu0 0
    %1795 = vmatprep.subr.bf16.mxu0 0
    %1796 = vmatpush1.bf16.xpose.msra.mxu0 0
    %1797 = vmatprep.subr.bf16.mxu0 0
    %1798 = vmatpush1.bf16.xpose.msra.mxu0 0
    %1799 = vmatprep.subr.bf16.mxu0 0
    %1800 = vmatpush1.bf16.xpose.msra.mxu0 0
    %1801 = vmatprep.subr.bf16.mxu0 0
    %1802 = vmatpush1.bf16.xpose.msra.mxu0 0
    %1803 = vmatprep.mubr.bf16.mxu0 0
    %1804 = vmatmul.mubr.bf16.gmra.mrb[0].mxu0 %v1766
    %v1805 = vpop.f32.mrb[0].mxu0
    %v1806 = vadd.f32 0.0, %v1805
    %v1807 = vpop.f32.mrb[0].mxu0
    %v1808 = vpop.f32.mrb[0].mxu0
    %v1809 = vpop.f32.mrb[0].mxu0
    %1810 = vdwg.mxu0
    %v1812 = vsel %vm1672, %v1659, 0
    %v1815 = vsel %vm1672, %v1667, 0
    %1817 = vmatprep.subr.bf16.mxu0 0
    %1818 = vmatpush1.bf16.xpose.msra.mxu0 %v1815
    %1819 = vmatprep.subr.bf16.mxu0 0
    %1820 = vmatpush1.bf16.xpose.msra.mxu0 0
    %1821 = vmatprep.subr.bf16.mxu0 0
    %1822 = vmatpush1.bf16.xpose.msra.mxu0 0
    %1823 = vmatprep.subr.bf16.mxu0 0
    %1824 = vmatpush1.bf16.xpose.msra.mxu0 0
    %1825 = vmatprep.subr.bf16.mxu0 0
    %1826 = vmatpush1.bf16.xpose.msra.mxu0 0
    %1827 = vmatprep.subr.bf16.mxu0 0
    %1828 = vmatpush1.bf16.xpose.msra.mxu0 0
    %1829 = vmatprep.subr.bf16.mxu0 0
    %1830 = vmatpush1.bf16.xpose.msra.mxu0 0
    %1831 = vmatprep.subr.bf16.mxu0 0
    %1832 = vmatpush1.bf16.xpose.msra.mxu0 0
    %1833 = vmatprep.subr.bf16.mxu0 0
    %1834 = vmatpush1.bf16.xpose.msra.mxu0 0
    %1835 = vmatprep.subr.bf16.mxu0 0
    %1836 = vmatpush1.bf16.xpose.msra.mxu0 0
    %1837 = vmatprep.subr.bf16.mxu0 0
    %1838 = vmatpush1.bf16.xpose.msra.mxu0 0
    %1839 = vmatprep.subr.bf16.mxu0 0
    %1840 = vmatpush1.bf16.xpose.msra.mxu0 0
    %1841 = vmatprep.subr.bf16.mxu0 0
    %1842 = vmatpush1.bf16.xpose.msra.mxu0 0
    %1843 = vmatprep.subr.bf16.mxu0 0
    %1844 = vmatpush1.bf16.xpose.msra.mxu0 0
    %1845 = vmatprep.subr.bf16.mxu0 0
    %1846 = vmatpush1.bf16.xpose.msra.mxu0 0
    %1847 = vmatprep.subr.bf16.mxu0 0
    %1848 = vmatpush1.bf16.xpose.msra.mxu0 0
    %1849 = vmatprep.mubr.bf16.mxu0 0
    %1850 = vmatmul.mubr.bf16.gmra.mrb[0].mxu0 %v1812
    %v1851 = vpop.f32.mrb[0].mxu0
    %v1852 = vadd.f32 0.0, %v1851
    %v1853 = vpop.f32.mrb[0].mxu0
    %v1854 = vpop.f32.mrb[0].mxu0
    %v1855 = vpop.f32.mrb[0].mxu0
    %1856 = vdwg.mxu0
    %v1858 = vsel %vm1672, %v1660, 0
    %v1861 = vsel %vm1672, %v1668, 0
    %1863 = vmatprep.subr.bf16.mxu0 0
    %1864 = vmatpush1.bf16.xpose.msra.mxu0 %v1861
    %1865 = vmatprep.subr.bf16.mxu0 0
    %1866 = vmatpush1.bf16.xpose.msra.mxu0 0
    %1867 = vmatprep.subr.bf16.mxu0 0
    %1868 = vmatpush1.bf16.xpose.msra.mxu0 0
    %1869 = vmatprep.subr.bf16.mxu0 0
    %1870 = vmatpush1.bf16.xpose.msra.mxu0 0
    %1871 = vmatprep.subr.bf16.mxu0 0
    %1872 = vmatpush1.bf16.xpose.msra.mxu0 0
    %1873 = vmatprep.subr.bf16.mxu0 0
    %1874 = vmatpush1.bf16.xpose.msra.mxu0 0
    %1875 = vmatprep.subr.bf16.mxu0 0
    %1876 = vmatpush1.bf16.xpose.msra.mxu0 0
    %1877 = vmatprep.subr.bf16.mxu0 0
    %1878 = vmatpush1.bf16.xpose.msra.mxu0 0
    %1879 = vmatprep.subr.bf16.mxu0 0
    %1880 = vmatpush1.bf16.xpose.msra.mxu0 0
    %1881 = vmatprep.subr.bf16.mxu0 0
    %1882 = vmatpush1.bf16.xpose.msra.mxu0 0
    %1883 = vmatprep.subr.bf16.mxu0 0
    %1884 = vmatpush1.bf16.xpose.msra.mxu0 0
    %1885 = vmatprep.subr.bf16.mxu0 0
    %1886 = vmatpush1.bf16.xpose.msra.mxu0 0
    %1887 = vmatprep.subr.bf16.mxu0 0
    %1888 = vmatpush1.bf16.xpose.msra.mxu0 0
    %1889 = vmatprep.subr.bf16.mxu0 0
    %1890 = vmatpush1.bf16.xpose.msra.mxu0 0
    %1891 = vmatprep.subr.bf16.mxu0 0
    %1892 = vmatpush1.bf16.xpose.msra.mxu0 0
    %1893 = vmatprep.subr.bf16.mxu0 0
    %1894 = vmatpush1.bf16.xpose.msra.mxu0 0
    %1895 = vmatprep.mubr.bf16.mxu0 0
    %1896 = vmatmul.mubr.bf16.gmra.mrb[0].mxu0 %v1858
    %v1897 = vpop.f32.mrb[0].mxu0
    %v1898 = vadd.f32 0.0, %v1897
    %v1899 = vpop.f32.mrb[0].mxu0
    %v1900 = vpop.f32.mrb[0].mxu0
    %v1901 = vpop.f32.mrb[0].mxu0
    %1902 = vdwg.mxu0
    %v1904 = vsel %vm1672, %v1661, 0
    %v1907 = vsel %vm1672, %v1669, 0
    %1909 = vmatprep.subr.bf16.mxu0 0
    %1910 = vmatpush1.bf16.xpose.msra.mxu0 %v1907
    %1911 = vmatprep.subr.bf16.mxu0 0
    %1912 = vmatpush1.bf16.xpose.msra.mxu0 0
    %1913 = vmatprep.subr.bf16.mxu0 0
    %1914 = vmatpush1.bf16.xpose.msra.mxu0 0
    %1915 = vmatprep.subr.bf16.mxu0 0
    %1916 = vmatpush1.bf16.xpose.msra.mxu0 0
    %1917 = vmatprep.subr.bf16.mxu0 0
    %1918 = vmatpush1.bf16.xpose.msra.mxu0 0
    %1919 = vmatprep.subr.bf16.mxu0 0
    %1920 = vmatpush1.bf16.xpose.msra.mxu0 0
    %1921 = vmatprep.subr.bf16.mxu0 0
    %1922 = vmatpush1.bf16.xpose.msra.mxu0 0
    %1923 = vmatprep.subr.bf16.mxu0 0
    %1924 = vmatpush1.bf16.xpose.msra.mxu0 0
    %1925 = vmatprep.subr.bf16.mxu0 0
    %1926 = vmatpush1.bf16.xpose.msra.mxu0 0
    %1927 = vmatprep.subr.bf16.mxu0 0
    %1928 = vmatpush1.bf16.xpose.msra.mxu0 0
    %1929 = vmatprep.subr.bf16.mxu0 0
    %1930 = vmatpush1.bf16.xpose.msra.mxu0 0
    %1931 = vmatprep.subr.bf16.mxu0 0
    %1932 = vmatpush1.bf16.xpose.msra.mxu0 0
    %1933 = vmatprep.subr.bf16.mxu0 0
    %1934 = vmatpush1.bf16.xpose.msra.mxu0 0
    %1935 = vmatprep.subr.bf16.mxu0 0
    %1936 = vmatpush1.bf16.xpose.msra.mxu0 0
    %1937 = vmatprep.subr.bf16.mxu0 0
    %1938 = vmatpush1.bf16.xpose.msra.mxu0 0
    %1939 = vmatprep.subr.bf16.mxu0 0
    %1940 = vmatpush1.bf16.xpose.msra.mxu0 0
    %1941 = vmatprep.mubr.bf16.mxu0 0
    %1942 = vmatmul.mubr.bf16.gmra.mrb[0].mxu0 %v1904
    %v1943 = vpop.f32.mrb[0].mxu0
    %v1944 = vadd.f32 0.0, %v1943
    %v1945 = vpop.f32.mrb[0].mxu0
    %v1946 = vpop.f32.mrb[0].mxu0
    %v1947 = vpop.f32.mrb[0].mxu0
    %1948 = vdwg.mxu0
    %v1950 = vsel %vm1672, %v1662, 0
    %v1953 = vsel %vm1672, %v1670, 0
    %1955 = vmatprep.subr.bf16.mxu0 0
    %1956 = vmatpush1.bf16.xpose.msra.mxu0 %v1953
    %1957 = vmatprep.subr.bf16.mxu0 0
    %1958 = vmatpush1.bf16.xpose.msra.mxu0 0
    %1959 = vmatprep.subr.bf16.mxu0 0
    %1960 = vmatpush1.bf16.xpose.msra.mxu0 0
    %1961 = vmatprep.subr.bf16.mxu0 0
    %1962 = vmatpush1.bf16.xpose.msra.mxu0 0
    %1963 = vmatprep.subr.bf16.mxu0 0
    %1964 = vmatpush1.bf16.xpose.msra.mxu0 0
    %1965 = vmatprep.subr.bf16.mxu0 0
    %1966 = vmatpush1.bf16.xpose.msra.mxu0 0
    %1967 = vmatprep.subr.bf16.mxu0 0
    %1968 = vmatpush1.bf16.xpose.msra.mxu0 0
    %1969 = vmatprep.subr.bf16.mxu0 0
    %1970 = vmatpush1.bf16.xpose.msra.mxu0 0
    %1971 = vmatprep.subr.bf16.mxu0 0
    %1972 = vmatpush1.bf16.xpose.msra.mxu0 0
    %1973 = vmatprep.subr.bf16.mxu0 0
    %1974 = vmatpush1.bf16.xpose.msra.mxu0 0
    %1975 = vmatprep.subr.bf16.mxu0 0
    %1976 = vmatpush1.bf16.xpose.msra.mxu0 0
    %1977 = vmatprep.subr.bf16.mxu0 0
    %1978 = vmatpush1.bf16.xpose.msra.mxu0 0
    %1979 = vmatprep.subr.bf16.mxu0 0
    %1980 = vmatpush1.bf16.xpose.msra.mxu0 0
    %1981 = vmatprep.subr.bf16.mxu0 0
    %1982 = vmatpush1.bf16.xpose.msra.mxu0 0
    %1983 = vmatprep.subr.bf16.mxu0 0
    %1984 = vmatpush1.bf16.xpose.msra.mxu0 0
    %1985 = vmatprep.subr.bf16.mxu0 0
    %1986 = vmatpush1.bf16.xpose.msra.mxu0 0
    %1987 = vmatprep.mubr.bf16.mxu0 0
    %1988 = vmatmul.mubr.bf16.gmra.mrb[0].mxu0 %v1950
    %v1989 = vpop.f32.mrb[0].mxu0
    %v1990 = vadd.f32 0.0, %v1989
    %v1991 = vpop.f32.mrb[0].mxu0
    %v1992 = vpop.f32.mrb[0].mxu0
    %v1993 = vpop.f32.mrb[0].mxu0
    %1994 = vdwg.mxu0
    %v1996 = vsel %vm1672, %v1663, 0
    %v1999 = vsel %vm1672, %v1671, 0
    %2001 = vmatprep.subr.bf16.mxu0 0
    %2002 = vmatpush1.bf16.xpose.msra.mxu0 %v1999
    %2003 = vmatprep.subr.bf16.mxu0 0
    %2004 = vmatpush1.bf16.xpose.msra.mxu0 0
    %2005 = vmatprep.subr.bf16.mxu0 0
    %2006 = vmatpush1.bf16.xpose.msra.mxu0 0
    %2007 = vmatprep.subr.bf16.mxu0 0
    %2008 = vmatpush1.bf16.xpose.msra.mxu0 0
    %2009 = vmatprep.subr.bf16.mxu0 0
    %2010 = vmatpush1.bf16.xpose.msra.mxu0 0
    %2011 = vmatprep.subr.bf16.mxu0 0
    %2012 = vmatpush1.bf16.xpose.msra.mxu0 0
    %2013 = vmatprep.subr.bf16.mxu0 0
    %2014 = vmatpush1.bf16.xpose.msra.mxu0 0
    %2015 = vmatprep.subr.bf16.mxu0 0
    %2016 = vmatpush1.bf16.xpose.msra.mxu0 0
    %2017 = vmatprep.subr.bf16.mxu0 0
    %2018 = vmatpush1.bf16.xpose.msra.mxu0 0
    %2019 = vmatprep.subr.bf16.mxu0 0
    %2020 = vmatpush1.bf16.xpose.msra.mxu0 0
    %2021 = vmatprep.subr.bf16.mxu0 0
    %2022 = vmatpush1.bf16.xpose.msra.mxu0 0
    %2023 = vmatprep.subr.bf16.mxu0 0
    %2024 = vmatpush1.bf16.xpose.msra.mxu0 0
    %2025 = vmatprep.subr.bf16.mxu0 0
    %2026 = vmatpush1.bf16.xpose.msra.mxu0 0
    %2027 = vmatprep.subr.bf16.mxu0 0
    %2028 = vmatpush1.bf16.xpose.msra.mxu0 0
    %2029 = vmatprep.subr.bf16.mxu0 0
    %2030 = vmatpush1.bf16.xpose.msra.mxu0 0
    %2031 = vmatprep.subr.bf16.mxu0 0
    %2032 = vmatpush1.bf16.xpose.msra.mxu0 0
    %2033 = vmatprep.mubr.bf16.mxu0 0
    %2034 = vmatmul.mubr.bf16.gmra.mrb[0].mxu0 %v1996
    %v2035 = vpop.f32.mrb[0].mxu0
    %v2036 = vadd.f32 0.0, %v2035
    %v2037 = vpop.f32.mrb[0].mxu0
    %v2038 = vpop.f32.mrb[0].mxu0
    %v2039 = vpop.f32.mrb[0].mxu0
    %2040 = vdwg.mxu0
    %v2041 = vmul.f32 %v1714, 0.35355338
    %v2042 = vmul.f32 %v1760, 0.35355338
    %v2043 = vmul.f32 %v1806, 0.35355338
    %v2044 = vmul.f32 %v1852, 0.35355338
    %v2045 = vmul.f32 %v1898, 0.35355338
    %v2046 = vmul.f32 %v1944, 0.35355338
    %v2047 = vmul.f32 %v1990, 0.35355338
    %v2048 = vmul.f32 %v2036, 0.35355338
    %vm2049 = vcmask 36864
    %v2050 = vsel %vm2049, %v2041, -inf
    %2051 = vmax.xlane.f32.xlu0 %v2050
    %v2052 = vpop.xlane.xlu0 %2051
    %v2053 = vsel %vm2049, %v2042, -inf
    %2054 = vmax.xlane.f32.xlu0 %v2053
    %v2055 = vpop.xlane.xlu0 %2054
    %v2056 = vsel %vm2049, %v2043, -inf
    %2057 = vmax.xlane.f32.xlu0 %v2056
    %v2058 = vpop.xlane.xlu0 %2057
    %v2059 = vsel %vm2049, %v2044, -inf
    %2060 = vmax.xlane.f32.xlu0 %v2059
    %v2061 = vpop.xlane.xlu0 %2060
    %v2062 = vsel %vm2049, %v2045, -inf
    %2063 = vmax.xlane.f32.xlu0 %v2062
    %v2064 = vpop.xlane.xlu0 %2063
    %v2065 = vsel %vm2049, %v2046, -inf
    %2066 = vmax.xlane.f32.xlu0 %v2065
    %v2067 = vpop.xlane.xlu0 %2066
    %v2068 = vsel %vm2049, %v2047, -inf
    %2069 = vmax.xlane.f32.xlu0 %v2068
    %v2070 = vpop.xlane.xlu0 %2069
    %v2071 = vsel %vm2049, %v2048, -inf
    %2072 = vmax.xlane.f32.xlu0 %v2071
    %v2073 = vpop.xlane.xlu0 %2072
    %v2074 = vsub.f32 %v2041, %v2052
    %v2075 = vsub.f32 %v2042, %v2055
    %v2076 = vsub.f32 %v2043, %v2058
    %v2077 = vsub.f32 %v2044, %v2061
    %v2078 = vsub.f32 %v2045, %v2064
    %v2079 = vsub.f32 %v2046, %v2067
    %v2080 = vsub.f32 %v2047, %v2070
    %v2081 = vsub.f32 %v2048, %v2073
    %v2082 = vmul.f32 %v2074, 1.442695
    %v2083 = vpow.pop %v2082
    %v2084 = vmul.f32 %v2075, 1.442695
    %v2085 = vpow.pop %v2084
    %v2086 = vmul.f32 %v2076, 1.442695
    %v2087 = vpow.pop %v2086
    %v2088 = vmul.f32 %v2077, 1.442695
    %v2089 = vpow.pop %v2088
    %v2090 = vmul.f32 %v2078, 1.442695
    %v2091 = vpow.pop %v2090
    %v2092 = vmul.f32 %v2079, 1.442695
    %v2093 = vpow.pop %v2092
    %v2094 = vmul.f32 %v2080, 1.442695
    %v2095 = vpow.pop %v2094
    %v2096 = vmul.f32 %v2081, 1.442695
    %v2097 = vpow.pop %v2096
    %v2098 = vsel %vm2049, %v2083, 0.0
    %2099 = vadd.xlane.f32.xlu0 %v2098
    %v2100 = vpop.xlane.xlu0 %2099
    %v2101 = vsel %vm2049, %v2085, 0.0
    %2102 = vadd.xlane.f32.xlu0 %v2101
    %v2103 = vpop.xlane.xlu0 %2102
    %v2104 = vsel %vm2049, %v2087, 0.0
    %2105 = vadd.xlane.f32.xlu0 %v2104
    %v2106 = vpop.xlane.xlu0 %2105
    %v2107 = vsel %vm2049, %v2089, 0.0
    %2108 = vadd.xlane.f32.xlu0 %v2107
    %v2109 = vpop.xlane.xlu0 %2108
    %v2110 = vsel %vm2049, %v2091, 0.0
    %2111 = vadd.xlane.f32.xlu0 %v2110
    %v2112 = vpop.xlane.xlu0 %2111
    %v2113 = vsel %vm2049, %v2093, 0.0
    %2114 = vadd.xlane.f32.xlu0 %v2113
    %v2115 = vpop.xlane.xlu0 %2114
    %v2116 = vsel %vm2049, %v2095, 0.0
    %2117 = vadd.xlane.f32.xlu0 %v2116
    %v2118 = vpop.xlane.xlu0 %2117
    %v2119 = vsel %vm2049, %v2097, 0.0
    %2120 = vadd.xlane.f32.xlu0 %v2119
    %v2121 = vpop.xlane.xlu0 %2120
    %v2122 = vrcp.pop %v2100
    %v2123 = vmul.f32 %v2083, %v2122
    %v2124 = vrcp.pop %v2103
    %v2125 = vmul.f32 %v2085, %v2124
    %v2126 = vrcp.pop %v2106
    %v2127 = vmul.f32 %v2087, %v2126
    %v2128 = vrcp.pop %v2109
    %v2129 = vmul.f32 %v2089, %v2128
    %v2130 = vrcp.pop %v2112
    %v2131 = vmul.f32 %v2091, %v2130
    %v2132 = vrcp.pop %v2115
    %v2133 = vmul.f32 %v2093, %v2132
    %v2134 = vrcp.pop %v2118
    %v2135 = vmul.f32 %v2095, %v2134
    %v2136 = vrcp.pop %v2121
    %v2137 = vmul.f32 %v2097, %v2136
    %v2138 = vpack.c.bf16 %v2123, %v2123
    %v2139 = vpack.c.bf16 %v2125, %v2125
    %v2140 = vpack.c.bf16 %v2127, %v2127
    %v2141 = vpack.c.bf16 %v2129, %v2129
    %v2142 = vpack.c.bf16 %v2131, %v2131
    %v2143 = vpack.c.bf16 %v2133, %v2133
    %v2144 = vpack.c.bf16 %v2135, %v2135
    %v2145 = vpack.c.bf16 %v2137, %v2137
    %v2146 = vpack.c.bf16 %v1262, %v1262
    %v2147 = vpack.c.bf16 %v1314, %v1314
    %v2148 = vpack.c.bf16 %v1366, %v1366
    %v2149 = vpack.c.bf16 %v1418, %v1418
    %v2150 = vpack.c.bf16 %v1470, %v1470
    %v2151 = vpack.c.bf16 %v1522, %v1522
    %v2152 = vpack.c.bf16 %v1574, %v1574
    %v2153 = vpack.c.bf16 %v1626, %v1626
    %vm2154 = vcmask 39936
    %v2156 = vsel %vm2154, %v2138, 0
    %vm2158 = vcmask 1041408
    %v2159 = vsel %vm2158, 4294967295, 65535
    %v2160 = vsel %vm274, %v2159, 0
    %v2162 = vand.u32 %v2146, %v2160
    %2164 = vmatprep.subr.bf16.mxu0 0
    %2165 = vmatpush1.bf16.msra.mxu0 %v2162
    %2166 = vmatprep.subr.bf16.mxu0 0
    %2167 = vmatpush1.bf16.msra.mxu0 0
    %2168 = vmatprep.subr.bf16.mxu0 0
    %2169 = vmatpush1.bf16.msra.mxu0 0
    %2170 = vmatprep.subr.bf16.mxu0 0
    %2171 = vmatpush1.bf16.msra.mxu0 0
    %2172 = vmatprep.subr.bf16.mxu0 0
    %2173 = vmatpush1.bf16.msra.mxu0 0
    %2174 = vmatprep.subr.bf16.mxu0 0
    %2175 = vmatpush1.bf16.msra.mxu0 0
    %2176 = vmatprep.subr.bf16.mxu0 0
    %2177 = vmatpush1.bf16.msra.mxu0 0
    %2178 = vmatprep.subr.bf16.mxu0 0
    %2179 = vmatpush1.bf16.msra.mxu0 0
    %2180 = vmatprep.subr.bf16.mxu0 0
    %2181 = vmatpush1.bf16.msra.mxu0 0
    %2182 = vmatprep.subr.bf16.mxu0 0
    %2183 = vmatpush1.bf16.msra.mxu0 0
    %2184 = vmatprep.subr.bf16.mxu0 0
    %2185 = vmatpush1.bf16.msra.mxu0 0
    %2186 = vmatprep.subr.bf16.mxu0 0
    %2187 = vmatpush1.bf16.msra.mxu0 0
    %2188 = vmatprep.subr.bf16.mxu0 0
    %2189 = vmatpush1.bf16.msra.mxu0 0
    %2190 = vmatprep.subr.bf16.mxu0 0
    %2191 = vmatpush1.bf16.msra.mxu0 0
    %2192 = vmatprep.subr.bf16.mxu0 0
    %2193 = vmatpush1.bf16.msra.mxu0 0
    %2194 = vmatprep.subr.bf16.mxu0 0
    %2195 = vmatpush1.bf16.msra.mxu0 0
    %2196 = vmatprep.mubr.bf16.mxu0 0
    %2197 = vmatmul.mubr.bf16.gmra.mrb[0].mxu0 %v2156
    %v2198 = vpop.f32.mrb[0].mxu0
    %v2199 = vadd.f32 0.0, %v2198
    %v2200 = vpop.f32.mrb[0].mxu0
    %v2201 = vpop.f32.mrb[0].mxu0
    %v2202 = vpop.f32.mrb[0].mxu0
    %2203 = vdwg.mxu0
    %v2205 = vsel %vm2154, %v2139, 0
    %v2208 = vand.u32 %v2147, %v2160
    %2210 = vmatprep.subr.bf16.mxu0 0
    %2211 = vmatpush1.bf16.msra.mxu0 %v2208
    %2212 = vmatprep.subr.bf16.mxu0 0
    %2213 = vmatpush1.bf16.msra.mxu0 0
    %2214 = vmatprep.subr.bf16.mxu0 0
    %2215 = vmatpush1.bf16.msra.mxu0 0
    %2216 = vmatprep.subr.bf16.mxu0 0
    %2217 = vmatpush1.bf16.msra.mxu0 0
    %2218 = vmatprep.subr.bf16.mxu0 0
    %2219 = vmatpush1.bf16.msra.mxu0 0
    %2220 = vmatprep.subr.bf16.mxu0 0
    %2221 = vmatpush1.bf16.msra.mxu0 0
    %2222 = vmatprep.subr.bf16.mxu0 0
    %2223 = vmatpush1.bf16.msra.mxu0 0
    %2224 = vmatprep.subr.bf16.mxu0 0
    %2225 = vmatpush1.bf16.msra.mxu0 0
    %2226 = vmatprep.subr.bf16.mxu0 0
    %2227 = vmatpush1.bf16.msra.mxu0 0
    %2228 = vmatprep.subr.bf16.mxu0 0
    %2229 = vmatpush1.bf16.msra.mxu0 0
    %2230 = vmatprep.subr.bf16.mxu0 0
    %2231 = vmatpush1.bf16.msra.mxu0 0
    %2232 = vmatprep.subr.bf16.mxu0 0
    %2233 = vmatpush1.bf16.msra.mxu0 0
    %2234 = vmatprep.subr.bf16.mxu0 0
    %2235 = vmatpush1.bf16.msra.mxu0 0
    %2236 = vmatprep.subr.bf16.mxu0 0
    %2237 = vmatpush1.bf16.msra.mxu0 0
    %2238 = vmatprep.subr.bf16.mxu0 0
    %2239 = vmatpush1.bf16.msra.mxu0 0
    %2240 = vmatprep.subr.bf16.mxu0 0
    %2241 = vmatpush1.bf16.msra.mxu0 0
    %2242 = vmatprep.mubr.bf16.mxu0 0
    %2243 = vmatmul.mubr.bf16.gmra.mrb[0].mxu0 %v2205
    %v2244 = vpop.f32.mrb[0].mxu0
    %v2245 = vadd.f32 0.0, %v2244
    %v2246 = vpop.f32.mrb[0].mxu0
    %v2247 = vpop.f32.mrb[0].mxu0
    %v2248 = vpop.f32.mrb[0].mxu0
    %2249 = vdwg.mxu0
    %v2251 = vsel %vm2154, %v2140, 0
    %v2254 = vand.u32 %v2148, %v2160
    %2256 = vmatprep.subr.bf16.mxu0 0
    %2257 = vmatpush1.bf16.msra.mxu0 %v2254
    %2258 = vmatprep.subr.bf16.mxu0 0
    %2259 = vmatpush1.bf16.msra.mxu0 0
    %2260 = vmatprep.subr.bf16.mxu0 0
    %2261 = vmatpush1.bf16.msra.mxu0 0
    %2262 = vmatprep.subr.bf16.mxu0 0
    %2263 = vmatpush1.bf16.msra.mxu0 0
    %2264 = vmatprep.subr.bf16.mxu0 0
    %2265 = vmatpush1.bf16.msra.mxu0 0
    %2266 = vmatprep.subr.bf16.mxu0 0
    %2267 = vmatpush1.bf16.msra.mxu0 0
    %2268 = vmatprep.subr.bf16.mxu0 0
    %2269 = vmatpush1.bf16.msra.mxu0 0
    %2270 = vmatprep.subr.bf16.mxu0 0
    %2271 = vmatpush1.bf16.msra.mxu0 0
    %2272 = vmatprep.subr.bf16.mxu0 0
    %2273 = vmatpush1.bf16.msra.mxu0 0
    %2274 = vmatprep.subr.bf16.mxu0 0
    %2275 = vmatpush1.bf16.msra.mxu0 0
    %2276 = vmatprep.subr.bf16.mxu0 0
    %2277 = vmatpush1.bf16.msra.mxu0 0
    %2278 = vmatprep.subr.bf16.mxu0 0
    %2279 = vmatpush1.bf16.msra.mxu0 0
    %2280 = vmatprep.subr.bf16.mxu0 0
    %2281 = vmatpush1.bf16.msra.mxu0 0
    %2282 = vmatprep.subr.bf16.mxu0 0
    %2283 = vmatpush1.bf16.msra.mxu0 0
    %2284 = vmatprep.subr.bf16.mxu0 0
    %2285 = vmatpush1.bf16.msra.mxu0 0
    %2286 = vmatprep.subr.bf16.mxu0 0
    %2287 = vmatpush1.bf16.msra.mxu0 0
    %2288 = vmatprep.mubr.bf16.mxu0 0
    %2289 = vmatmul.mubr.bf16.gmra.mrb[0].mxu0 %v2251
    %v2290 = vpop.f32.mrb[0].mxu0
    %v2291 = vadd.f32 0.0, %v2290
    %v2292 = vpop.f32.mrb[0].mxu0
    %v2293 = vpop.f32.mrb[0].mxu0
    %v2294 = vpop.f32.mrb[0].mxu0
    %2295 = vdwg.mxu0
    %v2297 = vsel %vm2154, %v2141, 0
    %v2300 = vand.u32 %v2149, %v2160
    %2302 = vmatprep.subr.bf16.mxu0 0
    %2303 = vmatpush1.bf16.msra.mxu0 %v2300
    %2304 = vmatprep.subr.bf16.mxu0 0
    %2305 = vmatpush1.bf16.msra.mxu0 0
    %2306 = vmatprep.subr.bf16.mxu0 0
    %2307 = vmatpush1.bf16.msra.mxu0 0
    %2308 = vmatprep.subr.bf16.mxu0 0
    %2309 = vmatpush1.bf16.msra.mxu0 0
    %2310 = vmatprep.subr.bf16.mxu0 0
    %2311 = vmatpush1.bf16.msra.mxu0 0
    %2312 = vmatprep.subr.bf16.mxu0 0
    %2313 = vmatpush1.bf16.msra.mxu0 0
    %2314 = vmatprep.subr.bf16.mxu0 0
    %2315 = vmatpush1.bf16.msra.mxu0 0
    %2316 = vmatprep.subr.bf16.mxu0 0
    %2317 = vmatpush1.bf16.msra.mxu0 0
    %2318 = vmatprep.subr.bf16.mxu0 0
    %2319 = vmatpush1.bf16.msra.mxu0 0
    %2320 = vmatprep.subr.bf16.mxu0 0
    %2321 = vmatpush1.bf16.msra.mxu0 0
    %2322 = vmatprep.subr.bf16.mxu0 0
    %2323 = vmatpush1.bf16.msra.mxu0 0
    %2324 = vmatprep.subr.bf16.mxu0 0
    %2325 = vmatpush1.bf16.msra.mxu0 0
    %2326 = vmatprep.subr.bf16.mxu0 0
    %2327 = vmatpush1.bf16.msra.mxu0 0
    %2328 = vmatprep.subr.bf16.mxu0 0
    %2329 = vmatpush1.bf16.msra.mxu0 0
    %2330 = vmatprep.subr.bf16.mxu0 0
    %2331 = vmatpush1.bf16.msra.mxu0 0
    %2332 = vmatprep.subr.bf16.mxu0 0
    %2333 = vmatpush1.bf16.msra.mxu0 0
    %2334 = vmatprep.mubr.bf16.mxu0 0
    %2335 = vmatmul.mubr.bf16.gmra.mrb[0].mxu0 %v2297
    %v2336 = vpop.f32.mrb[0].mxu0
    %v2337 = vadd.f32 0.0, %v2336
    %v2338 = vpop.f32.mrb[0].mxu0
    %v2339 = vpop.f32.mrb[0].mxu0
    %v2340 = vpop.f32.mrb[0].mxu0
    %2341 = vdwg.mxu0
    %v2343 = vsel %vm2154, %v2142, 0
    %v2346 = vand.u32 %v2150, %v2160
    %2348 = vmatprep.subr.bf16.mxu0 0
    %2349 = vmatpush1.bf16.msra.mxu0 %v2346
    %2350 = vmatprep.subr.bf16.mxu0 0
    %2351 = vmatpush1.bf16.msra.mxu0 0
    %2352 = vmatprep.subr.bf16.mxu0 0
    %2353 = vmatpush1.bf16.msra.mxu0 0
    %2354 = vmatprep.subr.bf16.mxu0 0
    %2355 = vmatpush1.bf16.msra.mxu0 0
    %2356 = vmatprep.subr.bf16.mxu0 0
    %2357 = vmatpush1.bf16.msra.mxu0 0
    %2358 = vmatprep.subr.bf16.mxu0 0
    %2359 = vmatpush1.bf16.msra.mxu0 0
    %2360 = vmatprep.subr.bf16.mxu0 0
    %2361 = vmatpush1.bf16.msra.mxu0 0
    %2362 = vmatprep.subr.bf16.mxu0 0
    %2363 = vmatpush1.bf16.msra.mxu0 0
    %2364 = vmatprep.subr.bf16.mxu0 0
    %2365 = vmatpush1.bf16.msra.mxu0 0
    %2366 = vmatprep.subr.bf16.mxu0 0
    %2367 = vmatpush1.bf16.msra.mxu0 0
    %2368 = vmatprep.subr.bf16.mxu0 0
    %2369 = vmatpush1.bf16.msra.mxu0 0
    %2370 = vmatprep.subr.bf16.mxu0 0
    %2371 = vmatpush1.bf16.msra.mxu0 0
    %2372 = vmatprep.subr.bf16.mxu0 0
    %2373 = vmatpush1.bf16.msra.mxu0 0
    %2374 = vmatprep.subr.bf16.mxu0 0
    %2375 = vmatpush1.bf16.msra.mxu0 0
    %2376 = vmatprep.subr.bf16.mxu0 0
    %2377 = vmatpush1.bf16.msra.mxu0 0
    %2378 = vmatprep.subr.bf16.mxu0 0
    %2379 = vmatpush1.bf16.msra.mxu0 0
    %2380 = vmatprep.mubr.bf16.mxu0 0
    %2381 = vmatmul.mubr.bf16.gmra.mrb[0].mxu0 %v2343
    %v2382 = vpop.f32.mrb[0].mxu0
    %v2383 = vadd.f32 0.0, %v2382
    %v2384 = vpop.f32.mrb[0].mxu0
    %v2385 = vpop.f32.mrb[0].mxu0
    %v2386 = vpop.f32.mrb[0].mxu0
    %2387 = vdwg.mxu0
    %v2389 = vsel %vm2154, %v2143, 0
    %v2392 = vand.u32 %v2151, %v2160
    %2394 = vmatprep.subr.bf16.mxu0 0
    %2395 = vmatpush1.bf16.msra.mxu0 %v2392
    %2396 = vmatprep.subr.bf16.mxu0 0
    %2397 = vmatpush1.bf16.msra.mxu0 0
    %2398 = vmatprep.subr.bf16.mxu0 0
    %2399 = vmatpush1.bf16.msra.mxu0 0
    %2400 = vmatprep.subr.bf16.mxu0 0
    %2401 = vmatpush1.bf16.msra.mxu0 0
    %2402 = vmatprep.subr.bf16.mxu0 0
    %2403 = vmatpush1.bf16.msra.mxu0 0
    %2404 = vmatprep.subr.bf16.mxu0 0
    %2405 = vmatpush1.bf16.msra.mxu0 0
    %2406 = vmatprep.subr.bf16.mxu0 0
    %2407 = vmatpush1.bf16.msra.mxu0 0
    %2408 = vmatprep.subr.bf16.mxu0 0
    %2409 = vmatpush1.bf16.msra.mxu0 0
    %2410 = vmatprep.subr.bf16.mxu0 0
    %2411 = vmatpush1.bf16.msra.mxu0 0
    %2412 = vmatprep.subr.bf16.mxu0 0
    %2413 = vmatpush1.bf16.msra.mxu0 0
    %2414 = vmatprep.subr.bf16.mxu0 0
    %2415 = vmatpush1.bf16.msra.mxu0 0
    %2416 = vmatprep.subr.bf16.mxu0 0
    %2417 = vmatpush1.bf16.msra.mxu0 0
    %2418 = vmatprep.subr.bf16.mxu0 0
    %2419 = vmatpush1.bf16.msra.mxu0 0
    %2420 = vmatprep.subr.bf16.mxu0 0
    %2421 = vmatpush1.bf16.msra.mxu0 0
    %2422 = vmatprep.subr.bf16.mxu0 0
    %2423 = vmatpush1.bf16.msra.mxu0 0
    %2424 = vmatprep.subr.bf16.mxu0 0
    %2425 = vmatpush1.bf16.msra.mxu0 0
    %2426 = vmatprep.mubr.bf16.mxu0 0
    %2427 = vmatmul.mubr.bf16.gmra.mrb[0].mxu0 %v2389
    %v2428 = vpop.f32.mrb[0].mxu0
    %v2429 = vadd.f32 0.0, %v2428
    %v2430 = vpop.f32.mrb[0].mxu0
    %v2431 = vpop.f32.mrb[0].mxu0
    %v2432 = vpop.f32.mrb[0].mxu0
    %2433 = vdwg.mxu0
    %v2435 = vsel %vm2154, %v2144, 0
    %v2438 = vand.u32 %v2152, %v2160
    %2440 = vmatprep.subr.bf16.mxu0 0
    %2441 = vmatpush1.bf16.msra.mxu0 %v2438
    %2442 = vmatprep.subr.bf16.mxu0 0
    %2443 = vmatpush1.bf16.msra.mxu0 0
    %2444 = vmatprep.subr.bf16.mxu0 0
    %2445 = vmatpush1.bf16.msra.mxu0 0
    %2446 = vmatprep.subr.bf16.mxu0 0
    %2447 = vmatpush1.bf16.msra.mxu0 0
    %2448 = vmatprep.subr.bf16.mxu0 0
    %2449 = vmatpush1.bf16.msra.mxu0 0
    %2450 = vmatprep.subr.bf16.mxu0 0
    %2451 = vmatpush1.bf16.msra.mxu0 0
    %2452 = vmatprep.subr.bf16.mxu0 0
    %2453 = vmatpush1.bf16.msra.mxu0 0
    %2454 = vmatprep.subr.bf16.mxu0 0
    %2455 = vmatpush1.bf16.msra.mxu0 0
    %2456 = vmatprep.subr.bf16.mxu0 0
    %2457 = vmatpush1.bf16.msra.mxu0 0
    %2458 = vmatprep.subr.bf16.mxu0 0
    %2459 = vmatpush1.bf16.msra.mxu0 0
    %2460 = vmatprep.subr.bf16.mxu0 0
    %2461 = vmatpush1.bf16.msra.mxu0 0
    %2462 = vmatprep.subr.bf16.mxu0 0
    %2463 = vmatpush1.bf16.msra.mxu0 0
    %2464 = vmatprep.subr.bf16.mxu0 0
    %2465 = vmatpush1.bf16.msra.mxu0 0
    %2466 = vmatprep.subr.bf16.mxu0 0
    %2467 = vmatpush1.bf16.msra.mxu0 0
    %2468 = vmatprep.subr.bf16.mxu0 0
    %2469 = vmatpush1.bf16.msra.mxu0 0
    %2470 = vmatprep.subr.bf16.mxu0 0
    %2471 = vmatpush1.bf16.msra.mxu0 0
    %2472 = vmatprep.mubr.bf16.mxu0 0
    %2473 = vmatmul.mubr.bf16.gmra.mrb[0].mxu0 %v2435
    %v2474 = vpop.f32.mrb[0].mxu0
    %v2475 = vadd.f32 0.0, %v2474
    %v2476 = vpop.f32.mrb[0].mxu0
    %v2477 = vpop.f32.mrb[0].mxu0
    %v2478 = vpop.f32.mrb[0].mxu0
    %2479 = vdwg.mxu0
    %v2481 = vsel %vm2154, %v2145, 0
    %v2484 = vand.u32 %v2153, %v2160
    %2486 = vmatprep.subr.bf16.mxu0 0
    %2487 = vmatpush1.bf16.msra.mxu0 %v2484
    %2488 = vmatprep.subr.bf16.mxu0 0
    %2489 = vmatpush1.bf16.msra.mxu0 0
    %2490 = vmatprep.subr.bf16.mxu0 0
    %2491 = vmatpush1.bf16.msra.mxu0 0
    %2492 = vmatprep.subr.bf16.mxu0 0
    %2493 = vmatpush1.bf16.msra.mxu0 0
    %2494 = vmatprep.subr.bf16.mxu0 0
    %2495 = vmatpush1.bf16.msra.mxu0 0
    %2496 = vmatprep.subr.bf16.mxu0 0
    %2497 = vmatpush1.bf16.msra.mxu0 0
    %2498 = vmatprep.subr.bf16.mxu0 0
    %2499 = vmatpush1.bf16.msra.mxu0 0
    %2500 = vmatprep.subr.bf16.mxu0 0
    %2501 = vmatpush1.bf16.msra.mxu0 0
    %2502 = vmatprep.subr.bf16.mxu0 0
    %2503 = vmatpush1.bf16.msra.mxu0 0
    %2504 = vmatprep.subr.bf16.mxu0 0
    %2505 = vmatpush1.bf16.msra.mxu0 0
    %2506 = vmatprep.subr.bf16.mxu0 0
    %2507 = vmatpush1.bf16.msra.mxu0 0
    %2508 = vmatprep.subr.bf16.mxu0 0
    %2509 = vmatpush1.bf16.msra.mxu0 0
    %2510 = vmatprep.subr.bf16.mxu0 0
    %2511 = vmatpush1.bf16.msra.mxu0 0
    %2512 = vmatprep.subr.bf16.mxu0 0
    %2513 = vmatpush1.bf16.msra.mxu0 0
    %2514 = vmatprep.subr.bf16.mxu0 0
    %2515 = vmatpush1.bf16.msra.mxu0 0
    %2516 = vmatprep.subr.bf16.mxu0 0
    %2517 = vmatpush1.bf16.msra.mxu0 0
    %2518 = vmatprep.mubr.bf16.mxu0 0
    %2519 = vmatmul.mubr.bf16.gmra.mrb[0].mxu0 %v2481
    %v2520 = vpop.f32.mrb[0].mxu0
    %v2521 = vadd.f32 0.0, %v2520
    %v2522 = vpop.f32.mrb[0].mxu0
    %v2523 = vpop.f32.mrb[0].mxu0
    %v2524 = vpop.f32.mrb[0].mxu0
    %2525 = vdwg.mxu0
    %v2526 = vpack.c.bf16 %v2199, %v2199
    %v2527 = vpack.c.bf16 %v2245, %v2245
    %v2528 = vpack.c.bf16 %v2291, %v2291
    %v2529 = vpack.c.bf16 %v2337, %v2337
    %v2530 = vpack.c.bf16 %v2383, %v2383
    %v2531 = vpack.c.bf16 %v2429, %v2429
    %v2532 = vpack.c.bf16 %v2475, %v2475
    %v2533 = vpack.c.bf16 %v2521, %v2521
    %v2534 = vld [vmem:[%s8] sm:$0xf]
    %v2535 = vld [vmem:[%s8 + $0x4] sm:$0xf]
    %v2536 = vld [vmem:[%s8 + $0x8] sm:$0xf]
    %v2537 = vld [vmem:[%s8 + $0xc] sm:$0xf]
    %v2538 = vld [vmem:[%s8 + $0x10] sm:$0xf]
    %v2539 = vld [vmem:[%s8 + $0x14] sm:$0xf]
    %v2540 = vld [vmem:[%s8 + $0x18] sm:$0xf]
    %v2541 = vld [vmem:[%s8 + $0x1c] sm:$0xf]
    %v2543 = vsel %vm1672, %v2526, 0
    %vm2545 = vcmask 1043456
    %v2547 = vsel %vm2545, %v2534, 0
    %2549 = vmatprep.subr.bf16.mxu0 0
    %2550 = vmatpush1.bf16.msra.mxu0 %v2547
    %2551 = vmatprep.subr.bf16.mxu0 0
    %2552 = vmatpush1.bf16.msra.mxu0 0
    %2553 = vmatprep.subr.bf16.mxu0 0
    %2554 = vmatpush1.bf16.msra.mxu0 0
    %2555 = vmatprep.subr.bf16.mxu0 0
    %2556 = vmatpush1.bf16.msra.mxu0 0
    %2557 = vmatprep.subr.bf16.mxu0 0
    %2558 = vmatpush1.bf16.msra.mxu0 0
    %2559 = vmatprep.subr.bf16.mxu0 0
    %2560 = vmatpush1.bf16.msra.mxu0 0
    %2561 = vmatprep.subr.bf16.mxu0 0
    %2562 = vmatpush1.bf16.msra.mxu0 0
    %2563 = vmatprep.subr.bf16.mxu0 0
    %2564 = vmatpush1.bf16.msra.mxu0 0
    %2565 = vmatprep.subr.bf16.mxu0 0
    %2566 = vmatpush1.bf16.msra.mxu0 0
    %2567 = vmatprep.subr.bf16.mxu0 0
    %2568 = vmatpush1.bf16.msra.mxu0 0
    %2569 = vmatprep.subr.bf16.mxu0 0
    %2570 = vmatpush1.bf16.msra.mxu0 0
    %2571 = vmatprep.subr.bf16.mxu0 0
    %2572 = vmatpush1.bf16.msra.mxu0 0
    %2573 = vmatprep.subr.bf16.mxu0 0
    %2574 = vmatpush1.bf16.msra.mxu0 0
    %2575 = vmatprep.subr.bf16.mxu0 0
    %2576 = vmatpush1.bf16.msra.mxu0 0
    %2577 = vmatprep.subr.bf16.mxu0 0
    %2578 = vmatpush1.bf16.msra.mxu0 0
    %2579 = vmatprep.subr.bf16.mxu0 0
    %2580 = vmatpush1.bf16.msra.mxu0 0
    %2581 = vmatprep.mubr.bf16.mxu0 0
    %2582 = vmatmul.mubr.bf16.gmra.mrb[0].mxu0 %v2543
    %v2583 = vpop.f32.mrb[0].mxu0
    %v2584 = vadd.f32 0.0, %v2583
    %v2585 = vpop.f32.mrb[0].mxu0
    %v2586 = vpop.f32.mrb[0].mxu0
    %v2587 = vpop.f32.mrb[0].mxu0
    %2588 = vdwg.mxu0
    %v2590 = vsel %vm1672, %v2527, 0
    %v2593 = vsel %vm2545, %v2535, 0
    %2595 = vmatprep.subr.bf16.mxu0 0
    %2596 = vmatpush1.bf16.msra.mxu0 %v2593
    %2597 = vmatprep.subr.bf16.mxu0 0
    %2598 = vmatpush1.bf16.msra.mxu0 0
    %2599 = vmatprep.subr.bf16.mxu0 0
    %2600 = vmatpush1.bf16.msra.mxu0 0
    %2601 = vmatprep.subr.bf16.mxu0 0
    %2602 = vmatpush1.bf16.msra.mxu0 0
    %2603 = vmatprep.subr.bf16.mxu0 0
    %2604 = vmatpush1.bf16.msra.mxu0 0
    %2605 = vmatprep.subr.bf16.mxu0 0
    %2606 = vmatpush1.bf16.msra.mxu0 0
    %2607 = vmatprep.subr.bf16.mxu0 0
    %2608 = vmatpush1.bf16.msra.mxu0 0
    %2609 = vmatprep.subr.bf16.mxu0 0
    %2610 = vmatpush1.bf16.msra.mxu0 0
    %2611 = vmatprep.subr.bf16.mxu0 0
    %2612 = vmatpush1.bf16.msra.mxu0 0
    %2613 = vmatprep.subr.bf16.mxu0 0
    %2614 = vmatpush1.bf16.msra.mxu0 0
    %2615 = vmatprep.subr.bf16.mxu0 0
    %2616 = vmatpush1.bf16.msra.mxu0 0
    %2617 = vmatprep.subr.bf16.mxu0 0
    %2618 = vmatpush1.bf16.msra.mxu0 0
    %2619 = vmatprep.subr.bf16.mxu0 0
    %2620 = vmatpush1.bf16.msra.mxu0 0
    %2621 = vmatprep.subr.bf16.mxu0 0
    %2622 = vmatpush1.bf16.msra.mxu0 0
    %2623 = vmatprep.subr.bf16.mxu0 0
    %2624 = vmatpush1.bf16.msra.mxu0 0
    %2625 = vmatprep.subr.bf16.mxu0 0
    %2626 = vmatpush1.bf16.msra.mxu0 0
    %2627 = vmatprep.mubr.bf16.mxu0 0
    %2628 = vmatmul.mubr.bf16.gmra.mrb[0].mxu0 %v2590
    %v2629 = vpop.f32.mrb[0].mxu0
    %v2630 = vadd.f32 0.0, %v2629
    %v2631 = vpop.f32.mrb[0].mxu0
    %v2632 = vpop.f32.mrb[0].mxu0
    %v2633 = vpop.f32.mrb[0].mxu0
    %2634 = vdwg.mxu0
    %v2636 = vsel %vm1672, %v2528, 0
    %v2639 = vsel %vm2545, %v2536, 0
    %2641 = vmatprep.subr.bf16.mxu0 0
    %2642 = vmatpush1.bf16.msra.mxu0 %v2639
    %2643 = vmatprep.subr.bf16.mxu0 0
    %2644 = vmatpush1.bf16.msra.mxu0 0
    %2645 = vmatprep.subr.bf16.mxu0 0
    %2646 = vmatpush1.bf16.msra.mxu0 0
    %2647 = vmatprep.subr.bf16.mxu0 0
    %2648 = vmatpush1.bf16.msra.mxu0 0
    %2649 = vmatprep.subr.bf16.mxu0 0
    %2650 = vmatpush1.bf16.msra.mxu0 0
    %2651 = vmatprep.subr.bf16.mxu0 0
    %2652 = vmatpush1.bf16.msra.mxu0 0
    %2653 = vmatprep.subr.bf16.mxu0 0
    %2654 = vmatpush1.bf16.msra.mxu0 0
    %2655 = vmatprep.subr.bf16.mxu0 0
    %2656 = vmatpush1.bf16.msra.mxu0 0
    %2657 = vmatprep.subr.bf16.mxu0 0
    %2658 = vmatpush1.bf16.msra.mxu0 0
    %2659 = vmatprep.subr.bf16.mxu0 0
    %2660 = vmatpush1.bf16.msra.mxu0 0
    %2661 = vmatprep.subr.bf16.mxu0 0
    %2662 = vmatpush1.bf16.msra.mxu0 0
    %2663 = vmatprep.subr.bf16.mxu0 0
    %2664 = vmatpush1.bf16.msra.mxu0 0
    %2665 = vmatprep.subr.bf16.mxu0 0
    %2666 = vmatpush1.bf16.msra.mxu0 0
    %2667 = vmatprep.subr.bf16.mxu0 0
    %2668 = vmatpush1.bf16.msra.mxu0 0
    %2669 = vmatprep.subr.bf16.mxu0 0
    %2670 = vmatpush1.bf16.msra.mxu0 0
    %2671 = vmatprep.subr.bf16.mxu0 0
    %2672 = vmatpush1.bf16.msra.mxu0 0
    %2673 = vmatprep.mubr.bf16.mxu0 0
    %2674 = vmatmul.mubr.bf16.gmra.mrb[0].mxu0 %v2636
    %v2675 = vpop.f32.mrb[0].mxu0
    %v2676 = vadd.f32 0.0, %v2675
    %v2677 = vpop.f32.mrb[0].mxu0
    %v2678 = vpop.f32.mrb[0].mxu0
    %v2679 = vpop.f32.mrb[0].mxu0
    %2680 = vdwg.mxu0
    %v2682 = vsel %vm1672, %v2529, 0
    %v2685 = vsel %vm2545, %v2537, 0
    %2687 = vmatprep.subr.bf16.mxu0 0
    %2688 = vmatpush1.bf16.msra.mxu0 %v2685
    %2689 = vmatprep.subr.bf16.mxu0 0
    %2690 = vmatpush1.bf16.msra.mxu0 0
    %2691 = vmatprep.subr.bf16.mxu0 0
    %2692 = vmatpush1.bf16.msra.mxu0 0
    %2693 = vmatprep.subr.bf16.mxu0 0
    %2694 = vmatpush1.bf16.msra.mxu0 0
    %2695 = vmatprep.subr.bf16.mxu0 0
    %2696 = vmatpush1.bf16.msra.mxu0 0
    %2697 = vmatprep.subr.bf16.mxu0 0
    %2698 = vmatpush1.bf16.msra.mxu0 0
    %2699 = vmatprep.subr.bf16.mxu0 0
    %2700 = vmatpush1.bf16.msra.mxu0 0
    %2701 = vmatprep.subr.bf16.mxu0 0
    %2702 = vmatpush1.bf16.msra.mxu0 0
    %2703 = vmatprep.subr.bf16.mxu0 0
    %2704 = vmatpush1.bf16.msra.mxu0 0
    %2705 = vmatprep.subr.bf16.mxu0 0
    %2706 = vmatpush1.bf16.msra.mxu0 0
    %2707 = vmatprep.subr.bf16.mxu0 0
    %2708 = vmatpush1.bf16.msra.mxu0 0
    %2709 = vmatprep.subr.bf16.mxu0 0
    %2710 = vmatpush1.bf16.msra.mxu0 0
    %2711 = vmatprep.subr.bf16.mxu0 0
    %2712 = vmatpush1.bf16.msra.mxu0 0
    %2713 = vmatprep.subr.bf16.mxu0 0
    %2714 = vmatpush1.bf16.msra.mxu0 0
    %2715 = vmatprep.subr.bf16.mxu0 0
    %2716 = vmatpush1.bf16.msra.mxu0 0
    %2717 = vmatprep.subr.bf16.mxu0 0
    %2718 = vmatpush1.bf16.msra.mxu0 0
    %2719 = vmatprep.mubr.bf16.mxu0 0
    %2720 = vmatmul.mubr.bf16.gmra.mrb[0].mxu0 %v2682
    %v2721 = vpop.f32.mrb[0].mxu0
    %v2722 = vadd.f32 0.0, %v2721
    %v2723 = vpop.f32.mrb[0].mxu0
    %v2724 = vpop.f32.mrb[0].mxu0
    %v2725 = vpop.f32.mrb[0].mxu0
    %2726 = vdwg.mxu0
    %v2728 = vsel %vm1672, %v2530, 0
    %v2731 = vsel %vm2545, %v2538, 0
    %2733 = vmatprep.subr.bf16.mxu0 0
    %2734 = vmatpush1.bf16.msra.mxu0 %v2731
    %2735 = vmatprep.subr.bf16.mxu0 0
    %2736 = vmatpush1.bf16.msra.mxu0 0
    %2737 = vmatprep.subr.bf16.mxu0 0
    %2738 = vmatpush1.bf16.msra.mxu0 0
    %2739 = vmatprep.subr.bf16.mxu0 0
    %2740 = vmatpush1.bf16.msra.mxu0 0
    %2741 = vmatprep.subr.bf16.mxu0 0
    %2742 = vmatpush1.bf16.msra.mxu0 0
    %2743 = vmatprep.subr.bf16.mxu0 0
    %2744 = vmatpush1.bf16.msra.mxu0 0
    %2745 = vmatprep.subr.bf16.mxu0 0
    %2746 = vmatpush1.bf16.msra.mxu0 0
    %2747 = vmatprep.subr.bf16.mxu0 0
    %2748 = vmatpush1.bf16.msra.mxu0 0
    %2749 = vmatprep.subr.bf16.mxu0 0
    %2750 = vmatpush1.bf16.msra.mxu0 0
    %2751 = vmatprep.subr.bf16.mxu0 0
    %2752 = vmatpush1.bf16.msra.mxu0 0
    %2753 = vmatprep.subr.bf16.mxu0 0
    %2754 = vmatpush1.bf16.msra.mxu0 0
    %2755 = vmatprep.subr.bf16.mxu0 0
    %2756 = vmatpush1.bf16.msra.mxu0 0
    %2757 = vmatprep.subr.bf16.mxu0 0
    %2758 = vmatpush1.bf16.msra.mxu0 0
    %2759 = vmatprep.subr.bf16.mxu0 0
    %2760 = vmatpush1.bf16.msra.mxu0 0
    %2761 = vmatprep.subr.bf16.mxu0 0
    %2762 = vmatpush1.bf16.msra.mxu0 0
    %2763 = vmatprep.subr.bf16.mxu0 0
    %2764 = vmatpush1.bf16.msra.mxu0 0
    %2765 = vmatprep.mubr.bf16.mxu0 0
    %2766 = vmatmul.mubr.bf16.gmra.mrb[0].mxu0 %v2728
    %v2767 = vpop.f32.mrb[0].mxu0
    %v2768 = vadd.f32 0.0, %v2767
    %v2769 = vpop.f32.mrb[0].mxu0
    %v2770 = vpop.f32.mrb[0].mxu0
    %v2771 = vpop.f32.mrb[0].mxu0
    %2772 = vdwg.mxu0
    %v2774 = vsel %vm1672, %v2531, 0
    %v2777 = vsel %vm2545, %v2539, 0
    %2779 = vmatprep.subr.bf16.mxu0 0
    %2780 = vmatpush1.bf16.msra.mxu0 %v2777
    %2781 = vmatprep.subr.bf16.mxu0 0
    %2782 = vmatpush1.bf16.msra.mxu0 0
    %2783 = vmatprep.subr.bf16.mxu0 0
    %2784 = vmatpush1.bf16.msra.mxu0 0
    %2785 = vmatprep.subr.bf16.mxu0 0
    %2786 = vmatpush1.bf16.msra.mxu0 0
    %2787 = vmatprep.subr.bf16.mxu0 0
    %2788 = vmatpush1.bf16.msra.mxu0 0
    %2789 = vmatprep.subr.bf16.mxu0 0
    %2790 = vmatpush1.bf16.msra.mxu0 0
    %2791 = vmatprep.subr.bf16.mxu0 0
    %2792 = vmatpush1.bf16.msra.mxu0 0
    %2793 = vmatprep.subr.bf16.mxu0 0
    %2794 = vmatpush1.bf16.msra.mxu0 0
    %2795 = vmatprep.subr.bf16.mxu0 0
    %2796 = vmatpush1.bf16.msra.mxu0 0
    %2797 = vmatprep.subr.bf16.mxu0 0
    %2798 = vmatpush1.bf16.msra.mxu0 0
    %2799 = vmatprep.subr.bf16.mxu0 0
    %2800 = vmatpush1.bf16.msra.mxu0 0
    %2801 = vmatprep.subr.bf16.mxu0 0
    %2802 = vmatpush1.bf16.msra.mxu0 0
    %2803 = vmatprep.subr.bf16.mxu0 0
    %2804 = vmatpush1.bf16.msra.mxu0 0
    %2805 = vmatprep.subr.bf16.mxu0 0
    %2806 = vmatpush1.bf16.msra.mxu0 0
    %2807 = vmatprep.subr.bf16.mxu0 0
    %2808 = vmatpush1.bf16.msra.mxu0 0
    %2809 = vmatprep.subr.bf16.mxu0 0
    %2810 = vmatpush1.bf16.msra.mxu0 0
    %2811 = vmatprep.mubr.bf16.mxu0 0
    %2812 = vmatmul.mubr.bf16.gmra.mrb[0].mxu0 %v2774
    %v2813 = vpop.f32.mrb[0].mxu0
    %v2814 = vadd.f32 0.0, %v2813
    %v2815 = vpop.f32.mrb[0].mxu0
    %v2816 = vpop.f32.mrb[0].mxu0
    %v2817 = vpop.f32.mrb[0].mxu0
    %2818 = vdwg.mxu0
    %v2820 = vsel %vm1672, %v2532, 0
    %v2823 = vsel %vm2545, %v2540, 0
    %2825 = vmatprep.subr.bf16.mxu0 0
    %2826 = vmatpush1.bf16.msra.mxu0 %v2823
    %2827 = vmatprep.subr.bf16.mxu0 0
    %2828 = vmatpush1.bf16.msra.mxu0 0
    %2829 = vmatprep.subr.bf16.mxu0 0
    %2830 = vmatpush1.bf16.msra.mxu0 0
    %2831 = vmatprep.subr.bf16.mxu0 0
    %2832 = vmatpush1.bf16.msra.mxu0 0
    %2833 = vmatprep.subr.bf16.mxu0 0
    %2834 = vmatpush1.bf16.msra.mxu0 0
    %2835 = vmatprep.subr.bf16.mxu0 0
    %2836 = vmatpush1.bf16.msra.mxu0 0
    %2837 = vmatprep.subr.bf16.mxu0 0
    %2838 = vmatpush1.bf16.msra.mxu0 0
    %2839 = vmatprep.subr.bf16.mxu0 0
    %2840 = vmatpush1.bf16.msra.mxu0 0
    %2841 = vmatprep.subr.bf16.mxu0 0
    %2842 = vmatpush1.bf16.msra.mxu0 0
    %2843 = vmatprep.subr.bf16.mxu0 0
    %2844 = vmatpush1.bf16.msra.mxu0 0
    %2845 = vmatprep.subr.bf16.mxu0 0
    %2846 = vmatpush1.bf16.msra.mxu0 0
    %2847 = vmatprep.subr.bf16.mxu0 0
    %2848 = vmatpush1.bf16.msra.mxu0 0
    %2849 = vmatprep.subr.bf16.mxu0 0
    %2850 = vmatpush1.bf16.msra.mxu0 0
    %2851 = vmatprep.subr.bf16.mxu0 0
    %2852 = vmatpush1.bf16.msra.mxu0 0
    %2853 = vmatprep.subr.bf16.mxu0 0
    %2854 = vmatpush1.bf16.msra.mxu0 0
    %2855 = vmatprep.subr.bf16.mxu0 0
    %2856 = vmatpush1.bf16.msra.mxu0 0
    %2857 = vmatprep.mubr.bf16.mxu0 0
    %2858 = vmatmul.mubr.bf16.gmra.mrb[0].mxu0 %v2820
    %v2859 = vpop.f32.mrb[0].mxu0
    %v2860 = vadd.f32 0.0, %v2859
    %v2861 = vpop.f32.mrb[0].mxu0
    %v2862 = vpop.f32.mrb[0].mxu0
    %v2863 = vpop.f32.mrb[0].mxu0
    %2864 = vdwg.mxu0
    %v2866 = vsel %vm1672, %v2533, 0
    %v2869 = vsel %vm2545, %v2541, 0
    %2871 = vmatprep.subr.bf16.mxu0 0
    %2872 = vmatpush1.bf16.msra.mxu0 %v2869
    %2873 = vmatprep.subr.bf16.mxu0 0
    %2874 = vmatpush1.bf16.msra.mxu0 0
    %2875 = vmatprep.subr.bf16.mxu0 0
    %2876 = vmatpush1.bf16.msra.mxu0 0
    %2877 = vmatprep.subr.bf16.mxu0 0
    %2878 = vmatpush1.bf16.msra.mxu0 0
    %2879 = vmatprep.subr.bf16.mxu0 0
    %2880 = vmatpush1.bf16.msra.mxu0 0
    %2881 = vmatprep.subr.bf16.mxu0 0
    %2882 = vmatpush1.bf16.msra.mxu0 0
    %2883 = vmatprep.subr.bf16.mxu0 0
    %2884 = vmatpush1.bf16.msra.mxu0 0
    %2885 = vmatprep.subr.bf16.mxu0 0
    %2886 = vmatpush1.bf16.msra.mxu0 0
    %2887 = vmatprep.subr.bf16.mxu0 0
    %2888 = vmatpush1.bf16.msra.mxu0 0
    %2889 = vmatprep.subr.bf16.mxu0 0
    %2890 = vmatpush1.bf16.msra.mxu0 0
    %2891 = vmatprep.subr.bf16.mxu0 0
    %2892 = vmatpush1.bf16.msra.mxu0 0
    %2893 = vmatprep.subr.bf16.mxu0 0
    %2894 = vmatpush1.bf16.msra.mxu0 0
    %2895 = vmatprep.subr.bf16.mxu0 0
    %2896 = vmatpush1.bf16.msra.mxu0 0
    %2897 = vmatprep.subr.bf16.mxu0 0
    %2898 = vmatpush1.bf16.msra.mxu0 0
    %2899 = vmatprep.subr.bf16.mxu0 0
    %2900 = vmatpush1.bf16.msra.mxu0 0
    %2901 = vmatprep.subr.bf16.mxu0 0
    %2902 = vmatpush1.bf16.msra.mxu0 0
    %2903 = vmatprep.mubr.bf16.mxu0 0
    %2904 = vmatmul.mubr.bf16.gmra.mrb[0].mxu0 %v2866
    %v2905 = vpop.f32.mrb[0].mxu0
    %v2906 = vadd.f32 0.0, %v2905
    %v2907 = vpop.f32.mrb[0].mxu0
    %v2908 = vpop.f32.mrb[0].mxu0
    %v2909 = vpop.f32.mrb[0].mxu0
    %2910 = vdwg.mxu0
    %vm2911 = vcmask 258048
    %v2912 = vsel %vm2911, %v2584, 0.0
    %v2913 = vsel %vm2911, %v2630, 0.0
    %v2914 = vadd.f32 %v2912, %v2913
    %v2915 = vsel %vm2911, %v2676, 0.0
    %v2916 = vadd.f32 %v2914, %v2915
    %v2917 = vsel %vm2911, %v2722, 0.0
    %v2918 = vadd.f32 %v2916, %v2917
    %v2919 = vsel %vm2911, %v2768, 0.0
    %v2920 = vsel %vm2911, %v2814, 0.0
    %v2921 = vadd.f32 %v2919, %v2920
    %v2922 = vsel %vm2911, %v2860, 0.0
    %v2923 = vadd.f32 %v2921, %v2922
    %v2924 = vsel %vm2911, %v2906, 0.0
    %v2925 = vadd.f32 %v2923, %v2924
    %v2927 = vrot.slane %v2925, 3
    %vm2929 = vcmask 1044480
    %v2930 = vsel %vm2929, %v2918, %v2927
    %v2931 = vadd.f32 %v219, %v2930
    %v2932 = vadd.f32 %v222, %v2927
    %v2933 = vld [vmem:[%s9] sm:$0x1]
    %v2935 = vlaneseq
    %v2936 = vshrl.u32 %v2935, 7
    %v2937 = vsub.s32 0, %v2936
    %v2938 = vrot.slane %v2933, %v2937
    %v2940 = vadd.f32 %v2931, %v2938
    %v2941 = vadd.f32 %v2932, %v2938
    %v2942 = vsel %vm225, %v2940, 0.0
    %2943 = vadd.xlane.f32.xlu0 %v2942
    %v2944 = vpop.xlane.xlu0 %2943
    %v2945 = vsel %vm229, %v2941, 0.0
    %2946 = vadd.xlane.f32.xlu0 %v2945
    %v2947 = vpop.xlane.xlu0 %2946
    %v2948 = vmul.f32 %v2944, %v233
    %v2949 = vmul.f32 %v2947, %v233
    %v2950 = vsub.f32 %v2940, %v2948
    %v2951 = vsub.f32 %v2941, %v2949
    %v2952 = vmul.f32 %v2950, %v2950
    %v2953 = vmul.f32 %v2951, %v2951
    %v2954 = vsel %vm225, %v2952, 0.0
    %2955 = vadd.xlane.f32.xlu0 %v2954
    %v2956 = vpop.xlane.xlu0 %2955
    %v2957 = vsel %vm229, %v2953, 0.0
    %2958 = vadd.xlane.f32.xlu0 %v2957
    %v2959 = vpop.xlane.xlu0 %2958
    %v2960 = vmul.f32 %v2956, %v233
    %v2961 = vmul.f32 %v2959, %v233
    %v2962 = vadd.f32 %v2960, 1e-06
    %v2963 = vadd.f32 %v2961, 1e-06
    %v2964 = vrsqrt.pop %v2962
    %v2965 = vrsqrt.pop %v2963
    %v2966 = vmul.f32 %v2950, %v2964
    %v2967 = vmul.f32 %v2951, %v2965
    %v2968 = vld [vmem:[%s10] sm:$0x1]
    %v2970 = vlaneseq
    %v2971 = vshrl.u32 %v2970, 7
    %v2972 = vsub.s32 0, %v2971
    %v2973 = vrot.slane %v2968, %v2972
    %v2975 = vmul.f32 %v2966, %v2973
    %v2976 = vmul.f32 %v2967, %v2973
    %v2977 = vld [vmem:[%s11] sm:$0x1]
    %v2979 = vlaneseq
    %v2980 = vshrl.u32 %v2979, 7
    %v2981 = vsub.s32 0, %v2980
    %v2982 = vrot.slane %v2977, %v2981
    %v2984 = vadd.f32 %v2975, %v2982
    %v2985 = vadd.f32 %v2976, %v2982
    %v2986 = vpack.c.bf16 %v2985, %v2984
    %v2987 = vld [vmem:[%s12] sm:$0xf]
    %v2988 = vld [vmem:[%s12 + $0x4] sm:$0xf]
    %v2989 = vld [vmem:[%s12 + $0x8] sm:$0xf]
    %v2990 = vld [vmem:[%s12 + $0xc] sm:$0xf]
    %v2991 = vld [vmem:[%s13] sm:$0x1]
    %v2993 = vlaneseq
    %v2994 = vshrl.u32 %v2993, 7
    %v2995 = vsub.s32 0, %v2994
    %v2996 = vrot.slane %v2991, %v2995
    %v3002 = vunpack.c.l.b16 %v2987
    %v3003 = vunpack.c.l.b16 %v2988
    %v3004 = vunpack.c.l.b16 %v2989
    %v3005 = vunpack.c.l.b16 %v2990
    %v3006 = vpack.c.b16 %v3003, %v3002
    %v3007 = vpack.c.b16 %v3005, %v3004
    %v3011 = vsel %vm225, %v2986, 0
    %3013 = vmatprep.subr.bf16.mxu0 0
    %3014 = vmatpush1.bf16.msra.mxu0 %v3006
    %3015 = vmatprep.subr.bf16.mxu0 0
    %3016 = vmatpush1.bf16.msra.mxu0 %v3007
    %3017 = vmatprep.subr.bf16.mxu0 0
    %3018 = vmatpush1.bf16.msra.mxu0 0
    %3019 = vmatprep.subr.bf16.mxu0 0
    %3020 = vmatpush1.bf16.msra.mxu0 0
    %3021 = vmatprep.subr.bf16.mxu0 0
    %3022 = vmatpush1.bf16.msra.mxu0 0
    %3023 = vmatprep.subr.bf16.mxu0 0
    %3024 = vmatpush1.bf16.msra.mxu0 0
    %3025 = vmatprep.subr.bf16.mxu0 0
    %3026 = vmatpush1.bf16.msra.mxu0 0
    %3027 = vmatprep.subr.bf16.mxu0 0
    %3028 = vmatpush1.bf16.msra.mxu0 0
    %3029 = vmatprep.subr.bf16.mxu0 0
    %3030 = vmatpush1.bf16.msra.mxu0 0
    %3031 = vmatprep.subr.bf16.mxu0 0
    %3032 = vmatpush1.bf16.msra.mxu0 0
    %3033 = vmatprep.subr.bf16.mxu0 0
    %3034 = vmatpush1.bf16.msra.mxu0 0
    %3035 = vmatprep.subr.bf16.mxu0 0
    %3036 = vmatpush1.bf16.msra.mxu0 0
    %3037 = vmatprep.subr.bf16.mxu0 0
    %3038 = vmatpush1.bf16.msra.mxu0 0
    %3039 = vmatprep.subr.bf16.mxu0 0
    %3040 = vmatpush1.bf16.msra.mxu0 0
    %3041 = vmatprep.subr.bf16.mxu0 0
    %3042 = vmatpush1.bf16.msra.mxu0 0
    %3043 = vmatprep.subr.bf16.mxu0 0
    %3044 = vmatpush1.bf16.msra.mxu0 0
    %3045 = vmatprep.mubr.bf16.mxu0 0
    %3046 = vmatmul.mubr.bf16.gmra.mrb[0].mxu0 %v3011
    %v3047 = vpop.f32.mrb[0].mxu0
    %v3048 = vadd.f32 %v2996, %v3047
    %v3049 = vpop.f32.mrb[0].mxu0
    %v3050 = vpop.f32.mrb[0].mxu0
    %v3051 = vadd.f32 %v2996, %v3050
    %v3052 = vpop.f32.mrb[0].mxu0
    %3053 = vdwg.mxu0
    %v3054 = vmul.f32 %v3048, 0.5
    %v3055 = vmul.f32 %v3051, 0.5
    %v3056 = vmul.f32 %v3048, 0.70710677
    %v3057 = vmul.f32 %v3051, 0.70710677
    %v3058 = verf.f32.pop %v3056
    %v3059 = verf.f32.pop %v3057
    %v3060 = vadd.f32 %v3058, 1.0
    %v3061 = vadd.f32 %v3059, 1.0
    %v3062 = vmul.f32 %v3054, %v3060
    %v3063 = vmul.f32 %v3055, %v3061
    %v3064 = vpack.c.bf16 %v3063, %v3062
    %v3065 = vld [vmem:[%s14] sm:$0xf]
    %v3066 = vld [vmem:[%s14 + $0x4] sm:$0xf]
    %v3067 = vld [vmem:[%s14 + $0x8] sm:$0xf]
    %v3068 = vld [vmem:[%s14 + $0xc] sm:$0xf]
    %v3069 = vld [vmem:[%s14 + $0x10] sm:$0xf]
    %v3070 = vld [vmem:[%s14 + $0x14] sm:$0xf]
    %v3071 = vld [vmem:[%s14 + $0x18] sm:$0xf]
    %v3072 = vld [vmem:[%s14 + $0x1c] sm:$0xf]
    %v3073 = vld [vmem:[%s14 + $0x20] sm:$0xf]
    %v3074 = vld [vmem:[%s14 + $0x24] sm:$0xf]
    %v3075 = vld [vmem:[%s14 + $0x28] sm:$0xf]
    %v3076 = vld [vmem:[%s14 + $0x2c] sm:$0xf]
    %v3077 = vld [vmem:[%s14 + $0x30] sm:$0xf]
    %v3078 = vld [vmem:[%s14 + $0x34] sm:$0xf]
    %v3079 = vld [vmem:[%s14 + $0x38] sm:$0xf]
    %v3080 = vld [vmem:[%s14 + $0x3c] sm:$0xf]
    %v3097 = vunpack.c.l.b16 %v3065
    %v3098 = vunpack.c.l.b16 %v3066
    %v3099 = vunpack.c.l.b16 %v3067
    %v3100 = vunpack.c.l.b16 %v3068
    %v3101 = vunpack.c.l.b16 %v3069
    %v3102 = vunpack.c.l.b16 %v3070
    %v3103 = vunpack.c.l.b16 %v3071
    %v3104 = vunpack.c.l.b16 %v3072
    %v3105 = vunpack.c.l.b16 %v3073
    %v3106 = vunpack.c.l.b16 %v3074
    %v3107 = vunpack.c.l.b16 %v3075
    %v3108 = vunpack.c.l.b16 %v3076
    %v3109 = vunpack.c.l.b16 %v3077
    %v3110 = vunpack.c.l.b16 %v3078
    %v3111 = vunpack.c.l.b16 %v3079
    %v3112 = vunpack.c.l.b16 %v3080
    %v3113 = vpack.c.b16 %v3098, %v3097
    %v3114 = vpack.c.b16 %v3100, %v3099
    %v3115 = vpack.c.b16 %v3102, %v3101
    %v3116 = vpack.c.b16 %v3104, %v3103
    %v3117 = vpack.c.b16 %v3106, %v3105
    %v3118 = vpack.c.b16 %v3108, %v3107
    %v3119 = vpack.c.b16 %v3110, %v3109
    %v3120 = vpack.c.b16 %v3112, %v3111
    %3129 = vmatprep.subr.bf16.mxu0 0
    %3130 = vmatpush1.bf16.msra.mxu0 %v3113
    %3131 = vmatprep.subr.bf16.mxu0 0
    %3132 = vmatpush1.bf16.msra.mxu0 %v3114
    %3133 = vmatprep.subr.bf16.mxu0 0
    %3134 = vmatpush1.bf16.msra.mxu0 %v3115
    %3135 = vmatprep.subr.bf16.mxu0 0
    %3136 = vmatpush1.bf16.msra.mxu0 %v3116
    %3137 = vmatprep.subr.bf16.mxu0 0
    %3138 = vmatpush1.bf16.msra.mxu0 %v3117
    %3139 = vmatprep.subr.bf16.mxu0 0
    %3140 = vmatpush1.bf16.msra.mxu0 %v3118
    %3141 = vmatprep.subr.bf16.mxu0 0
    %3142 = vmatpush1.bf16.msra.mxu0 %v3119
    %3143 = vmatprep.subr.bf16.mxu0 0
    %3144 = vmatpush1.bf16.msra.mxu0 %v3120
    %3145 = vmatprep.subr.bf16.mxu0 0
    %3146 = vmatpush1.bf16.msra.mxu0 0
    %3147 = vmatprep.subr.bf16.mxu0 0
    %3148 = vmatpush1.bf16.msra.mxu0 0
    %3149 = vmatprep.subr.bf16.mxu0 0
    %3150 = vmatpush1.bf16.msra.mxu0 0
    %3151 = vmatprep.subr.bf16.mxu0 0
    %3152 = vmatpush1.bf16.msra.mxu0 0
    %3153 = vmatprep.subr.bf16.mxu0 0
    %3154 = vmatpush1.bf16.msra.mxu0 0
    %3155 = vmatprep.subr.bf16.mxu0 0
    %3156 = vmatpush1.bf16.msra.mxu0 0
    %3157 = vmatprep.subr.bf16.mxu0 0
    %3158 = vmatpush1.bf16.msra.mxu0 0
    %3159 = vmatprep.subr.bf16.mxu0 0
    %3160 = vmatpush1.bf16.msra.mxu0 0
    %3161 = vmatprep.mubr.bf16.mxu0 0
    %3162 = vmatmul.mubr.bf16.gmra.mrb[0].mxu0 %v3064
    %v3163 = vpop.f32.mrb[0].mxu0
    %v3164 = vadd.f32 0.0, %v3163
    %v3165 = vpop.f32.mrb[0].mxu0
    %v3166 = vpop.f32.mrb[0].mxu0
    %v3167 = vpop.f32.mrb[0].mxu0
    %3168 = vdwg.mxu0
    %v3169 = vadd.f32 %v2940, %v3164
    %v3170 = vld [vmem:[%s15] sm:$0x1]
    %v3172 = vlaneseq
    %v3173 = vshrl.u32 %v3172, 7
    %v3174 = vsub.s32 0, %v3173
    %v3175 = vrot.slane %v3170, %v3174
    %v3177 = vadd.f32 %v3169, %v3175
    %v3179 = vrot.slane %v3177, 4
    %vm3181 = vcmask 1040384
    %v3182 = vsel %vm3181, %v3177, %v3179
    %v3183 = vsel %vm229, %v3182, 0.0
    %3184 = vadd.xlane.f32.xlu0 %v3183
    %v3185 = vpop.xlane.xlu0 %3184
    %v3186 = vmul.f32 %v3185, %v233
    %v3187 = vsub.f32 %v3182, %v3186
    %v3188 = vmul.f32 %v3187, %v3187
    %v3189 = vsel %vm229, %v3188, 0.0
    %3190 = vadd.xlane.f32.xlu0 %v3189
    %v3191 = vpop.xlane.xlu0 %3190
    %v3192 = vmul.f32 %v3191, %v233
    %v3193 = vadd.f32 %v3192, 1e-06
    %v3194 = vrsqrt.pop %v3193
    %v3195 = vmul.f32 %v3187, %v3194
    %v3196 = vld [vmem:[%s16] sm:$0x1]
    %v3198 = vlaneseq
    %v3199 = vshrl.u32 %v3198, 7
    %v3200 = vsub.s32 0, %v3199
    %v3201 = vrot.slane %v3196, %v3200
    %v3203 = vmul.f32 %v3195, %v3201
    %v3204 = vld [vmem:[%s17] sm:$0x1]
    %v3206 = vlaneseq
    %v3207 = vshrl.u32 %v3206, 7
    %v3208 = vsub.s32 0, %v3207
    %v3209 = vrot.slane %v3204, %v3208
    %v3211 = vadd.f32 %v3203, %v3209
    %v3212 = vpack.c.bf16 %v3211, %v3211
    %v3213 = vld [vmem:[%s18] sm:$0xf]
    %v3214 = vld [vmem:[%s18 + $0x4] sm:$0xf]
    %v3215 = vld [vmem:[%s18 + $0x8] sm:$0xf]
    %v3216 = vld [vmem:[%s18 + $0xc] sm:$0xf]
    %v3217 = vld [vmem:[%s19] sm:$0x1]
    %v3219 = vlaneseq
    %v3220 = vshrl.u32 %v3219, 7
    %v3221 = vsub.s32 0, %v3220
    %v3222 = vrot.slane %v3217, %v3221
    %v3228 = vunpack.c.l.b16 %v3213
    %v3229 = vunpack.c.l.b16 %v3214
    %v3230 = vunpack.c.l.b16 %v3215
    %v3231 = vunpack.c.l.b16 %v3216
    %v3232 = vpack.c.b16 %v3229, %v3228
    %v3233 = vpack.c.b16 %v3231, %v3230
    %v3237 = vsel %vm225, %v3212, 0
    %3239 = vmatprep.subr.bf16.mxu0 0
    %3240 = vmatpush1.bf16.msra.mxu0 %v3232
    %3241 = vmatprep.subr.bf16.mxu0 0
    %3242 = vmatpush1.bf16.msra.mxu0 %v3233
    %3243 = vmatprep.subr.bf16.mxu0 0
    %3244 = vmatpush1.bf16.msra.mxu0 0
    %3245 = vmatprep.subr.bf16.mxu0 0
    %3246 = vmatpush1.bf16.msra.mxu0 0
    %3247 = vmatprep.subr.bf16.mxu0 0
    %3248 = vmatpush1.bf16.msra.mxu0 0
    %3249 = vmatprep.subr.bf16.mxu0 0
    %3250 = vmatpush1.bf16.msra.mxu0 0
    %3251 = vmatprep.subr.bf16.mxu0 0
    %3252 = vmatpush1.bf16.msra.mxu0 0
    %3253 = vmatprep.subr.bf16.mxu0 0
    %3254 = vmatpush1.bf16.msra.mxu0 0
    %3255 = vmatprep.subr.bf16.mxu0 0
    %3256 = vmatpush1.bf16.msra.mxu0 0
    %3257 = vmatprep.subr.bf16.mxu0 0
    %3258 = vmatpush1.bf16.msra.mxu0 0
    %3259 = vmatprep.subr.bf16.mxu0 0
    %3260 = vmatpush1.bf16.msra.mxu0 0
    %3261 = vmatprep.subr.bf16.mxu0 0
    %3262 = vmatpush1.bf16.msra.mxu0 0
    %3263 = vmatprep.subr.bf16.mxu0 0
    %3264 = vmatpush1.bf16.msra.mxu0 0
    %3265 = vmatprep.subr.bf16.mxu0 0
    %3266 = vmatpush1.bf16.msra.mxu0 0
    %3267 = vmatprep.subr.bf16.mxu0 0
    %3268 = vmatpush1.bf16.msra.mxu0 0
    %3269 = vmatprep.subr.bf16.mxu0 0
    %3270 = vmatpush1.bf16.msra.mxu0 0
    %3271 = vmatprep.mubr.bf16.mxu0 0
    %3272 = vmatmul.mubr.bf16.gmra.mrb[0].mxu0 %v3237
    %v3273 = vpop.f32.mrb[0].mxu0
    %v3274 = vadd.f32 %v3222, %v3273
    %v3275 = vpop.f32.mrb[0].mxu0
    %v3276 = vpop.f32.mrb[0].mxu0
    %v3277 = vpop.f32.mrb[0].mxu0
    %3278 = vdwg.mxu0
    %3279 = vst [vmem:[#allocation2] sm:$0x3] %v3274
    // Predicated region
    $region82: #{vit_forward.1} parent=1 // pred_check
      _
    $region83: #{vit_forward.1} parent=1 // pred_check_branch
      %3281 = sbr.rel (0) target = $region85
    $region84: #{vit_forward.1} parent=1 // pred_region
      _
    $region85: #{vit_forward.1} parent=1 // pred_fallthru
      _
    // Predicated region
    $region86: #{vit_forward.1} parent=1 // pred_check
      _
    $region87: #{vit_forward.1} parent=1 // pred_check_branch
      %3283 = sbr.rel (0) target = $region89
    $region88: #{vit_forward.1} parent=1 // pred_region
      _
    $region89: #{vit_forward.1} parent=1 // pred_fallthru
      _
    // Predicated region
    $region90: #{vit_forward.1} parent=1 // pred_check
      _
    $region91: #{vit_forward.1} parent=1 // pred_check_branch
      %3285 = sbr.rel (0) target = $region93
    $region92: #{vit_forward.1} parent=1 // pred_region
      _
    $region93: #{vit_forward.1} parent=1 // pred_fallthru
      _
    // Predicated region
    $region94: #{vit_forward.1} parent=1 // pred_check
      _
    $region95: #{vit_forward.1} parent=1 // pred_check_branch
      %3287 = sbr.rel (0) target = $region97
    $region96: #{vit_forward.1} parent=1 // pred_region
      %s3289 = ssub.s32 32, 32
      %3290 = vsyncadd [#allocation3], %s3289
      %s3292 = sshll.u32 [#allocation2], 4
      %s3293 = int_to_ptr.vmem [resolvable:$true] %s3292
      %3295 = dma.vmem_to_hbm [thread:$0]  %s3293, 32, %s23, [#allocation3]
    $region97: #{vit_forward.1} parent=1 // pred_fallthru
      _
    // Predicated region
    $region98: #{vit_forward.1} parent=1 // pred_check
      _
    $region99: #{vit_forward.1} parent=1 // pred_check_branch
      %3297 = sbr.rel (0) target = $region101
    $region100: #{vit_forward.1} parent=1 // pred_region
      _
    $region101: #{vit_forward.1} parent=1 // pred_fallthru
      _
    // Predicated region
    $region102: #{vit_forward.1} parent=1 // pred_check
      _
    $region103: #{vit_forward.1} parent=1 // pred_check_branch
      %3299 = sbr.rel (0) target = $region105
    $region104: #{vit_forward.1} parent=1 // pred_region
      _
    $region105: #{vit_forward.1} parent=1 // pred_fallthru
      _
    // Predicated region
    $region106: #{vit_forward.1} parent=1 // pred_check
      _
    $region107: #{vit_forward.1} parent=1 // pred_check_branch
      %3301 = sbr.rel (0) target = $region109
    $region108: #{vit_forward.1} parent=1 // pred_region
      _
    $region109: #{vit_forward.1} parent=1 // pred_fallthru
      _
    // Predicated region
    $region110: #{vit_forward.1} parent=1 // pred_check
      _
    $region111: #{vit_forward.1} parent=1 // pred_check_branch
      %3303 = sbr.rel (0) target = $region113
    $region112: #{vit_forward.1} parent=1 // pred_region
      %3304 = dma.done [#allocation3], 32
    $region113: #{vit_forward.1} parent=1 // pred_fallthru
      _
    %3305 = vsyncpa [#allocation3], 1

</llo_original>
